<compile_context>
chip_gen: v5e
topology: v5e:2x2
jax: 0.10.0
libtpu: 0.0.40
codegen_flags: <defaults>
</compile_context>

<pallas_src>
import functools

import numpy as np
import jax
import jax.numpy as jnp
from jax import lax
from jax.experimental import pallas as pl
from jax.experimental.pallas import tpu as pltpu

C_IN = 64
C_OUT = 100
L_IN = 16
L_OUT = 18
LN_EPS = 1e-5

# torch F.interpolate(..., 18) legacy 'nearest': out[l] = in[floor(l * 16 / 18)]
_SRC_IDX = [int(np.floor(l * L_IN / L_OUT)) for l in range(L_OUT)]
# Inverse map: for each source length index, the output slots it feeds.
_DST_SLOTS = tuple(tuple(d for d in range(L_OUT) if _SRC_IDX[d] == l)
                   for l in range(L_IN))


def _ce_proj_kernel(gamma_ref, beta_ref, x_ref, w_ref, o_ref, *, chunk):
    # gamma_ref, beta_ref: (L_IN,) f32 in SMEM (one scalar per length index)
    # x_ref: (L_IN, C_IN, TB)   input block, batch in the lane (minor) dim
    # w_ref: (C_OUT, C_IN)      1x1-conv weight, resident across grid steps
    # o_ref: (L_OUT, C_OUT, TB) output block (nearest-interp fused; lane-dense)
    inv_l = jnp.float32(1.0 / L_IN)
    tb = x_ref.shape[-1]
    w = w_ref[...]                                        # (C_OUT, C_IN)

    def chunk_body(c, carry):
        c0 = pl.multiple_of(c * chunk, chunk)

        # --- single-pass LayerNorm stats over the L (leading) axis ---
        s = jnp.zeros((C_IN, chunk), jnp.float32)
        ss = jnp.zeros((C_IN, chunk), jnp.float32)
        for l in range(L_IN):
            xl = x_ref[l, :, pl.ds(c0, chunk)]            # (C_IN, chunk)
            s = s + xl
            ss = ss + xl * xl
        mean = s * inv_l                                   # (C_IN, chunk)
        var = ss * inv_l - mean * mean                     # biased variance
        inv_std = lax.rsqrt(var + LN_EPS)                  # (C_IN, chunk)

        # --- affine + 1x1 conv + fused nearest 16 -> 18 scatter ---
        # TODO(synk): on v7x, consider packing 2 l-slices per dot via a
        # block-diagonal (200, 128) weight (or a bf16 dot) to raise MXU fill;
        # the f32 K=64 dots stay under the DMA shadow on v5e/v6e.
        for l in range(L_IN):
            xl = x_ref[l, :, pl.ds(c0, chunk)]
            z = (xl - mean) * inv_std * gamma_ref[l] + beta_ref[l]
            y = jnp.dot(w, z,
                        preferred_element_type=jnp.float32).astype(o_ref.dtype)
            for d in _DST_SLOTS[l]:
                o_ref[d, :, pl.ds(c0, chunk)] = y
        return carry

    lax.fori_loop(0, tb // chunk, chunk_body, 0)


def _round_up(n, m):
    return (n + m - 1) // m * m


def _pick_tb(batch, max_block_b):
    bp128 = _round_up(max(batch, 1), 128)
    tb = min(max_block_b, bp128)
    # v7x has 2 TensorCores: keep a grid of >= 2 steps when the batch allows.
    if bp128 // tb < 2 and bp128 >= 256:
        tb = max(128, _round_up(bp128 // 2, 128))
    return tb


def cross_entropy_projection(x, gamma, beta, w, *, max_block_b=512,
                             out_dtype=jnp.float32):
    """x: (B, 64, 16) f32, gamma/beta: (16,), w: (100, 64) -> (B, 100, 18)."""
    B = x.shape[0]
    assert x.shape == (B, C_IN, L_IN), x.shape

    x = x.astype(jnp.float32)
    gamma = gamma.reshape(L_IN).astype(jnp.float32)
    beta = beta.reshape(L_IN).astype(jnp.float32)
    w = w.reshape(C_OUT, C_IN).astype(jnp.float32)

    tb = _pick_tb(B, max_block_b)          # multiple of 128 (lane-dense blocks)
    bp = _round_up(B, tb)
    if bp != B:
        x = jnp.pad(x, ((0, bp - B), (0, 0), (0, 0)))   # padded rows sliced off

    # (B, C, L) -> (L, C, B): batch into the lane (minor) dim.  Single fused
    # copy; callers that can supply the (L, C, B) layout directly should skip it.
    xt = jnp.transpose(x, (2, 1, 0))                      # (L_IN, C_IN, bp)

    chunk = 256 if tb % 256 == 0 else 128

    in_bytes = L_IN * C_IN * tb * 4
    out_bytes = L_OUT * C_OUT * tb * jnp.dtype(out_dtype).itemsize
    vmem_limit = 2 * (in_bytes + out_bytes) + C_OUT * C_IN * 4 + (4 << 20)
    vmem_limit = int(min(max(vmem_limit, 16 << 20), 48 << 20))

    out = pl.pallas_call(
        functools.partial(_ce_proj_kernel, chunk=chunk),
        out_shape=jax.ShapeDtypeStruct((L_OUT, C_OUT, bp), out_dtype),
        grid=(bp // tb,),
        in_specs=[
            pl.BlockSpec(memory_space=pltpu.MemorySpace.SMEM),        # gamma
            pl.BlockSpec(memory_space=pltpu.MemorySpace.SMEM),        # beta
            pl.BlockSpec((L_IN, C_IN, tb), lambda i: (0, 0, i)),      # x block
            pl.BlockSpec((C_OUT, C_IN), lambda i: (0, 0)),            # w (resident)
        ],
        out_specs=pl.BlockSpec((L_OUT, C_OUT, tb), lambda i: (0, 0, i)),
        compiler_params=pltpu.CompilerParams(
            dimension_semantics=("parallel",),
            vmem_limit_bytes=vmem_limit),
    )(gamma, beta, xt, w)

    # (L_OUT, C_OUT, bp) -> (B, 100, 18); transpose + slice fuse to one copy.
    return jnp.transpose(out, (2, 1, 0))[:B]


def _reference(x, gamma, beta, w):
    # Pure-JAX reference mirroring the PyTorch forward.
    mean = jnp.mean(x, axis=-1, keepdims=True)
    var = jnp.mean((x - mean) ** 2, axis=-1, keepdims=True)
    z = (x - mean) / jnp.sqrt(var + LN_EPS) * gamma.reshape(1, 1, L_IN) \
        + beta.reshape(1, 1, L_IN)
    y = jnp.einsum("oc,bcl->bol", w, z)
    src = np.asarray(_SRC_IDX, dtype=np.int32)
    return y[:, :, src]


if __name__ == "__main__":
    key = jax.random.PRNGKey(0)
    kx, kg, kb, kw = jax.random.split(key, 4)

    # Deterministic synthetic parameters (LayerNorm affine + Conv1d 1x1 weight).
    gamma = 1.0 + 0.1 * jax.random.normal(kg, (L_IN,), dtype=jnp.float32)
    beta = 0.1 * jax.random.normal(kb, (L_IN,), dtype=jnp.float32)
    w = jax.random.normal(kw, (C_OUT, C_IN), dtype=jnp.float32) / np.sqrt(C_IN)

    # Spec-sized batch, plus a batch that exercises padding and a 2-step grid.
    for batch in (2, 130):
        x = jax.random.normal(kx, (batch, C_IN, L_IN), dtype=jnp.float32)
        out = jax.block_until_ready(cross_entropy_projection(x, gamma, beta, w))
        ref = _reference(x, gamma, beta, w)
        assert out.shape == (batch, C_OUT, L_OUT), out.shape
        # Tolerance loosened (vs 1e-5) for the single-pass E[x^2]-mean^2 variance.
        np.testing.assert_allclose(np.asarray(out), np.asarray(ref),
                                   rtol=1e-4, atol=1e-4)

    print("KERNEL_OK")
</pallas_src>

<mosaic_0001>
module attributes {stable_mosaic.version = 11 : i64} {
  func.func @_ce_proj_kernel(%arg0: i32, %arg1: memref<16xf32, #tpu.memory_space<smem>>, %arg2: memref<16xf32, #tpu.memory_space<smem>>, %arg3: memref<16x64x128xf32, #tpu.memory_space<vmem>>, %arg4: memref<100x64xf32, #tpu.memory_space<vmem>>, %arg5: memref<18x100x128xf32, #tpu.memory_space<vmem>>) attributes {dimension_semantics = [#tpu.dimension_semantics<parallel>], iteration_bounds = array<i64: 1>, scalar_prefetch = 0 : i64, scratch_operands = 0 : i64, tpu.core_type = #tpu.core_type<tc>, window_params = [{transform_indices = @transform_0, window_bounds = array<i64: 16>}, {transform_indices = @transform_1, window_bounds = array<i64: 16>}, {transform_indices = @transform_2, window_bounds = array<i64: 16, 64, 128>}, {pipeline_mode = #tpu.pipeline_mode<synchronous>, transform_indices = @transform_3, window_bounds = array<i64: 100, 64>}, {transform_indices = @transform_4, window_bounds = array<i64: 18, 100, 128>}]} {
    %c0 = arith.constant 0 : index
    %c0_0 = arith.constant 0 : index
    %0 = vector.load %arg4[%c0, %c0_0] : memref<100x64xf32, #tpu.memory_space<vmem>>, vector<100x64xf32>
    %cst = arith.constant 6.250000e-02 : f32
    %c0_i32 = arith.constant 0 : i32
    %c128_i32 = arith.constant 128 : i32
    %1 = arith.muli %c0_i32, %c128_i32 : i32
    %2 = tpu.assume_multiple %1, 128 : i32
    %cst_1 = arith.constant 0.000000e+00 : f32
    %3 = vector.broadcast %cst_1 : f32 to vector<64x128xf32>
    %cst_2 = arith.constant 0.000000e+00 : f32
    %4 = vector.broadcast %cst_2 : f32 to vector<64x128xf32>
    %c0_3 = arith.constant 0 : index
    %c0_4 = arith.constant 0 : index
    %5 = arith.index_cast %2 : i32 to index
    %6 = vector.load %arg3[%c0_3, %c0_4, %5] : memref<16x64x128xf32, #tpu.memory_space<vmem>>, vector<1x64x128xf32>
    %7 = vector.shape_cast %6 : vector<1x64x128xf32> to vector<64x128xf32>
    %8 = arith.addf %3, %7 : vector<64x128xf32>
    %9 = arith.mulf %7, %7 : vector<64x128xf32>
    %10 = arith.addf %4, %9 : vector<64x128xf32>
    %c1 = arith.constant 1 : index
    %c0_5 = arith.constant 0 : index
    %11 = arith.index_cast %2 : i32 to index
    %12 = vector.load %arg3[%c1, %c0_5, %11] : memref<16x64x128xf32, #tpu.memory_space<vmem>>, vector<1x64x128xf32>
    %13 = vector.shape_cast %12 : vector<1x64x128xf32> to vector<64x128xf32>
    %14 = arith.addf %8, %13 : vector<64x128xf32>
    %15 = arith.mulf %13, %13 : vector<64x128xf32>
    %16 = arith.addf %10, %15 : vector<64x128xf32>
    %c2 = arith.constant 2 : index
    %c0_6 = arith.constant 0 : index
    %17 = arith.index_cast %2 : i32 to index
    %18 = vector.load %arg3[%c2, %c0_6, %17] : memref<16x64x128xf32, #tpu.memory_space<vmem>>, vector<1x64x128xf32>
    %19 = vector.shape_cast %18 : vector<1x64x128xf32> to vector<64x128xf32>
    %20 = arith.addf %14, %19 : vector<64x128xf32>
    %21 = arith.mulf %19, %19 : vector<64x128xf32>
    %22 = arith.addf %16, %21 : vector<64x128xf32>
    %c3 = arith.constant 3 : index
    %c0_7 = arith.constant 0 : index
    %23 = arith.index_cast %2 : i32 to index
    %24 = vector.load %arg3[%c3, %c0_7, %23] : memref<16x64x128xf32, #tpu.memory_space<vmem>>, vector<1x64x128xf32>
    %25 = vector.shape_cast %24 : vector<1x64x128xf32> to vector<64x128xf32>
    %26 = arith.addf %20, %25 : vector<64x128xf32>
    %27 = arith.mulf %25, %25 : vector<64x128xf32>
    %28 = arith.addf %22, %27 : vector<64x128xf32>
    %c4 = arith.constant 4 : index
    %c0_8 = arith.constant 0 : index
    %29 = arith.index_cast %2 : i32 to index
    %30 = vector.load %arg3[%c4, %c0_8, %29] : memref<16x64x128xf32, #tpu.memory_space<vmem>>, vector<1x64x128xf32>
    %31 = vector.shape_cast %30 : vector<1x64x128xf32> to vector<64x128xf32>
    %32 = arith.addf %26, %31 : vector<64x128xf32>
    %33 = arith.mulf %31, %31 : vector<64x128xf32>
    %34 = arith.addf %28, %33 : vector<64x128xf32>
    %c5 = arith.constant 5 : index
    %c0_9 = arith.constant 0 : index
    %35 = arith.index_cast %2 : i32 to index
    %36 = vector.load %arg3[%c5, %c0_9, %35] : memref<16x64x128xf32, #tpu.memory_space<vmem>>, vector<1x64x128xf32>
    %37 = vector.shape_cast %36 : vector<1x64x128xf32> to vector<64x128xf32>
    %38 = arith.addf %32, %37 : vector<64x128xf32>
    %39 = arith.mulf %37, %37 : vector<64x128xf32>
    %40 = arith.addf %34, %39 : vector<64x128xf32>
    %c6 = arith.constant 6 : index
    %c0_10 = arith.constant 0 : index
    %41 = arith.index_cast %2 : i32 to index
    %42 = vector.load %arg3[%c6, %c0_10, %41] : memref<16x64x128xf32, #tpu.memory_space<vmem>>, vector<1x64x128xf32>
    %43 = vector.shape_cast %42 : vector<1x64x128xf32> to vector<64x128xf32>
    %44 = arith.addf %38, %43 : vector<64x128xf32>
    %45 = arith.mulf %43, %43 : vector<64x128xf32>
    %46 = arith.addf %40, %45 : vector<64x128xf32>
    %c7 = arith.constant 7 : index
    %c0_11 = arith.constant 0 : index
    %47 = arith.index_cast %2 : i32 to index
    %48 = vector.load %arg3[%c7, %c0_11, %47] : memref<16x64x128xf32, #tpu.memory_space<vmem>>, vector<1x64x128xf32>
    %49 = vector.shape_cast %48 : vector<1x64x128xf32> to vector<64x128xf32>
    %50 = arith.addf %44, %49 : vector<64x128xf32>
    %51 = arith.mulf %49, %49 : vector<64x128xf32>
    %52 = arith.addf %46, %51 : vector<64x128xf32>
    %c8 = arith.constant 8 : index
    %c0_12 = arith.constant 0 : index
    %53 = arith.index_cast %2 : i32 to index
    %54 = vector.load %arg3[%c8, %c0_12, %53] : memref<16x64x128xf32, #tpu.memory_space<vmem>>, vector<1x64x128xf32>
    %55 = vector.shape_cast %54 : vector<1x64x128xf32> to vector<64x128xf32>
    %56 = arith.addf %50, %55 : vector<64x128xf32>
    %57 = arith.mulf %55, %55 : vector<64x128xf32>
    %58 = arith.addf %52, %57 : vector<64x128xf32>
    %c9 = arith.constant 9 : index
    %c0_13 = arith.constant 0 : index
    %59 = arith.index_cast %2 : i32 to index
    %60 = vector.load %arg3[%c9, %c0_13, %59] : memref<16x64x128xf32, #tpu.memory_space<vmem>>, vector<1x64x128xf32>
    %61 = vector.shape_cast %60 : vector<1x64x128xf32> to vector<64x128xf32>
    %62 = arith.addf %56, %61 : vector<64x128xf32>
    %63 = arith.mulf %61, %61 : vector<64x128xf32>
    %64 = arith.addf %58, %63 : vector<64x128xf32>
    %c10 = arith.constant 10 : index
    %c0_14 = arith.constant 0 : index
    %65 = arith.index_cast %2 : i32 to index
    %66 = vector.load %arg3[%c10, %c0_14, %65] : memref<16x64x128xf32, #tpu.memory_space<vmem>>, vector<1x64x128xf32>
    %67 = vector.shape_cast %66 : vector<1x64x128xf32> to vector<64x128xf32>
    %68 = arith.addf %62, %67 : vector<64x128xf32>
    %69 = arith.mulf %67, %67 : vector<64x128xf32>
    %70 = arith.addf %64, %69 : vector<64x128xf32>
    %c11 = arith.constant 11 : index
    %c0_15 = arith.constant 0 : index
    %71 = arith.index_cast %2 : i32 to index
    %72 = vector.load %arg3[%c11, %c0_15, %71] : memref<16x64x128xf32, #tpu.memory_space<vmem>>, vector<1x64x128xf32>
    %73 = vector.shape_cast %72 : vector<1x64x128xf32> to vector<64x128xf32>
    %74 = arith.addf %68, %73 : vector<64x128xf32>
    %75 = arith.mulf %73, %73 : vector<64x128xf32>
    %76 = arith.addf %70, %75 : vector<64x128xf32>
    %c12 = arith.constant 12 : index
    %c0_16 = arith.constant 0 : index
    %77 = arith.index_cast %2 : i32 to index
    %78 = vector.load %arg3[%c12, %c0_16, %77] : memref<16x64x128xf32, #tpu.memory_space<vmem>>, vector<1x64x128xf32>
    %79 = vector.shape_cast %78 : vector<1x64x128xf32> to vector<64x128xf32>
    %80 = arith.addf %74, %79 : vector<64x128xf32>
    %81 = arith.mulf %79, %79 : vector<64x128xf32>
    %82 = arith.addf %76, %81 : vector<64x128xf32>
    %c13 = arith.constant 13 : index
    %c0_17 = arith.constant 0 : index
    %83 = arith.index_cast %2 : i32 to index
    %84 = vector.load %arg3[%c13, %c0_17, %83] : memref<16x64x128xf32, #tpu.memory_space<vmem>>, vector<1x64x128xf32>
    %85 = vector.shape_cast %84 : vector<1x64x128xf32> to vector<64x128xf32>
    %86 = arith.addf %80, %85 : vector<64x128xf32>
    %87 = arith.mulf %85, %85 : vector<64x128xf32>
    %88 = arith.addf %82, %87 : vector<64x128xf32>
    %c14 = arith.constant 14 : index
    %c0_18 = arith.constant 0 : index
    %89 = arith.index_cast %2 : i32 to index
    %90 = vector.load %arg3[%c14, %c0_18, %89] : memref<16x64x128xf32, #tpu.memory_space<vmem>>, vector<1x64x128xf32>
    %91 = vector.shape_cast %90 : vector<1x64x128xf32> to vector<64x128xf32>
    %92 = arith.addf %86, %91 : vector<64x128xf32>
    %93 = arith.mulf %91, %91 : vector<64x128xf32>
    %94 = arith.addf %88, %93 : vector<64x128xf32>
    %c15 = arith.constant 15 : index
    %c0_19 = arith.constant 0 : index
    %95 = arith.index_cast %2 : i32 to index
    %96 = vector.load %arg3[%c15, %c0_19, %95] : memref<16x64x128xf32, #tpu.memory_space<vmem>>, vector<1x64x128xf32>
    %97 = vector.shape_cast %96 : vector<1x64x128xf32> to vector<64x128xf32>
    %98 = arith.addf %92, %97 : vector<64x128xf32>
    %99 = arith.mulf %97, %97 : vector<64x128xf32>
    %100 = arith.addf %94, %99 : vector<64x128xf32>
    %101 = vector.broadcast %cst : f32 to vector<64x128xf32>
    %102 = arith.mulf %98, %101 : vector<64x128xf32>
    %103 = vector.broadcast %cst : f32 to vector<64x128xf32>
    %104 = arith.mulf %100, %103 : vector<64x128xf32>
    %105 = arith.mulf %102, %102 : vector<64x128xf32>
    %106 = arith.subf %104, %105 : vector<64x128xf32>
    %cst_20 = arith.constant 9.99999974E-6 : f32
    %107 = vector.broadcast %cst_20 : f32 to vector<64x128xf32>
    %108 = arith.addf %106, %107 : vector<64x128xf32>
    %109 = math.rsqrt %108 : vector<64x128xf32>
    %c0_21 = arith.constant 0 : index
    %c0_22 = arith.constant 0 : index
    %110 = arith.index_cast %2 : i32 to index
    %111 = vector.load %arg3[%c0_21, %c0_22, %110] : memref<16x64x128xf32, #tpu.memory_space<vmem>>, vector<1x64x128xf32>
    %112 = vector.shape_cast %111 : vector<1x64x128xf32> to vector<64x128xf32>
    %113 = arith.subf %112, %102 : vector<64x128xf32>
    %114 = arith.mulf %113, %109 : vector<64x128xf32>
    %c0_23 = arith.constant 0 : index
    %115 = memref.load %arg1[%c0_23] : memref<16xf32, #tpu.memory_space<smem>>
    %116 = vector.broadcast %115 : f32 to vector<64x128xf32>
    %117 = arith.mulf %114, %116 : vector<64x128xf32>
    %c0_24 = arith.constant 0 : index
    %118 = memref.load %arg2[%c0_24] : memref<16xf32, #tpu.memory_space<smem>>
    %119 = vector.broadcast %118 : f32 to vector<64x128xf32>
    %120 = arith.addf %117, %119 : vector<64x128xf32>
    %cst_25 = arith.constant dense<0.000000e+00> : vector<100x128xf32>
    %121 = tpu.matmul %0, %120, %cst_25 {dimension_numbers = #tpu.dot_dimension_numbers<[1], [0], [0], [1], [0, 0, 1, 1], [], []>} : vector<100x64xf32>, vector<64x128xf32>, vector<100x128xf32> -> vector<100x128xf32>
    %c0_26 = arith.constant 0 : index
    %c0_27 = arith.constant 0 : index
    %122 = arith.index_cast %2 : i32 to index
    %123 = vector.load %arg5[%c0_26, %c0_27, %122] : memref<18x100x128xf32, #tpu.memory_space<vmem>>, vector<1x100x128xf32>
    %124 = vector.shape_cast %123 : vector<1x100x128xf32> to vector<100x128xf32>
    %125 = vector.shape_cast %121 : vector<100x128xf32> to vector<1x100x128xf32>
    tpu.vector_store %arg5[%c0_26, %c0_27, %122], %125 {strides = array<i32>} : memref<18x100x128xf32, #tpu.memory_space<vmem>>, vector<1x100x128xf32>,
    %c1_28 = arith.constant 1 : index
    %c0_29 = arith.constant 0 : index
    %126 = arith.index_cast %2 : i32 to index
    %127 = vector.load %arg5[%c1_28, %c0_29, %126] : memref<18x100x128xf32, #tpu.memory_space<vmem>>, vector<1x100x128xf32>
    %128 = vector.shape_cast %127 : vector<1x100x128xf32> to vector<100x128xf32>
    %129 = vector.shape_cast %121 : vector<100x128xf32> to vector<1x100x128xf32>
    tpu.vector_store %arg5[%c1_28, %c0_29, %126], %129 {strides = array<i32>} : memref<18x100x128xf32, #tpu.memory_space<vmem>>, vector<1x100x128xf32>,
    %c1_30 = arith.constant 1 : index
    %c0_31 = arith.constant 0 : index
    %130 = arith.index_cast %2 : i32 to index
    %131 = vector.load %arg3[%c1_30, %c0_31, %130] : memref<16x64x128xf32, #tpu.memory_space<vmem>>, vector<1x64x128xf32>
    %132 = vector.shape_cast %131 : vector<1x64x128xf32> to vector<64x128xf32>
    %133 = arith.subf %132, %102 : vector<64x128xf32>
    %134 = arith.mulf %133, %109 : vector<64x128xf32>
    %c1_32 = arith.constant 1 : index
    %135 = memref.load %arg1[%c1_32] : memref<16xf32, #tpu.memory_space<smem>>
    %136 = vector.broadcast %135 : f32 to vector<64x128xf32>
    %137 = arith.mulf %134, %136 : vector<64x128xf32>
    %c1_33 = arith.constant 1 : index
    %138 = memref.load %arg2[%c1_33] : memref<16xf32, #tpu.memory_space<smem>>
    %139 = vector.broadcast %138 : f32 to vector<64x128xf32>
    %140 = arith.addf %137, %139 : vector<64x128xf32>
    %cst_34 = arith.constant dense<0.000000e+00> : vector<100x128xf32>
    %141 = tpu.matmul %0, %140, %cst_34 {dimension_numbers = #tpu.dot_dimension_numbers<[1], [0], [0], [1], [0, 0, 1, 1], [], []>} : vector<100x64xf32>, vector<64x128xf32>, vector<100x128xf32> -> vector<100x128xf32>
    %c2_35 = arith.constant 2 : index
    %c0_36 = arith.constant 0 : index
    %142 = arith.index_cast %2 : i32 to index
    %143 = vector.load %arg5[%c2_35, %c0_36, %142] : memref<18x100x128xf32, #tpu.memory_space<vmem>>, vector<1x100x128xf32>
    %144 = vector.shape_cast %143 : vector<1x100x128xf32> to vector<100x128xf32>
    %145 = vector.shape_cast %141 : vector<100x128xf32> to vector<1x100x128xf32>
    tpu.vector_store %arg5[%c2_35, %c0_36, %142], %145 {strides = array<i32>} : memref<18x100x128xf32, #tpu.memory_space<vmem>>, vector<1x100x128xf32>,
    %c2_37 = arith.constant 2 : index
    %c0_38 = arith.constant 0 : index
    %146 = arith.index_cast %2 : i32 to index
    %147 = vector.load %arg3[%c2_37, %c0_38, %146] : memref<16x64x128xf32, #tpu.memory_space<vmem>>, vector<1x64x128xf32>
    %148 = vector.shape_cast %147 : vector<1x64x128xf32> to vector<64x128xf32>
    %149 = arith.subf %148, %102 : vector<64x128xf32>
    %150 = arith.mulf %149, %109 : vector<64x128xf32>
    %c2_39 = arith.constant 2 : index
    %151 = memref.load %arg1[%c2_39] : memref<16xf32, #tpu.memory_space<smem>>
    %152 = vector.broadcast %151 : f32 to vector<64x128xf32>
    %153 = arith.mulf %150, %152 : vector<64x128xf32>
    %c2_40 = arith.constant 2 : index
    %154 = memref.load %arg2[%c2_40] : memref<16xf32, #tpu.memory_space<smem>>
    %155 = vector.broadcast %154 : f32 to vector<64x128xf32>
    %156 = arith.addf %153, %155 : vector<64x128xf32>
    %cst_41 = arith.constant dense<0.000000e+00> : vector<100x128xf32>
    %157 = tpu.matmul %0, %156, %cst_41 {dimension_numbers = #tpu.dot_dimension_numbers<[1], [0], [0], [1], [0, 0, 1, 1], [], []>} : vector<100x64xf32>, vector<64x128xf32>, vector<100x128xf32> -> vector<100x128xf32>
    %c3_42 = arith.constant 3 : index
    %c0_43 = arith.constant 0 : index
    %158 = arith.index_cast %2 : i32 to index
    %159 = vector.load %arg5[%c3_42, %c0_43, %158] : memref<18x100x128xf32, #tpu.memory_space<vmem>>, vector<1x100x128xf32>
    %160 = vector.shape_cast %159 : vector<1x100x128xf32> to vector<100x128xf32>
    %161 = vector.shape_cast %157 : vector<100x128xf32> to vector<1x100x128xf32>
    tpu.vector_store %arg5[%c3_42, %c0_43, %158], %161 {strides = array<i32>} : memref<18x100x128xf32, #tpu.memory_space<vmem>>, vector<1x100x128xf32>,
    %c3_44 = arith.constant 3 : index
    %c0_45 = arith.constant 0 : index
    %162 = arith.index_cast %2 : i32 to index
    %163 = vector.load %arg3[%c3_44, %c0_45, %162] : memref<16x64x128xf32, #tpu.memory_space<vmem>>, vector<1x64x128xf32>
    %164 = vector.shape_cast %163 : vector<1x64x128xf32> to vector<64x128xf32>
    %165 = arith.subf %164, %102 : vector<64x128xf32>
    %166 = arith.mulf %165, %109 : vector<64x128xf32>
    %c3_46 = arith.constant 3 : index
    %167 = memref.load %arg1[%c3_46] : memref<16xf32, #tpu.memory_space<smem>>
    %168 = vector.broadcast %167 : f32 to vector<64x128xf32>
    %169 = arith.mulf %166, %168 : vector<64x128xf32>
    %c3_47 = arith.constant 3 : index
    %170 = memref.load %arg2[%c3_47] : memref<16xf32, #tpu.memory_space<smem>>
    %171 = vector.broadcast %170 : f32 to vector<64x128xf32>
    %172 = arith.addf %169, %171 : vector<64x128xf32>
    %cst_48 = arith.constant dense<0.000000e+00> : vector<100x128xf32>
    %173 = tpu.matmul %0, %172, %cst_48 {dimension_numbers = #tpu.dot_dimension_numbers<[1], [0], [0], [1], [0, 0, 1, 1], [], []>} : vector<100x64xf32>, vector<64x128xf32>, vector<100x128xf32> -> vector<100x128xf32>
    %c4_49 = arith.constant 4 : index
    %c0_50 = arith.constant 0 : index
    %174 = arith.index_cast %2 : i32 to index
    %175 = vector.load %arg5[%c4_49, %c0_50, %174] : memref<18x100x128xf32, #tpu.memory_space<vmem>>, vector<1x100x128xf32>
    %176 = vector.shape_cast %175 : vector<1x100x128xf32> to vector<100x128xf32>
    %177 = vector.shape_cast %173 : vector<100x128xf32> to vector<1x100x128xf32>
    tpu.vector_store %arg5[%c4_49, %c0_50, %174], %177 {strides = array<i32>} : memref<18x100x128xf32, #tpu.memory_space<vmem>>, vector<1x100x128xf32>,
    %c4_51 = arith.constant 4 : index
    %c0_52 = arith.constant 0 : index
    %178 = arith.index_cast %2 : i32 to index
    %179 = vector.load %arg3[%c4_51, %c0_52, %178] : memref<16x64x128xf32, #tpu.memory_space<vmem>>, vector<1x64x128xf32>
    %180 = vector.shape_cast %179 : vector<1x64x128xf32> to vector<64x128xf32>
    %181 = arith.subf %180, %102 : vector<64x128xf32>
    %182 = arith.mulf %181, %109 : vector<64x128xf32>
    %c4_53 = arith.constant 4 : index
    %183 = memref.load %arg1[%c4_53] : memref<16xf32, #tpu.memory_space<smem>>
    %184 = vector.broadcast %183 : f32 to vector<64x128xf32>
    %185 = arith.mulf %182, %184 : vector<64x128xf32>
    %c4_54 = arith.constant 4 : index
    %186 = memref.load %arg2[%c4_54] : memref<16xf32, #tpu.memory_space<smem>>
    %187 = vector.broadcast %186 : f32 to vector<64x128xf32>
    %188 = arith.addf %185, %187 : vector<64x128xf32>
    %cst_55 = arith.constant dense<0.000000e+00> : vector<100x128xf32>
    %189 = tpu.matmul %0, %188, %cst_55 {dimension_numbers = #tpu.dot_dimension_numbers<[1], [0], [0], [1], [0, 0, 1, 1], [], []>} : vector<100x64xf32>, vector<64x128xf32>, vector<100x128xf32> -> vector<100x128xf32>
    %c5_56 = arith.constant 5 : index
    %c0_57 = arith.constant 0 : index
    %190 = arith.index_cast %2 : i32 to index
    %191 = vector.load %arg5[%c5_56, %c0_57, %190] : memref<18x100x128xf32, #tpu.memory_space<vmem>>, vector<1x100x128xf32>
    %192 = vector.shape_cast %191 : vector<1x100x128xf32> to vector<100x128xf32>
    %193 = vector.shape_cast %189 : vector<100x128xf32> to vector<1x100x128xf32>
    tpu.vector_store %arg5[%c5_56, %c0_57, %190], %193 {strides = array<i32>} : memref<18x100x128xf32, #tpu.memory_space<vmem>>, vector<1x100x128xf32>,
    %c5_58 = arith.constant 5 : index
    %c0_59 = arith.constant 0 : index
    %194 = arith.index_cast %2 : i32 to index
    %195 = vector.load %arg3[%c5_58, %c0_59, %194] : memref<16x64x128xf32, #tpu.memory_space<vmem>>, vector<1x64x128xf32>
    %196 = vector.shape_cast %195 : vector<1x64x128xf32> to vector<64x128xf32>
    %197 = arith.subf %196, %102 : vector<64x128xf32>
    %198 = arith.mulf %197, %109 : vector<64x128xf32>
    %c5_60 = arith.constant 5 : index
    %199 = memref.load %arg1[%c5_60] : memref<16xf32, #tpu.memory_space<smem>>
    %200 = vector.broadcast %199 : f32 to vector<64x128xf32>
    %201 = arith.mulf %198, %200 : vector<64x128xf32>
    %c5_61 = arith.constant 5 : index
    %202 = memref.load %arg2[%c5_61] : memref<16xf32, #tpu.memory_space<smem>>
    %203 = vector.broadcast %202 : f32 to vector<64x128xf32>
    %204 = arith.addf %201, %203 : vector<64x128xf32>
    %cst_62 = arith.constant dense<0.000000e+00> : vector<100x128xf32>
    %205 = tpu.matmul %0, %204, %cst_62 {dimension_numbers = #tpu.dot_dimension_numbers<[1], [0], [0], [1], [0, 0, 1, 1], [], []>} : vector<100x64xf32>, vector<64x128xf32>, vector<100x128xf32> -> vector<100x128xf32>
    %c6_63 = arith.constant 6 : index
    %c0_64 = arith.constant 0 : index
    %206 = arith.index_cast %2 : i32 to index
    %207 = vector.load %arg5[%c6_63, %c0_64, %206] : memref<18x100x128xf32, #tpu.memory_space<vmem>>, vector<1x100x128xf32>
    %208 = vector.shape_cast %207 : vector<1x100x128xf32> to vector<100x128xf32>
    %209 = vector.shape_cast %205 : vector<100x128xf32> to vector<1x100x128xf32>
    tpu.vector_store %arg5[%c6_63, %c0_64, %206], %209 {strides = array<i32>} : memref<18x100x128xf32, #tpu.memory_space<vmem>>, vector<1x100x128xf32>,
    %c6_65 = arith.constant 6 : index
    %c0_66 = arith.constant 0 : index
    %210 = arith.index_cast %2 : i32 to index
    %211 = vector.load %arg3[%c6_65, %c0_66, %210] : memref<16x64x128xf32, #tpu.memory_space<vmem>>, vector<1x64x128xf32>
    %212 = vector.shape_cast %211 : vector<1x64x128xf32> to vector<64x128xf32>
    %213 = arith.subf %212, %102 : vector<64x128xf32>
    %214 = arith.mulf %213, %109 : vector<64x128xf32>
    %c6_67 = arith.constant 6 : index
    %215 = memref.load %arg1[%c6_67] : memref<16xf32, #tpu.memory_space<smem>>
    %216 = vector.broadcast %215 : f32 to vector<64x128xf32>
    %217 = arith.mulf %214, %216 : vector<64x128xf32>
    %c6_68 = arith.constant 6 : index
    %218 = memref.load %arg2[%c6_68] : memref<16xf32, #tpu.memory_space<smem>>
    %219 = vector.broadcast %218 : f32 to vector<64x128xf32>
    %220 = arith.addf %217, %219 : vector<64x128xf32>
    %cst_69 = arith.constant dense<0.000000e+00> : vector<100x128xf32>
    %221 = tpu.matmul %0, %220, %cst_69 {dimension_numbers = #tpu.dot_dimension_numbers<[1], [0], [0], [1], [0, 0, 1, 1], [], []>} : vector<100x64xf32>, vector<64x128xf32>, vector<100x128xf32> -> vector<100x128xf32>
    %c7_70 = arith.constant 7 : index
    %c0_71 = arith.constant 0 : index
    %222 = arith.index_cast %2 : i32 to index
    %223 = vector.load %arg5[%c7_70, %c0_71, %222] : memref<18x100x128xf32, #tpu.memory_space<vmem>>, vector<1x100x128xf32>
    %224 = vector.shape_cast %223 : vector<1x100x128xf32> to vector<100x128xf32>
    %225 = vector.shape_cast %221 : vector<100x128xf32> to vector<1x100x128xf32>
    tpu.vector_store %arg5[%c7_70, %c0_71, %222], %225 {strides = array<i32>} : memref<18x100x128xf32, #tpu.memory_space<vmem>>, vector<1x100x128xf32>,
    %c7_72 = arith.constant 7 : index
    %c0_73 = arith.constant 0 : index
    %226 = arith.index_cast %2 : i32 to index
    %227 = vector.load %arg3[%c7_72, %c0_73, %226] : memref<16x64x128xf32, #tpu.memory_space<vmem>>, vector<1x64x128xf32>
    %228 = vector.shape_cast %227 : vector<1x64x128xf32> to vector<64x128xf32>
    %229 = arith.subf %228, %102 : vector<64x128xf32>
    %230 = arith.mulf %229, %109 : vector<64x128xf32>
    %c7_74 = arith.constant 7 : index
    %231 = memref.load %arg1[%c7_74] : memref<16xf32, #tpu.memory_space<smem>>
    %232 = vector.broadcast %231 : f32 to vector<64x128xf32>
    %233 = arith.mulf %230, %232 : vector<64x128xf32>
    %c7_75 = arith.constant 7 : index
    %234 = memref.load %arg2[%c7_75] : memref<16xf32, #tpu.memory_space<smem>>
    %235 = vector.broadcast %234 : f32 to vector<64x128xf32>
    %236 = arith.addf %233, %235 : vector<64x128xf32>
    %cst_76 = arith.constant dense<0.000000e+00> : vector<100x128xf32>
    %237 = tpu.matmul %0, %236, %cst_76 {dimension_numbers = #tpu.dot_dimension_numbers<[1], [0], [0], [1], [0, 0, 1, 1], [], []>} : vector<100x64xf32>, vector<64x128xf32>, vector<100x128xf32> -> vector<100x128xf32>
    %c8_77 = arith.constant 8 : index
    %c0_78 = arith.constant 0 : index
    %238 = arith.index_cast %2 : i32 to index
    %239 = vector.load %arg5[%c8_77, %c0_78, %238] : memref<18x100x128xf32, #tpu.memory_space<vmem>>, vector<1x100x128xf32>
    %240 = vector.shape_cast %239 : vector<1x100x128xf32> to vector<100x128xf32>
    %241 = vector.shape_cast %237 : vector<100x128xf32> to vector<1x100x128xf32>
    tpu.vector_store %arg5[%c8_77, %c0_78, %238], %241 {strides = array<i32>} : memref<18x100x128xf32, #tpu.memory_space<vmem>>, vector<1x100x128xf32>,
    %c8_79 = arith.constant 8 : index
    %c0_80 = arith.constant 0 : index
    %242 = arith.index_cast %2 : i32 to index
    %243 = vector.load %arg3[%c8_79, %c0_80, %242] : memref<16x64x128xf32, #tpu.memory_space<vmem>>, vector<1x64x128xf32>
    %244 = vector.shape_cast %243 : vector<1x64x128xf32> to vector<64x128xf32>
    %245 = arith.subf %244, %102 : vector<64x128xf32>
    %246 = arith.mulf %245, %109 : vector<64x128xf32>
    %c8_81 = arith.constant 8 : index
    %247 = memref.load %arg1[%c8_81] : memref<16xf32, #tpu.memory_space<smem>>
    %248 = vector.broadcast %247 : f32 to vector<64x128xf32>
    %249 = arith.mulf %246, %248 : vector<64x128xf32>
    %c8_82 = arith.constant 8 : index
    %250 = memref.load %arg2[%c8_82] : memref<16xf32, #tpu.memory_space<smem>>
    %251 = vector.broadcast %250 : f32 to vector<64x128xf32>
    %252 = arith.addf %249, %251 : vector<64x128xf32>
    %cst_83 = arith.constant dense<0.000000e+00> : vector<100x128xf32>
    %253 = tpu.matmul %0, %252, %cst_83 {dimension_numbers = #tpu.dot_dimension_numbers<[1], [0], [0], [1], [0, 0, 1, 1], [], []>} : vector<100x64xf32>, vector<64x128xf32>, vector<100x128xf32> -> vector<100x128xf32>
    %c9_84 = arith.constant 9 : index
    %c0_85 = arith.constant 0 : index
    %254 = arith.index_cast %2 : i32 to index
    %255 = vector.load %arg5[%c9_84, %c0_85, %254] : memref<18x100x128xf32, #tpu.memory_space<vmem>>, vector<1x100x128xf32>
    %256 = vector.shape_cast %255 : vector<1x100x128xf32> to vector<100x128xf32>
    %257 = vector.shape_cast %253 : vector<100x128xf32> to vector<1x100x128xf32>
    tpu.vector_store %arg5[%c9_84, %c0_85, %254], %257 {strides = array<i32>} : memref<18x100x128xf32, #tpu.memory_space<vmem>>, vector<1x100x128xf32>,
    %c10_86 = arith.constant 10 : index
    %c0_87 = arith.constant 0 : index
    %258 = arith.index_cast %2 : i32 to index
    %259 = vector.load %arg5[%c10_86, %c0_87, %258] : memref<18x100x128xf32, #tpu.memory_space<vmem>>, vector<1x100x128xf32>
    %260 = vector.shape_cast %259 : vector<1x100x128xf32> to vector<100x128xf32>
    %261 = vector.shape_cast %253 : vector<100x128xf32> to vector<1x100x128xf32>
    tpu.vector_store %arg5[%c10_86, %c0_87, %258], %261 {strides = array<i32>} : memref<18x100x128xf32, #tpu.memory_space<vmem>>, vector<1x100x128xf32>,
    %c9_88 = arith.constant 9 : index
    %c0_89 = arith.constant 0 : index
    %262 = arith.index_cast %2 : i32 to index
    %263 = vector.load %arg3[%c9_88, %c0_89, %262] : memref<16x64x128xf32, #tpu.memory_space<vmem>>, vector<1x64x128xf32>
    %264 = vector.shape_cast %263 : vector<1x64x128xf32> to vector<64x128xf32>
    %265 = arith.subf %264, %102 : vector<64x128xf32>
    %266 = arith.mulf %265, %109 : vector<64x128xf32>
    %c9_90 = arith.constant 9 : index
    %267 = memref.load %arg1[%c9_90] : memref<16xf32, #tpu.memory_space<smem>>
    %268 = vector.broadcast %267 : f32 to vector<64x128xf32>
    %269 = arith.mulf %266, %268 : vector<64x128xf32>
    %c9_91 = arith.constant 9 : index
    %270 = memref.load %arg2[%c9_91] : memref<16xf32, #tpu.memory_space<smem>>
    %271 = vector.broadcast %270 : f32 to vector<64x128xf32>
    %272 = arith.addf %269, %271 : vector<64x128xf32>
    %cst_92 = arith.constant dense<0.000000e+00> : vector<100x128xf32>
    %273 = tpu.matmul %0, %272, %cst_92 {dimension_numbers = #tpu.dot_dimension_numbers<[1], [0], [0], [1], [0, 0, 1, 1], [], []>} : vector<100x64xf32>, vector<64x128xf32>, vector<100x128xf32> -> vector<100x128xf32>
    %c11_93 = arith.constant 11 : index
    %c0_94 = arith.constant 0 : index
    %274 = arith.index_cast %2 : i32 to index
    %275 = vector.load %arg5[%c11_93, %c0_94, %274] : memref<18x100x128xf32, #tpu.memory_space<vmem>>, vector<1x100x128xf32>
    %276 = vector.shape_cast %275 : vector<1x100x128xf32> to vector<100x128xf32>
    %277 = vector.shape_cast %273 : vector<100x128xf32> to vector<1x100x128xf32>
    tpu.vector_store %arg5[%c11_93, %c0_94, %274], %277 {strides = array<i32>} : memref<18x100x128xf32, #tpu.memory_space<vmem>>, vector<1x100x128xf32>,
    %c10_95 = arith.constant 10 : index
    %c0_96 = arith.constant 0 : index
    %278 = arith.index_cast %2 : i32 to index
    %279 = vector.load %arg3[%c10_95, %c0_96, %278] : memref<16x64x128xf32, #tpu.memory_space<vmem>>, vector<1x64x128xf32>
    %280 = vector.shape_cast %279 : vector<1x64x128xf32> to vector<64x128xf32>
    %281 = arith.subf %280, %102 : vector<64x128xf32>
    %282 = arith.mulf %281, %109 : vector<64x128xf32>
    %c10_97 = arith.constant 10 : index
    %283 = memref.load %arg1[%c10_97] : memref<16xf32, #tpu.memory_space<smem>>
    %284 = vector.broadcast %283 : f32 to vector<64x128xf32>
    %285 = arith.mulf %282, %284 : vector<64x128xf32>
    %c10_98 = arith.constant 10 : index
    %286 = memref.load %arg2[%c10_98] : memref<16xf32, #tpu.memory_space<smem>>
    %287 = vector.broadcast %286 : f32 to vector<64x128xf32>
    %288 = arith.addf %285, %287 : vector<64x128xf32>
    %cst_99 = arith.constant dense<0.000000e+00> : vector<100x128xf32>
    %289 = tpu.matmul %0, %288, %cst_99 {dimension_numbers = #tpu.dot_dimension_numbers<[1], [0], [0], [1], [0, 0, 1, 1], [], []>} : vector<100x64xf32>, vector<64x128xf32>, vector<100x128xf32> -> vector<100x128xf32>
    %c12_100 = arith.constant 12 : index
    %c0_101 = arith.constant 0 : index
    %290 = arith.index_cast %2 : i32 to index
    %291 = vector.load %arg5[%c12_100, %c0_101, %290] : memref<18x100x128xf32, #tpu.memory_space<vmem>>, vector<1x100x128xf32>
    %292 = vector.shape_cast %291 : vector<1x100x128xf32> to vector<100x128xf32>
    %293 = vector.shape_cast %289 : vector<100x128xf32> to vector<1x100x128xf32>
    tpu.vector_store %arg5[%c12_100, %c0_101, %290], %293 {strides = array<i32>} : memref<18x100x128xf32, #tpu.memory_space<vmem>>, vector<1x100x128xf32>,
    %c11_102 = arith.constant 11 : index
    %c0_103 = arith.constant 0 : index
    %294 = arith.index_cast %2 : i32 to index
    %295 = vector.load %arg3[%c11_102, %c0_103, %294] : memref<16x64x128xf32, #tpu.memory_space<vmem>>, vector<1x64x128xf32>
    %296 = vector.shape_cast %295 : vector<1x64x128xf32> to vector<64x128xf32>
    %297 = arith.subf %296, %102 : vector<64x128xf32>
    %298 = arith.mulf %297, %109 : vector<64x128xf32>
    %c11_104 = arith.constant 11 : index
    %299 = memref.load %arg1[%c11_104] : memref<16xf32, #tpu.memory_space<smem>>
    %300 = vector.broadcast %299 : f32 to vector<64x128xf32>
    %301 = arith.mulf %298, %300 : vector<64x128xf32>
    %c11_105 = arith.constant 11 : index
    %302 = memref.load %arg2[%c11_105] : memref<16xf32, #tpu.memory_space<smem>>
    %303 = vector.broadcast %302 : f32 to vector<64x128xf32>
    %304 = arith.addf %301, %303 : vector<64x128xf32>
    %cst_106 = arith.constant dense<0.000000e+00> : vector<100x128xf32>
    %305 = tpu.matmul %0, %304, %cst_106 {dimension_numbers = #tpu.dot_dimension_numbers<[1], [0], [0], [1], [0, 0, 1, 1], [], []>} : vector<100x64xf32>, vector<64x128xf32>, vector<100x128xf32> -> vector<100x128xf32>
    %c13_107 = arith.constant 13 : index
    %c0_108 = arith.constant 0 : index
    %306 = arith.index_cast %2 : i32 to index
    %307 = vector.load %arg5[%c13_107, %c0_108, %306] : memref<18x100x128xf32, #tpu.memory_space<vmem>>, vector<1x100x128xf32>
    %308 = vector.shape_cast %307 : vector<1x100x128xf32> to vector<100x128xf32>
    %309 = vector.shape_cast %305 : vector<100x128xf32> to vector<1x100x128xf32>
    tpu.vector_store %arg5[%c13_107, %c0_108, %306], %309 {strides = array<i32>} : memref<18x100x128xf32, #tpu.memory_space<vmem>>, vector<1x100x128xf32>,
    %c12_109 = arith.constant 12 : index
    %c0_110 = arith.constant 0 : index
    %310 = arith.index_cast %2 : i32 to index
    %311 = vector.load %arg3[%c12_109, %c0_110, %310] : memref<16x64x128xf32, #tpu.memory_space<vmem>>, vector<1x64x128xf32>
    %312 = vector.shape_cast %311 : vector<1x64x128xf32> to vector<64x128xf32>
    %313 = arith.subf %312, %102 : vector<64x128xf32>
    %314 = arith.mulf %313, %109 : vector<64x128xf32>
    %c12_111 = arith.constant 12 : index
    %315 = memref.load %arg1[%c12_111] : memref<16xf32, #tpu.memory_space<smem>>
    %316 = vector.broadcast %315 : f32 to vector<64x128xf32>
    %317 = arith.mulf %314, %316 : vector<64x128xf32>
    %c12_112 = arith.constant 12 : index
    %318 = memref.load %arg2[%c12_112] : memref<16xf32, #tpu.memory_space<smem>>
    %319 = vector.broadcast %318 : f32 to vector<64x128xf32>
    %320 = arith.addf %317, %319 : vector<64x128xf32>
    %cst_113 = arith.constant dense<0.000000e+00> : vector<100x128xf32>
    %321 = tpu.matmul %0, %320, %cst_113 {dimension_numbers = #tpu.dot_dimension_numbers<[1], [0], [0], [1], [0, 0, 1, 1], [], []>} : vector<100x64xf32>, vector<64x128xf32>, vector<100x128xf32> -> vector<100x128xf32>
    %c14_114 = arith.constant 14 : index
    %c0_115 = arith.constant 0 : index
    %322 = arith.index_cast %2 : i32 to index
    %323 = vector.load %arg5[%c14_114, %c0_115, %322] : memref<18x100x128xf32, #tpu.memory_space<vmem>>, vector<1x100x128xf32>
    %324 = vector.shape_cast %323 : vector<1x100x128xf32> to vector<100x128xf32>
    %325 = vector.shape_cast %321 : vector<100x128xf32> to vector<1x100x128xf32>
    tpu.vector_store %arg5[%c14_114, %c0_115, %322], %325 {strides = array<i32>} : memref<18x100x128xf32, #tpu.memory_space<vmem>>, vector<1x100x128xf32>,
    %c13_116 = arith.constant 13 : index
    %c0_117 = arith.constant 0 : index
    %326 = arith.index_cast %2 : i32 to index
    %327 = vector.load %arg3[%c13_116, %c0_117, %326] : memref<16x64x128xf32, #tpu.memory_space<vmem>>, vector<1x64x128xf32>
    %328 = vector.shape_cast %327 : vector<1x64x128xf32> to vector<64x128xf32>
    %329 = arith.subf %328, %102 : vector<64x128xf32>
    %330 = arith.mulf %329, %109 : vector<64x128xf32>
    %c13_118 = arith.constant 13 : index
    %331 = memref.load %arg1[%c13_118] : memref<16xf32, #tpu.memory_space<smem>>
    %332 = vector.broadcast %331 : f32 to vector<64x128xf32>
    %333 = arith.mulf %330, %332 : vector<64x128xf32>
    %c13_119 = arith.constant 13 : index
    %334 = memref.load %arg2[%c13_119] : memref<16xf32, #tpu.memory_space<smem>>
    %335 = vector.broadcast %334 : f32 to vector<64x128xf32>
    %336 = arith.addf %333, %335 : vector<64x128xf32>
    %cst_120 = arith.constant dense<0.000000e+00> : vector<100x128xf32>
    %337 = tpu.matmul %0, %336, %cst_120 {dimension_numbers = #tpu.dot_dimension_numbers<[1], [0], [0], [1], [0, 0, 1, 1], [], []>} : vector<100x64xf32>, vector<64x128xf32>, vector<100x128xf32> -> vector<100x128xf32>
    %c15_121 = arith.constant 15 : index
    %c0_122 = arith.constant 0 : index
    %338 = arith.index_cast %2 : i32 to index
    %339 = vector.load %arg5[%c15_121, %c0_122, %338] : memref<18x100x128xf32, #tpu.memory_space<vmem>>, vector<1x100x128xf32>
    %340 = vector.shape_cast %339 : vector<1x100x128xf32> to vector<100x128xf32>
    %341 = vector.shape_cast %337 : vector<100x128xf32> to vector<1x100x128xf32>
    tpu.vector_store %arg5[%c15_121, %c0_122, %338], %341 {strides = array<i32>} : memref<18x100x128xf32, #tpu.memory_space<vmem>>, vector<1x100x128xf32>,
    %c14_123 = arith.constant 14 : index
    %c0_124 = arith.constant 0 : index
    %342 = arith.index_cast %2 : i32 to index
    %343 = vector.load %arg3[%c14_123, %c0_124, %342] : memref<16x64x128xf32, #tpu.memory_space<vmem>>, vector<1x64x128xf32>
    %344 = vector.shape_cast %343 : vector<1x64x128xf32> to vector<64x128xf32>
    %345 = arith.subf %344, %102 : vector<64x128xf32>
    %346 = arith.mulf %345, %109 : vector<64x128xf32>
    %c14_125 = arith.constant 14 : index
    %347 = memref.load %arg1[%c14_125] : memref<16xf32, #tpu.memory_space<smem>>
    %348 = vector.broadcast %347 : f32 to vector<64x128xf32>
    %349 = arith.mulf %346, %348 : vector<64x128xf32>
    %c14_126 = arith.constant 14 : index
    %350 = memref.load %arg2[%c14_126] : memref<16xf32, #tpu.memory_space<smem>>
    %351 = vector.broadcast %350 : f32 to vector<64x128xf32>
    %352 = arith.addf %349, %351 : vector<64x128xf32>
    %cst_127 = arith.constant dense<0.000000e+00> : vector<100x128xf32>
    %353 = tpu.matmul %0, %352, %cst_127 {dimension_numbers = #tpu.dot_dimension_numbers<[1], [0], [0], [1], [0, 0, 1, 1], [], []>} : vector<100x64xf32>, vector<64x128xf32>, vector<100x128xf32> -> vector<100x128xf32>
    %c16 = arith.constant 16 : index
    %c0_128 = arith.constant 0 : index
    %354 = arith.index_cast %2 : i32 to index
    %355 = vector.load %arg5[%c16, %c0_128, %354] : memref<18x100x128xf32, #tpu.memory_space<vmem>>, vector<1x100x128xf32>
    %356 = vector.shape_cast %355 : vector<1x100x128xf32> to vector<100x128xf32>
    %357 = vector.shape_cast %353 : vector<100x128xf32> to vector<1x100x128xf32>
    tpu.vector_store %arg5[%c16, %c0_128, %354], %357 {strides = array<i32>} : memref<18x100x128xf32, #tpu.memory_space<vmem>>, vector<1x100x128xf32>,
    %c15_129 = arith.constant 15 : index
    %c0_130 = arith.constant 0 : index
    %358 = arith.index_cast %2 : i32 to index
    %359 = vector.load %arg3[%c15_129, %c0_130, %358] : memref<16x64x128xf32, #tpu.memory_space<vmem>>, vector<1x64x128xf32>
    %360 = vector.shape_cast %359 : vector<1x64x128xf32> to vector<64x128xf32>
    %361 = arith.subf %360, %102 : vector<64x128xf32>
    %362 = arith.mulf %361, %109 : vector<64x128xf32>
    %c15_131 = arith.constant 15 : index
    %363 = memref.load %arg1[%c15_131] : memref<16xf32, #tpu.memory_space<smem>>
    %364 = vector.broadcast %363 : f32 to vector<64x128xf32>
    %365 = arith.mulf %362, %364 : vector<64x128xf32>
    %c15_132 = arith.constant 15 : index
    %366 = memref.load %arg2[%c15_132] : memref<16xf32, #tpu.memory_space<smem>>
    %367 = vector.broadcast %366 : f32 to vector<64x128xf32>
    %368 = arith.addf %365, %367 : vector<64x128xf32>
    %cst_133 = arith.constant dense<0.000000e+00> : vector<100x128xf32>
    %369 = tpu.matmul %0, %368, %cst_133 {dimension_numbers = #tpu.dot_dimension_numbers<[1], [0], [0], [1], [0, 0, 1, 1], [], []>} : vector<100x64xf32>, vector<64x128xf32>, vector<100x128xf32> -> vector<100x128xf32>
    %c17 = arith.constant 17 : index
    %c0_134 = arith.constant 0 : index
    %370 = arith.index_cast %2 : i32 to index
    %371 = vector.load %arg5[%c17, %c0_134, %370] : memref<18x100x128xf32, #tpu.memory_space<vmem>>, vector<1x100x128xf32>
    %372 = vector.shape_cast %371 : vector<1x100x128xf32> to vector<100x128xf32>
    %373 = vector.shape_cast %369 : vector<100x128xf32> to vector<1x100x128xf32>
    tpu.vector_store %arg5[%c17, %c0_134, %370], %373 {strides = array<i32>} : memref<18x100x128xf32, #tpu.memory_space<vmem>>, vector<1x100x128xf32>,
    %c1_i32 = arith.constant 1 : i32
    return
  }
  func.func @transform_0(%arg0: i32) -> i32 {
    %c0_i32 = arith.constant 0 : i32
    %c0_i32_0 = arith.constant 0 : i32
    return %c0_i32 : i32
  }
  func.func @transform_1(%arg0: i32) -> i32 {
    %c0_i32 = arith.constant 0 : i32
    %c0_i32_0 = arith.constant 0 : i32
    return %c0_i32 : i32
  }
  func.func @transform_2(%arg0: i32) -> (i32, i32, i32) {
    %c0_i32 = arith.constant 0 : i32
    %c0_i32_0 = arith.constant 0 : i32
    %c0_i32_1 = arith.constant 0 : i32
    return %c0_i32, %c0_i32_0, %arg0 : i32, i32, i32
  }
  func.func @transform_3(%arg0: i32) -> (i32, i32) {
    %c0_i32 = arith.constant 0 : i32
    %c0_i32_0 = arith.constant 0 : i32
    %c0_i32_1 = arith.constant 0 : i32
    return %c0_i32, %c0_i32_0 : i32, i32
  }
  func.func @transform_4(%arg0: i32) -> (i32, i32, i32) {
    %c0_i32 = arith.constant 0 : i32
    %c0_i32_0 = arith.constant 0 : i32
    %c0_i32_1 = arith.constant 0 : i32
    return %c0_i32, %c0_i32_0, %arg0 : i32, i32, i32
  }
}

</mosaic_0001>

<llo_original>
// kernel: tpu_custom_call.1
$region0: #{tpu_custom_call.1}
  #allocation0 [shape = 'u32[]', space=smem, size = 0x4, offset = 0x4, fixed_abs, tag = 'smem constant byte address 0x4 - core index']
  #allocation1 [shape = 'u32[72,128]{1,0:T(1,128)}', space=vmem, size = 0x9000, scoped, tag = 'internal scratch']
  %s0 = inlined_call_operand.vmem [shape: f32[16], index: 0, kind: input, shape index: {}]
  %s1 = inlined_call_operand.vmem [shape: f32[16], index: 1, kind: input, shape index: {}]
  %s2 = inlined_call_operand.hbm [shape: f32[16,64,128], index: 2, kind: input, shape index: {}]
  %s3 = inlined_call_operand.vmem [shape: f32[100,64], index: 3, kind: input, shape index: {}]
  %s4 = inlined_call_operand.hbm [shape: f32[18,100,128], index: 4, kind: output, shape index: {}]
  %s5 = sld [smem:[#allocation0]]
  $region38: #{tpu_custom_call.1} parent=0
    _
  %s7 = ssub.s32 1, %s5
  %s8 = scalar_select 0, %s7, %s5
  $region1: #{tpu_custom_call.1} parent=0
    #allocation2 [shape = 'u8[512]{0}', space=smem, size = 0x200, scoped, tag = 'input window, operand 0, single buffered']
    #allocation3 [shape = 's32[1]{0}', space=sflag, size = 0x4, scoped, tag = 'scoped memory for tpu_custom_call.1']
    #allocation4 [shape = 's32[1]{0}', space=sflag, size = 0x4, scoped, tag = 'scoped memory for tpu_custom_call.1']
    #allocation5 [shape = 's32[1]{0}', space=sflag, size = 0x4, scoped, tag = 'scoped memory for tpu_custom_call.1']
    #allocation6 [shape = 'u8[512]{0}', space=smem, size = 0x200, scoped, tag = 'input window, operand 1, single buffered']
    #allocation7 [shape = 's32[1]{0}', space=sflag, size = 0x4, scoped, tag = 'scoped memory for tpu_custom_call.1']
    #allocation8 [shape = 'u8[524288]{0}', space=vmem, size = 0x80000, scoped, tag = 'input window, operand 2, single buffered']
    #allocation9 [shape = 'u8[958464]{0}', space=vmem, size = 0xea000, scoped, tag = 'output window, operand 0, single buffered']
    %9 = vsyncpa [#allocation5], 0
    %10 = vsyncpa [#allocation7], 0
    %11 = vsyncpa [#allocation3], 0
    %12 = vsyncpa [#allocation4], 0
    // Predicated region
    $region2: #{tpu_custom_call.1} parent=1 // pred_check
      _
    $region3: #{tpu_custom_call.1} parent=1 // pred_check_branch
      %14 = sbr.rel (0) target = $region5
    $region4: #{tpu_custom_call.1} parent=1 // pred_region
      %16 = vsyncadd [#allocation5], 0
      %s18 = sshll.u32 %s0, 4
      %s19 = int_to_ptr.vmem [resolvable:$true] %s18
      %21 = dma.vmem_to_smem %s19, 16, [#allocation2], [#allocation5]
    $region5: #{tpu_custom_call.1} parent=1 // pred_fallthru
      _
    // Predicated region
    $region6: #{tpu_custom_call.1} parent=1 // pred_check
      _
    $region7: #{tpu_custom_call.1} parent=1 // pred_check_branch
      %23 = sbr.rel (0) target = $region9
    $region8: #{tpu_custom_call.1} parent=1 // pred_region
      %25 = vsyncadd [#allocation7], 0
      %s27 = sshll.u32 %s1, 4
      %s28 = int_to_ptr.vmem [resolvable:$true] %s27
      %30 = dma.vmem_to_smem %s28, 16, [#allocation6], [#allocation7]
    $region9: #{tpu_custom_call.1} parent=1 // pred_fallthru
      _
    // Predicated region
    $region10: #{tpu_custom_call.1} parent=1 // pred_check
      _
    $region11: #{tpu_custom_call.1} parent=1 // pred_check_branch
      %32 = sbr.rel (0) target = $region13
    $region12: #{tpu_custom_call.1} parent=1 // pred_region
      %34 = vsyncadd [#allocation3], 0
      %s35 = sshll.u32 %s2, 4
      %s36 = int_to_ptr.hbm [resolvable:$true] %s35
      %s37 = sshll.u32 [#allocation8], 4
      %s38 = int_to_ptr.vmem [resolvable:$true] %s37
      %43 = dma.hbm_to_vmem [thread:$0]  %s36, 16384, %s38, [#allocation3], 128, 128, 8
    $region13: #{tpu_custom_call.1} parent=1 // pred_fallthru
      _
    // Predicated region
    $region14: #{tpu_custom_call.1} parent=1 // pred_check
      _
    $region15: #{tpu_custom_call.1} parent=1 // pred_check_branch
      %45 = sbr.rel (0) target = $region17
    $region16: #{tpu_custom_call.1} parent=1 // pred_region
      _
    $region17: #{tpu_custom_call.1} parent=1 // pred_fallthru
      _
    // Predicated region
    $region18: #{tpu_custom_call.1} parent=1 // pred_check
      _
    $region19: #{tpu_custom_call.1} parent=1 // pred_check_branch
      %47 = sbr.rel (0) target = $region21
    $region20: #{tpu_custom_call.1} parent=1 // pred_region
      %49 = dma.done [#allocation5], 16
    $region21: #{tpu_custom_call.1} parent=1 // pred_fallthru
      _
    // Predicated region
    $region22: #{tpu_custom_call.1} parent=1 // pred_check
      _
    $region23: #{tpu_custom_call.1} parent=1 // pred_check_branch
      %51 = sbr.rel (0) target = $region25
    $region24: #{tpu_custom_call.1} parent=1 // pred_region
      %53 = dma.done [#allocation7], 16
    $region25: #{tpu_custom_call.1} parent=1 // pred_fallthru
      _
    // Predicated region
    $region26: #{tpu_custom_call.1} parent=1 // pred_check
      _
    $region27: #{tpu_custom_call.1} parent=1 // pred_check_branch
      %55 = sbr.rel (0) target = $region29
    $region28: #{tpu_custom_call.1} parent=1 // pred_region
      %57 = dma.done [#allocation3], 16384
    $region29: #{tpu_custom_call.1} parent=1 // pred_fallthru
      _
    %58 = sfence
    %v59 = vld [vmem:[%s3] sm:$0xff]
    %v60 = vld [vmem:[%s3 + $0x8] sm:$0xff]
    %v61 = vld [vmem:[%s3 + $0x10] sm:$0xff]
    %v62 = vld [vmem:[%s3 + $0x18] sm:$0xff]
    %v63 = vld [vmem:[%s3 + $0x20] sm:$0xff]
    %v64 = vld [vmem:[%s3 + $0x28] sm:$0xff]
    %v65 = vld [vmem:[%s3 + $0x30] sm:$0xff]
    %v66 = vld [vmem:[%s3 + $0x38] sm:$0xff]
    %v67 = vld [vmem:[%s3 + $0x40] sm:$0xff]
    %v68 = vld [vmem:[%s3 + $0x48] sm:$0xff]
    %v69 = vld [vmem:[%s3 + $0x50] sm:$0xff]
    %v70 = vld [vmem:[%s3 + $0x58] sm:$0xff]
    %v71 = vld [vmem:[%s3 + $0x60] sm:$0xf]
    %v72 = vld [vmem:[#allocation8] sm:$0xff]
    %v73 = vld [vmem:[#allocation8 + $0x8] sm:$0xff]
    %v74 = vld [vmem:[#allocation8 + $0x10] sm:$0xff]
    %v75 = vld [vmem:[#allocation8 + $0x18] sm:$0xff]
    %v76 = vld [vmem:[#allocation8 + $0x20] sm:$0xff]
    %v77 = vld [vmem:[#allocation8 + $0x28] sm:$0xff]
    %v78 = vld [vmem:[#allocation8 + $0x30] sm:$0xff]
    %v79 = vld [vmem:[#allocation8 + $0x38] sm:$0xff]
    %v80 = vadd.f32 %v72, 0.0
    %v81 = vadd.f32 %v73, 0.0
    %v82 = vadd.f32 %v74, 0.0
    %v83 = vadd.f32 %v75, 0.0
    %v84 = vadd.f32 %v76, 0.0
    %v85 = vadd.f32 %v77, 0.0
    %v86 = vadd.f32 %v78, 0.0
    %v87 = vadd.f32 %v79, 0.0
    %v88 = vmul.f32 %v72, %v72
    %v89 = vmul.f32 %v73, %v73
    %v90 = vmul.f32 %v74, %v74
    %v91 = vmul.f32 %v75, %v75
    %v92 = vmul.f32 %v76, %v76
    %v93 = vmul.f32 %v77, %v77
    %v94 = vmul.f32 %v78, %v78
    %v95 = vmul.f32 %v79, %v79
    %v96 = vadd.f32 %v88, 0.0
    %v97 = vadd.f32 %v89, 0.0
    %v98 = vadd.f32 %v90, 0.0
    %v99 = vadd.f32 %v91, 0.0
    %v100 = vadd.f32 %v92, 0.0
    %v101 = vadd.f32 %v93, 0.0
    %v102 = vadd.f32 %v94, 0.0
    %v103 = vadd.f32 %v95, 0.0
    %s104 = sadd.s32 0, 64
    %s105 = scalar_lea.vmem [#allocation8], %s104
    %v106 = vld [vmem:[%s105] sm:$0xff]
    %v107 = vld [vmem:[%s105 + $0x8] sm:$0xff]
    %v108 = vld [vmem:[%s105 + $0x10] sm:$0xff]
    %v109 = vld [vmem:[%s105 + $0x18] sm:$0xff]
    %v110 = vld [vmem:[%s105 + $0x20] sm:$0xff]
    %v111 = vld [vmem:[%s105 + $0x28] sm:$0xff]
    %v112 = vld [vmem:[%s105 + $0x30] sm:$0xff]
    %v113 = vld [vmem:[%s105 + $0x38] sm:$0xff]
    %v114 = vadd.f32 %v80, %v106
    %v115 = vadd.f32 %v81, %v107
    %v116 = vadd.f32 %v82, %v108
    %v117 = vadd.f32 %v83, %v109
    %v118 = vadd.f32 %v84, %v110
    %v119 = vadd.f32 %v85, %v111
    %v120 = vadd.f32 %v86, %v112
    %v121 = vadd.f32 %v87, %v113
    %v122 = vmul.f32 %v106, %v106
    %v123 = vmul.f32 %v107, %v107
    %v124 = vmul.f32 %v108, %v108
    %v125 = vmul.f32 %v109, %v109
    %v126 = vmul.f32 %v110, %v110
    %v127 = vmul.f32 %v111, %v111
    %v128 = vmul.f32 %v112, %v112
    %v129 = vmul.f32 %v113, %v113
    %v130 = vadd.f32 %v96, %v122
    %v131 = vadd.f32 %v97, %v123
    %v132 = vadd.f32 %v98, %v124
    %v133 = vadd.f32 %v99, %v125
    %v134 = vadd.f32 %v100, %v126
    %v135 = vadd.f32 %v101, %v127
    %v136 = vadd.f32 %v102, %v128
    %v137 = vadd.f32 %v103, %v129
    %s138 = sadd.s32 0, 128
    %s139 = scalar_lea.vmem [#allocation8], %s138
    %v140 = vld [vmem:[%s139] sm:$0xff]
    %v141 = vld [vmem:[%s139 + $0x8] sm:$0xff]
    %v142 = vld [vmem:[%s139 + $0x10] sm:$0xff]
    %v143 = vld [vmem:[%s139 + $0x18] sm:$0xff]
    %v144 = vld [vmem:[%s139 + $0x20] sm:$0xff]
    %v145 = vld [vmem:[%s139 + $0x28] sm:$0xff]
    %v146 = vld [vmem:[%s139 + $0x30] sm:$0xff]
    %v147 = vld [vmem:[%s139 + $0x38] sm:$0xff]
    %v148 = vadd.f32 %v114, %v140
    %v149 = vadd.f32 %v115, %v141
    %v150 = vadd.f32 %v116, %v142
    %v151 = vadd.f32 %v117, %v143
    %v152 = vadd.f32 %v118, %v144
    %v153 = vadd.f32 %v119, %v145
    %v154 = vadd.f32 %v120, %v146
    %v155 = vadd.f32 %v121, %v147
    %v156 = vmul.f32 %v140, %v140
    %v157 = vmul.f32 %v141, %v141
    %v158 = vmul.f32 %v142, %v142
    %v159 = vmul.f32 %v143, %v143
    %v160 = vmul.f32 %v144, %v144
    %v161 = vmul.f32 %v145, %v145
    %v162 = vmul.f32 %v146, %v146
    %v163 = vmul.f32 %v147, %v147
    %v164 = vadd.f32 %v130, %v156
    %v165 = vadd.f32 %v131, %v157
    %v166 = vadd.f32 %v132, %v158
    %v167 = vadd.f32 %v133, %v159
    %v168 = vadd.f32 %v134, %v160
    %v169 = vadd.f32 %v135, %v161
    %v170 = vadd.f32 %v136, %v162
    %v171 = vadd.f32 %v137, %v163
    %s172 = sadd.s32 0, 192
    %s173 = scalar_lea.vmem [#allocation8], %s172
    %v174 = vld [vmem:[%s173] sm:$0xff]
    %v175 = vld [vmem:[%s173 + $0x8] sm:$0xff]
    %v176 = vld [vmem:[%s173 + $0x10] sm:$0xff]
    %v177 = vld [vmem:[%s173 + $0x18] sm:$0xff]
    %v178 = vld [vmem:[%s173 + $0x20] sm:$0xff]
    %v179 = vld [vmem:[%s173 + $0x28] sm:$0xff]
    %v180 = vld [vmem:[%s173 + $0x30] sm:$0xff]
    %v181 = vld [vmem:[%s173 + $0x38] sm:$0xff]
    %v182 = vadd.f32 %v148, %v174
    %v183 = vadd.f32 %v149, %v175
    %v184 = vadd.f32 %v150, %v176
    %v185 = vadd.f32 %v151, %v177
    %v186 = vadd.f32 %v152, %v178
    %v187 = vadd.f32 %v153, %v179
    %v188 = vadd.f32 %v154, %v180
    %v189 = vadd.f32 %v155, %v181
    %v190 = vmul.f32 %v174, %v174
    %v191 = vmul.f32 %v175, %v175
    %v192 = vmul.f32 %v176, %v176
    %v193 = vmul.f32 %v177, %v177
    %v194 = vmul.f32 %v178, %v178
    %v195 = vmul.f32 %v179, %v179
    %v196 = vmul.f32 %v180, %v180
    %v197 = vmul.f32 %v181, %v181
    %v198 = vadd.f32 %v164, %v190
    %v199 = vadd.f32 %v165, %v191
    %v200 = vadd.f32 %v166, %v192
    %v201 = vadd.f32 %v167, %v193
    %v202 = vadd.f32 %v168, %v194
    %v203 = vadd.f32 %v169, %v195
    %v204 = vadd.f32 %v170, %v196
    %v205 = vadd.f32 %v171, %v197
    %s206 = sadd.s32 0, 256
    %s207 = scalar_lea.vmem [#allocation8], %s206
    %v208 = vld [vmem:[%s207] sm:$0xff]
    %v209 = vld [vmem:[%s207 + $0x8] sm:$0xff]
    %v210 = vld [vmem:[%s207 + $0x10] sm:$0xff]
    %v211 = vld [vmem:[%s207 + $0x18] sm:$0xff]
    %v212 = vld [vmem:[%s207 + $0x20] sm:$0xff]
    %v213 = vld [vmem:[%s207 + $0x28] sm:$0xff]
    %v214 = vld [vmem:[%s207 + $0x30] sm:$0xff]
    %v215 = vld [vmem:[%s207 + $0x38] sm:$0xff]
    %v216 = vadd.f32 %v182, %v208
    %v217 = vadd.f32 %v183, %v209
    %v218 = vadd.f32 %v184, %v210
    %v219 = vadd.f32 %v185, %v211
    %v220 = vadd.f32 %v186, %v212
    %v221 = vadd.f32 %v187, %v213
    %v222 = vadd.f32 %v188, %v214
    %v223 = vadd.f32 %v189, %v215
    %v224 = vmul.f32 %v208, %v208
    %v225 = vmul.f32 %v209, %v209
    %v226 = vmul.f32 %v210, %v210
    %v227 = vmul.f32 %v211, %v211
    %v228 = vmul.f32 %v212, %v212
    %v229 = vmul.f32 %v213, %v213
    %v230 = vmul.f32 %v214, %v214
    %v231 = vmul.f32 %v215, %v215
    %v232 = vadd.f32 %v198, %v224
    %v233 = vadd.f32 %v199, %v225
    %v234 = vadd.f32 %v200, %v226
    %v235 = vadd.f32 %v201, %v227
    %v236 = vadd.f32 %v202, %v228
    %v237 = vadd.f32 %v203, %v229
    %v238 = vadd.f32 %v204, %v230
    %v239 = vadd.f32 %v205, %v231
    %s240 = sadd.s32 0, 320
    %s241 = scalar_lea.vmem [#allocation8], %s240
    %v242 = vld [vmem:[%s241] sm:$0xff]
    %v243 = vld [vmem:[%s241 + $0x8] sm:$0xff]
    %v244 = vld [vmem:[%s241 + $0x10] sm:$0xff]
    %v245 = vld [vmem:[%s241 + $0x18] sm:$0xff]
    %v246 = vld [vmem:[%s241 + $0x20] sm:$0xff]
    %v247 = vld [vmem:[%s241 + $0x28] sm:$0xff]
    %v248 = vld [vmem:[%s241 + $0x30] sm:$0xff]
    %v249 = vld [vmem:[%s241 + $0x38] sm:$0xff]
    %v250 = vadd.f32 %v216, %v242
    %v251 = vadd.f32 %v217, %v243
    %v252 = vadd.f32 %v218, %v244
    %v253 = vadd.f32 %v219, %v245
    %v254 = vadd.f32 %v220, %v246
    %v255 = vadd.f32 %v221, %v247
    %v256 = vadd.f32 %v222, %v248
    %v257 = vadd.f32 %v223, %v249
    %v258 = vmul.f32 %v242, %v242
    %v259 = vmul.f32 %v243, %v243
    %v260 = vmul.f32 %v244, %v244
    %v261 = vmul.f32 %v245, %v245
    %v262 = vmul.f32 %v246, %v246
    %v263 = vmul.f32 %v247, %v247
    %v264 = vmul.f32 %v248, %v248
    %v265 = vmul.f32 %v249, %v249
    %v266 = vadd.f32 %v232, %v258
    %v267 = vadd.f32 %v233, %v259
    %v268 = vadd.f32 %v234, %v260
    %v269 = vadd.f32 %v235, %v261
    %v270 = vadd.f32 %v236, %v262
    %v271 = vadd.f32 %v237, %v263
    %v272 = vadd.f32 %v238, %v264
    %v273 = vadd.f32 %v239, %v265
    %s274 = sadd.s32 0, 384
    %s275 = scalar_lea.vmem [#allocation8], %s274
    %v276 = vld [vmem:[%s275] sm:$0xff]
    %v277 = vld [vmem:[%s275 + $0x8] sm:$0xff]
    %v278 = vld [vmem:[%s275 + $0x10] sm:$0xff]
    %v279 = vld [vmem:[%s275 + $0x18] sm:$0xff]
    %v280 = vld [vmem:[%s275 + $0x20] sm:$0xff]
    %v281 = vld [vmem:[%s275 + $0x28] sm:$0xff]
    %v282 = vld [vmem:[%s275 + $0x30] sm:$0xff]
    %v283 = vld [vmem:[%s275 + $0x38] sm:$0xff]
    %v284 = vadd.f32 %v250, %v276
    %v285 = vadd.f32 %v251, %v277
    %v286 = vadd.f32 %v252, %v278
    %v287 = vadd.f32 %v253, %v279
    %v288 = vadd.f32 %v254, %v280
    %v289 = vadd.f32 %v255, %v281
    %v290 = vadd.f32 %v256, %v282
    %v291 = vadd.f32 %v257, %v283
    %v292 = vmul.f32 %v276, %v276
    %v293 = vmul.f32 %v277, %v277
    %v294 = vmul.f32 %v278, %v278
    %v295 = vmul.f32 %v279, %v279
    %v296 = vmul.f32 %v280, %v280
    %v297 = vmul.f32 %v281, %v281
    %v298 = vmul.f32 %v282, %v282
    %v299 = vmul.f32 %v283, %v283
    %v300 = vadd.f32 %v266, %v292
    %v301 = vadd.f32 %v267, %v293
    %v302 = vadd.f32 %v268, %v294
    %v303 = vadd.f32 %v269, %v295
    %v304 = vadd.f32 %v270, %v296
    %v305 = vadd.f32 %v271, %v297
    %v306 = vadd.f32 %v272, %v298
    %v307 = vadd.f32 %v273, %v299
    %s308 = sadd.s32 0, 448
    %s309 = scalar_lea.vmem [#allocation8], %s308
    %v310 = vld [vmem:[%s309] sm:$0xff]
    %v311 = vld [vmem:[%s309 + $0x8] sm:$0xff]
    %v312 = vld [vmem:[%s309 + $0x10] sm:$0xff]
    %v313 = vld [vmem:[%s309 + $0x18] sm:$0xff]
    %v314 = vld [vmem:[%s309 + $0x20] sm:$0xff]
    %v315 = vld [vmem:[%s309 + $0x28] sm:$0xff]
    %v316 = vld [vmem:[%s309 + $0x30] sm:$0xff]
    %v317 = vld [vmem:[%s309 + $0x38] sm:$0xff]
    %v318 = vadd.f32 %v284, %v310
    %v319 = vadd.f32 %v285, %v311
    %v320 = vadd.f32 %v286, %v312
    %v321 = vadd.f32 %v287, %v313
    %v322 = vadd.f32 %v288, %v314
    %v323 = vadd.f32 %v289, %v315
    %v324 = vadd.f32 %v290, %v316
    %v325 = vadd.f32 %v291, %v317
    %v326 = vmul.f32 %v310, %v310
    %v327 = vmul.f32 %v311, %v311
    %v328 = vmul.f32 %v312, %v312
    %v329 = vmul.f32 %v313, %v313
    %v330 = vmul.f32 %v314, %v314
    %v331 = vmul.f32 %v315, %v315
    %v332 = vmul.f32 %v316, %v316
    %v333 = vmul.f32 %v317, %v317
    %v334 = vadd.f32 %v300, %v326
    %v335 = vadd.f32 %v301, %v327
    %v336 = vadd.f32 %v302, %v328
    %v337 = vadd.f32 %v303, %v329
    %v338 = vadd.f32 %v304, %v330
    %v339 = vadd.f32 %v305, %v331
    %v340 = vadd.f32 %v306, %v332
    %v341 = vadd.f32 %v307, %v333
    %s342 = sadd.s32 0, 512
    %s343 = scalar_lea.vmem [#allocation8], %s342
    %v344 = vld [vmem:[%s343] sm:$0xff]
    %v345 = vld [vmem:[%s343 + $0x8] sm:$0xff]
    %v346 = vld [vmem:[%s343 + $0x10] sm:$0xff]
    %v347 = vld [vmem:[%s343 + $0x18] sm:$0xff]
    %v348 = vld [vmem:[%s343 + $0x20] sm:$0xff]
    %v349 = vld [vmem:[%s343 + $0x28] sm:$0xff]
    %v350 = vld [vmem:[%s343 + $0x30] sm:$0xff]
    %v351 = vld [vmem:[%s343 + $0x38] sm:$0xff]
    %v352 = vadd.f32 %v318, %v344
    %v353 = vadd.f32 %v319, %v345
    %v354 = vadd.f32 %v320, %v346
    %v355 = vadd.f32 %v321, %v347
    %v356 = vadd.f32 %v322, %v348
    %v357 = vadd.f32 %v323, %v349
    %v358 = vadd.f32 %v324, %v350
    %v359 = vadd.f32 %v325, %v351
    %v360 = vmul.f32 %v344, %v344
    %v361 = vmul.f32 %v345, %v345
    %v362 = vmul.f32 %v346, %v346
    %v363 = vmul.f32 %v347, %v347
    %v364 = vmul.f32 %v348, %v348
    %v365 = vmul.f32 %v349, %v349
    %v366 = vmul.f32 %v350, %v350
    %v367 = vmul.f32 %v351, %v351
    %v368 = vadd.f32 %v334, %v360
    %v369 = vadd.f32 %v335, %v361
    %v370 = vadd.f32 %v336, %v362
    %v371 = vadd.f32 %v337, %v363
    %v372 = vadd.f32 %v338, %v364
    %v373 = vadd.f32 %v339, %v365
    %v374 = vadd.f32 %v340, %v366
    %v375 = vadd.f32 %v341, %v367
    %s376 = sadd.s32 0, 576
    %s377 = scalar_lea.vmem [#allocation8], %s376
    %v378 = vld [vmem:[%s377] sm:$0xff]
    %v379 = vld [vmem:[%s377 + $0x8] sm:$0xff]
    %v380 = vld [vmem:[%s377 + $0x10] sm:$0xff]
    %v381 = vld [vmem:[%s377 + $0x18] sm:$0xff]
    %v382 = vld [vmem:[%s377 + $0x20] sm:$0xff]
    %v383 = vld [vmem:[%s377 + $0x28] sm:$0xff]
    %v384 = vld [vmem:[%s377 + $0x30] sm:$0xff]
    %v385 = vld [vmem:[%s377 + $0x38] sm:$0xff]
    %v386 = vadd.f32 %v352, %v378
    %v387 = vadd.f32 %v353, %v379
    %v388 = vadd.f32 %v354, %v380
    %v389 = vadd.f32 %v355, %v381
    %v390 = vadd.f32 %v356, %v382
    %v391 = vadd.f32 %v357, %v383
    %v392 = vadd.f32 %v358, %v384
    %v393 = vadd.f32 %v359, %v385
    %v394 = vmul.f32 %v378, %v378
    %v395 = vmul.f32 %v379, %v379
    %v396 = vmul.f32 %v380, %v380
    %v397 = vmul.f32 %v381, %v381
    %v398 = vmul.f32 %v382, %v382
    %v399 = vmul.f32 %v383, %v383
    %v400 = vmul.f32 %v384, %v384
    %v401 = vmul.f32 %v385, %v385
    %v402 = vadd.f32 %v368, %v394
    %v403 = vadd.f32 %v369, %v395
    %v404 = vadd.f32 %v370, %v396
    %v405 = vadd.f32 %v371, %v397
    %v406 = vadd.f32 %v372, %v398
    %v407 = vadd.f32 %v373, %v399
    %v408 = vadd.f32 %v374, %v400
    %v409 = vadd.f32 %v375, %v401
    %s410 = sadd.s32 0, 640
    %s411 = scalar_lea.vmem [#allocation8], %s410
    %v412 = vld [vmem:[%s411] sm:$0xff]
    %v413 = vld [vmem:[%s411 + $0x8] sm:$0xff]
    %v414 = vld [vmem:[%s411 + $0x10] sm:$0xff]
    %v415 = vld [vmem:[%s411 + $0x18] sm:$0xff]
    %v416 = vld [vmem:[%s411 + $0x20] sm:$0xff]
    %v417 = vld [vmem:[%s411 + $0x28] sm:$0xff]
    %v418 = vld [vmem:[%s411 + $0x30] sm:$0xff]
    %v419 = vld [vmem:[%s411 + $0x38] sm:$0xff]
    %v420 = vadd.f32 %v386, %v412
    %v421 = vadd.f32 %v387, %v413
    %v422 = vadd.f32 %v388, %v414
    %v423 = vadd.f32 %v389, %v415
    %v424 = vadd.f32 %v390, %v416
    %v425 = vadd.f32 %v391, %v417
    %v426 = vadd.f32 %v392, %v418
    %v427 = vadd.f32 %v393, %v419
    %v428 = vmul.f32 %v412, %v412
    %v429 = vmul.f32 %v413, %v413
    %v430 = vmul.f32 %v414, %v414
    %v431 = vmul.f32 %v415, %v415
    %v432 = vmul.f32 %v416, %v416
    %v433 = vmul.f32 %v417, %v417
    %v434 = vmul.f32 %v418, %v418
    %v435 = vmul.f32 %v419, %v419
    %v436 = vadd.f32 %v402, %v428
    %v437 = vadd.f32 %v403, %v429
    %v438 = vadd.f32 %v404, %v430
    %v439 = vadd.f32 %v405, %v431
    %v440 = vadd.f32 %v406, %v432
    %v441 = vadd.f32 %v407, %v433
    %v442 = vadd.f32 %v408, %v434
    %v443 = vadd.f32 %v409, %v435
    %s444 = sadd.s32 0, 704
    %s445 = scalar_lea.vmem [#allocation8], %s444
    %v446 = vld [vmem:[%s445] sm:$0xff]
    %v447 = vld [vmem:[%s445 + $0x8] sm:$0xff]
    %v448 = vld [vmem:[%s445 + $0x10] sm:$0xff]
    %v449 = vld [vmem:[%s445 + $0x18] sm:$0xff]
    %v450 = vld [vmem:[%s445 + $0x20] sm:$0xff]
    %v451 = vld [vmem:[%s445 + $0x28] sm:$0xff]
    %v452 = vld [vmem:[%s445 + $0x30] sm:$0xff]
    %v453 = vld [vmem:[%s445 + $0x38] sm:$0xff]
    %v454 = vadd.f32 %v420, %v446
    %v455 = vadd.f32 %v421, %v447
    %v456 = vadd.f32 %v422, %v448
    %v457 = vadd.f32 %v423, %v449
    %v458 = vadd.f32 %v424, %v450
    %v459 = vadd.f32 %v425, %v451
    %v460 = vadd.f32 %v426, %v452
    %v461 = vadd.f32 %v427, %v453
    %v462 = vmul.f32 %v446, %v446
    %v463 = vmul.f32 %v447, %v447
    %v464 = vmul.f32 %v448, %v448
    %v465 = vmul.f32 %v449, %v449
    %v466 = vmul.f32 %v450, %v450
    %v467 = vmul.f32 %v451, %v451
    %v468 = vmul.f32 %v452, %v452
    %v469 = vmul.f32 %v453, %v453
    %v470 = vadd.f32 %v436, %v462
    %v471 = vadd.f32 %v437, %v463
    %v472 = vadd.f32 %v438, %v464
    %v473 = vadd.f32 %v439, %v465
    %v474 = vadd.f32 %v440, %v466
    %v475 = vadd.f32 %v441, %v467
    %v476 = vadd.f32 %v442, %v468
    %v477 = vadd.f32 %v443, %v469
    %s478 = sadd.s32 0, 768
    %s479 = scalar_lea.vmem [#allocation8], %s478
    %v480 = vld [vmem:[%s479] sm:$0xff]
    %v481 = vld [vmem:[%s479 + $0x8] sm:$0xff]
    %v482 = vld [vmem:[%s479 + $0x10] sm:$0xff]
    %v483 = vld [vmem:[%s479 + $0x18] sm:$0xff]
    %v484 = vld [vmem:[%s479 + $0x20] sm:$0xff]
    %v485 = vld [vmem:[%s479 + $0x28] sm:$0xff]
    %v486 = vld [vmem:[%s479 + $0x30] sm:$0xff]
    %v487 = vld [vmem:[%s479 + $0x38] sm:$0xff]
    %v488 = vadd.f32 %v454, %v480
    %v489 = vadd.f32 %v455, %v481
    %v490 = vadd.f32 %v456, %v482
    %v491 = vadd.f32 %v457, %v483
    %v492 = vadd.f32 %v458, %v484
    %v493 = vadd.f32 %v459, %v485
    %v494 = vadd.f32 %v460, %v486
    %v495 = vadd.f32 %v461, %v487
    %v496 = vmul.f32 %v480, %v480
    %v497 = vmul.f32 %v481, %v481
    %v498 = vmul.f32 %v482, %v482
    %v499 = vmul.f32 %v483, %v483
    %v500 = vmul.f32 %v484, %v484
    %v501 = vmul.f32 %v485, %v485
    %v502 = vmul.f32 %v486, %v486
    %v503 = vmul.f32 %v487, %v487
    %v504 = vadd.f32 %v470, %v496
    %v505 = vadd.f32 %v471, %v497
    %v506 = vadd.f32 %v472, %v498
    %v507 = vadd.f32 %v473, %v499
    %v508 = vadd.f32 %v474, %v500
    %v509 = vadd.f32 %v475, %v501
    %v510 = vadd.f32 %v476, %v502
    %v511 = vadd.f32 %v477, %v503
    %s512 = sadd.s32 0, 832
    %s513 = scalar_lea.vmem [#allocation8], %s512
    %v514 = vld [vmem:[%s513] sm:$0xff]
    %v515 = vld [vmem:[%s513 + $0x8] sm:$0xff]
    %v516 = vld [vmem:[%s513 + $0x10] sm:$0xff]
    %v517 = vld [vmem:[%s513 + $0x18] sm:$0xff]
    %v518 = vld [vmem:[%s513 + $0x20] sm:$0xff]
    %v519 = vld [vmem:[%s513 + $0x28] sm:$0xff]
    %v520 = vld [vmem:[%s513 + $0x30] sm:$0xff]
    %v521 = vld [vmem:[%s513 + $0x38] sm:$0xff]
    %v522 = vadd.f32 %v488, %v514
    %v523 = vadd.f32 %v489, %v515
    %v524 = vadd.f32 %v490, %v516
    %v525 = vadd.f32 %v491, %v517
    %v526 = vadd.f32 %v492, %v518
    %v527 = vadd.f32 %v493, %v519
    %v528 = vadd.f32 %v494, %v520
    %v529 = vadd.f32 %v495, %v521
    %v530 = vmul.f32 %v514, %v514
    %v531 = vmul.f32 %v515, %v515
    %v532 = vmul.f32 %v516, %v516
    %v533 = vmul.f32 %v517, %v517
    %v534 = vmul.f32 %v518, %v518
    %v535 = vmul.f32 %v519, %v519
    %v536 = vmul.f32 %v520, %v520
    %v537 = vmul.f32 %v521, %v521
    %v538 = vadd.f32 %v504, %v530
    %v539 = vadd.f32 %v505, %v531
    %v540 = vadd.f32 %v506, %v532
    %v541 = vadd.f32 %v507, %v533
    %v542 = vadd.f32 %v508, %v534
    %v543 = vadd.f32 %v509, %v535
    %v544 = vadd.f32 %v510, %v536
    %v545 = vadd.f32 %v511, %v537
    %s546 = sadd.s32 0, 896
    %s547 = scalar_lea.vmem [#allocation8], %s546
    %v548 = vld [vmem:[%s547] sm:$0xff]
    %v549 = vld [vmem:[%s547 + $0x8] sm:$0xff]
    %v550 = vld [vmem:[%s547 + $0x10] sm:$0xff]
    %v551 = vld [vmem:[%s547 + $0x18] sm:$0xff]
    %v552 = vld [vmem:[%s547 + $0x20] sm:$0xff]
    %v553 = vld [vmem:[%s547 + $0x28] sm:$0xff]
    %v554 = vld [vmem:[%s547 + $0x30] sm:$0xff]
    %v555 = vld [vmem:[%s547 + $0x38] sm:$0xff]
    %v556 = vadd.f32 %v522, %v548
    %v557 = vadd.f32 %v523, %v549
    %v558 = vadd.f32 %v524, %v550
    %v559 = vadd.f32 %v525, %v551
    %v560 = vadd.f32 %v526, %v552
    %v561 = vadd.f32 %v527, %v553
    %v562 = vadd.f32 %v528, %v554
    %v563 = vadd.f32 %v529, %v555
    %v564 = vmul.f32 %v548, %v548
    %v565 = vmul.f32 %v549, %v549
    %v566 = vmul.f32 %v550, %v550
    %v567 = vmul.f32 %v551, %v551
    %v568 = vmul.f32 %v552, %v552
    %v569 = vmul.f32 %v553, %v553
    %v570 = vmul.f32 %v554, %v554
    %v571 = vmul.f32 %v555, %v555
    %v572 = vadd.f32 %v538, %v564
    %v573 = vadd.f32 %v539, %v565
    %v574 = vadd.f32 %v540, %v566
    %v575 = vadd.f32 %v541, %v567
    %v576 = vadd.f32 %v542, %v568
    %v577 = vadd.f32 %v543, %v569
    %v578 = vadd.f32 %v544, %v570
    %v579 = vadd.f32 %v545, %v571
    %s580 = sadd.s32 0, 960
    %s581 = scalar_lea.vmem [#allocation8], %s580
    %v582 = vld [vmem:[%s581] sm:$0xff]
    %v583 = vld [vmem:[%s581 + $0x8] sm:$0xff]
    %v584 = vld [vmem:[%s581 + $0x10] sm:$0xff]
    %v585 = vld [vmem:[%s581 + $0x18] sm:$0xff]
    %v586 = vld [vmem:[%s581 + $0x20] sm:$0xff]
    %v587 = vld [vmem:[%s581 + $0x28] sm:$0xff]
    %v588 = vld [vmem:[%s581 + $0x30] sm:$0xff]
    %v589 = vld [vmem:[%s581 + $0x38] sm:$0xff]
    %v590 = vadd.f32 %v556, %v582
    %v591 = vadd.f32 %v557, %v583
    %v592 = vadd.f32 %v558, %v584
    %v593 = vadd.f32 %v559, %v585
    %v594 = vadd.f32 %v560, %v586
    %v595 = vadd.f32 %v561, %v587
    %v596 = vadd.f32 %v562, %v588
    %v597 = vadd.f32 %v563, %v589
    %v598 = vmul.f32 %v582, %v582
    %v599 = vmul.f32 %v583, %v583
    %v600 = vmul.f32 %v584, %v584
    %v601 = vmul.f32 %v585, %v585
    %v602 = vmul.f32 %v586, %v586
    %v603 = vmul.f32 %v587, %v587
    %v604 = vmul.f32 %v588, %v588
    %v605 = vmul.f32 %v589, %v589
    %v606 = vadd.f32 %v572, %v598
    %v607 = vadd.f32 %v573, %v599
    %v608 = vadd.f32 %v574, %v600
    %v609 = vadd.f32 %v575, %v601
    %v610 = vadd.f32 %v576, %v602
    %v611 = vadd.f32 %v577, %v603
    %v612 = vadd.f32 %v578, %v604
    %v613 = vadd.f32 %v579, %v605
    %v614 = vmul.f32 %v590, 0.0625
    %v615 = vmul.f32 %v591, 0.0625
    %v616 = vmul.f32 %v592, 0.0625
    %v617 = vmul.f32 %v593, 0.0625
    %v618 = vmul.f32 %v594, 0.0625
    %v619 = vmul.f32 %v595, 0.0625
    %v620 = vmul.f32 %v596, 0.0625
    %v621 = vmul.f32 %v597, 0.0625
    %v622 = vmul.f32 %v606, 0.0625
    %v623 = vmul.f32 %v607, 0.0625
    %v624 = vmul.f32 %v608, 0.0625
    %v625 = vmul.f32 %v609, 0.0625
    %v626 = vmul.f32 %v610, 0.0625
    %v627 = vmul.f32 %v611, 0.0625
    %v628 = vmul.f32 %v612, 0.0625
    %v629 = vmul.f32 %v613, 0.0625
    %v630 = vmul.f32 %v614, %v614
    %v631 = vmul.f32 %v615, %v615
    %v632 = vmul.f32 %v616, %v616
    %v633 = vmul.f32 %v617, %v617
    %v634 = vmul.f32 %v618, %v618
    %v635 = vmul.f32 %v619, %v619
    %v636 = vmul.f32 %v620, %v620
    %v637 = vmul.f32 %v621, %v621
    %v638 = vsub.f32 %v622, %v630
    %v639 = vsub.f32 %v623, %v631
    %v640 = vsub.f32 %v624, %v632
    %v641 = vsub.f32 %v625, %v633
    %v642 = vsub.f32 %v626, %v634
    %v643 = vsub.f32 %v627, %v635
    %v644 = vsub.f32 %v628, %v636
    %v645 = vsub.f32 %v629, %v637
    %v646 = vadd.f32 %v638, 1e-05
    %v647 = vadd.f32 %v639, 1e-05
    %v648 = vadd.f32 %v640, 1e-05
    %v649 = vadd.f32 %v641, 1e-05
    %v650 = vadd.f32 %v642, 1e-05
    %v651 = vadd.f32 %v643, 1e-05
    %v652 = vadd.f32 %v644, 1e-05
    %v653 = vadd.f32 %v645, 1e-05
    %v654 = vrsqrt.pop %v646
    %v655 = vmul.f32 %v654, %v646
    %v656 = vmul.f32 %v655, %v654
    %v657 = vmul.f32 0.5, %v656
    %v658 = vsub.f32 1.5, %v657
    %v659 = vmul.f32 %v654, %v658
    %vm660 = vweird.f32 %v646
    %vm661 = vweird.f32 %v654
    %vm662 = vmor %vm660, %vm661
    %v663 = vsel %vm662, %v654, %v659
    %v664 = vrsqrt.pop %v647
    %v665 = vmul.f32 %v664, %v647
    %v666 = vmul.f32 %v665, %v664
    %v667 = vmul.f32 0.5, %v666
    %v668 = vsub.f32 1.5, %v667
    %v669 = vmul.f32 %v664, %v668
    %vm670 = vweird.f32 %v647
    %vm671 = vweird.f32 %v664
    %vm672 = vmor %vm670, %vm671
    %v673 = vsel %vm672, %v664, %v669
    %v674 = vrsqrt.pop %v648
    %v675 = vmul.f32 %v674, %v648
    %v676 = vmul.f32 %v675, %v674
    %v677 = vmul.f32 0.5, %v676
    %v678 = vsub.f32 1.5, %v677
    %v679 = vmul.f32 %v674, %v678
    %vm680 = vweird.f32 %v648
    %vm681 = vweird.f32 %v674
    %vm682 = vmor %vm680, %vm681
    %v683 = vsel %vm682, %v674, %v679
    %v684 = vrsqrt.pop %v649
    %v685 = vmul.f32 %v684, %v649
    %v686 = vmul.f32 %v685, %v684
    %v687 = vmul.f32 0.5, %v686
    %v688 = vsub.f32 1.5, %v687
    %v689 = vmul.f32 %v684, %v688
    %vm690 = vweird.f32 %v649
    %vm691 = vweird.f32 %v684
    %vm692 = vmor %vm690, %vm691
    %v693 = vsel %vm692, %v684, %v689
    %v694 = vrsqrt.pop %v650
    %v695 = vmul.f32 %v694, %v650
    %v696 = vmul.f32 %v695, %v694
    %v697 = vmul.f32 0.5, %v696
    %v698 = vsub.f32 1.5, %v697
    %v699 = vmul.f32 %v694, %v698
    %vm700 = vweird.f32 %v650
    %vm701 = vweird.f32 %v694
    %vm702 = vmor %vm700, %vm701
    %v703 = vsel %vm702, %v694, %v699
    %v704 = vrsqrt.pop %v651
    %v705 = vmul.f32 %v704, %v651
    %v706 = vmul.f32 %v705, %v704
    %v707 = vmul.f32 0.5, %v706
    %v708 = vsub.f32 1.5, %v707
    %v709 = vmul.f32 %v704, %v708
    %vm710 = vweird.f32 %v651
    %vm711 = vweird.f32 %v704
    %vm712 = vmor %vm710, %vm711
    %v713 = vsel %vm712, %v704, %v709
    %v714 = vrsqrt.pop %v652
    %v715 = vmul.f32 %v714, %v652
    %v716 = vmul.f32 %v715, %v714
    %v717 = vmul.f32 0.5, %v716
    %v718 = vsub.f32 1.5, %v717
    %v719 = vmul.f32 %v714, %v718
    %vm720 = vweird.f32 %v652
    %vm721 = vweird.f32 %v714
    %vm722 = vmor %vm720, %vm721
    %v723 = vsel %vm722, %v714, %v719
    %v724 = vrsqrt.pop %v653
    %v725 = vmul.f32 %v724, %v653
    %v726 = vmul.f32 %v725, %v724
    %v727 = vmul.f32 0.5, %v726
    %v728 = vsub.f32 1.5, %v727
    %v729 = vmul.f32 %v724, %v728
    %vm730 = vweird.f32 %v653
    %vm731 = vweird.f32 %v724
    %vm732 = vmor %vm730, %vm731
    %v733 = vsel %vm732, %v724, %v729
    %v734 = vsub.f32 %v72, %v614
    %v735 = vsub.f32 %v73, %v615
    %v736 = vsub.f32 %v74, %v616
    %v737 = vsub.f32 %v75, %v617
    %v738 = vsub.f32 %v76, %v618
    %v739 = vsub.f32 %v77, %v619
    %v740 = vsub.f32 %v78, %v620
    %v741 = vsub.f32 %v79, %v621
    %v742 = vmul.f32 %v734, %v663
    %v743 = vmul.f32 %v735, %v673
    %v744 = vmul.f32 %v736, %v683
    %v745 = vmul.f32 %v737, %v693
    %v746 = vmul.f32 %v738, %v703
    %v747 = vmul.f32 %v739, %v713
    %v748 = vmul.f32 %v740, %v723
    %v749 = vmul.f32 %v741, %v733
    %s750 = sld [smem:[#allocation2]]
    %v751 = vstv %s750
    %v752 = vmul.f32 %v742, %v751
    %v753 = vmul.f32 %v743, %v751
    %v754 = vmul.f32 %v744, %v751
    %v755 = vmul.f32 %v745, %v751
    %v756 = vmul.f32 %v746, %v751
    %v757 = vmul.f32 %v747, %v751
    %v758 = vmul.f32 %v748, %v751
    %v759 = vmul.f32 %v749, %v751
    %s760 = sld [smem:[#allocation6]]
    %v761 = vstv %s760
    %v762 = vadd.f32 %v752, %v761
    %v763 = vadd.f32 %v753, %v761
    %v764 = vadd.f32 %v754, %v761
    %v765 = vadd.f32 %v755, %v761
    %v766 = vadd.f32 %v756, %v761
    %v767 = vadd.f32 %v757, %v761
    %v768 = vadd.f32 %v758, %v761
    %v769 = vadd.f32 %v759, %v761
    %vm770 = vcmask 523264
    %v772 = vsel %vm770, %v59, 0
    %v775 = vsel %vm770, %v60, 0
    %v778 = vsel %vm770, %v61, 0
    %v781 = vsel %vm770, %v62, 0
    %v784 = vsel %vm770, %v63, 0
    %v787 = vsel %vm770, %v64, 0
    %v790 = vsel %vm770, %v65, 0
    %v793 = vsel %vm770, %v66, 0
    %v796 = vsel %vm770, %v67, 0
    %v799 = vsel %vm770, %v68, 0
    %v802 = vsel %vm770, %v69, 0
    %v805 = vsel %vm770, %v70, 0
    %v808 = vsel %vm770, %v71, 0
    %810 = vmatpush.msra.mxu0 0.0
    %811 = vmatpush.msra.mxu0 0.0
    %812 = vmatpush.msra.mxu0 0.0
    %813 = vmatpush.msra.mxu0 0.0
    %814 = vmatpush.msra.mxu0 0.0
    %815 = vmatpush.msra.mxu0 0.0
    %816 = vmatpush.msra.mxu0 0.0
    %817 = vmatpush.msra.mxu0 0.0
    %818 = vmatpush.msra.mxu0 %v769
    %819 = vmatpush.msra.mxu0 %v768
    %820 = vmatpush.msra.mxu0 %v767
    %821 = vmatpush.msra.mxu0 %v766
    %822 = vmatpush.msra.mxu0 %v765
    %823 = vmatpush.msra.mxu0 %v764
    %824 = vmatpush.msra.mxu0 %v763
    %825 = vmatpush.msra.mxu0 %v762
    %826 = vmatmul.f32.gmra.mxu0 %v772
    %v827 = vpop.f32.mrf.mxu0
    %v828 = vadd.f32 0.0, %v827
    %829 = vmatmul.f32.gmra.mxu0 %v775
    %v830 = vpop.f32.mrf.mxu0
    %v831 = vadd.f32 0.0, %v830
    %832 = vmatmul.f32.gmra.mxu0 %v778
    %v833 = vpop.f32.mrf.mxu0
    %v834 = vadd.f32 0.0, %v833
    %835 = vmatmul.f32.gmra.mxu0 %v781
    %v836 = vpop.f32.mrf.mxu0
    %v837 = vadd.f32 0.0, %v836
    %838 = vmatmul.f32.gmra.mxu0 %v784
    %v839 = vpop.f32.mrf.mxu0
    %v840 = vadd.f32 0.0, %v839
    %841 = vmatmul.f32.gmra.mxu0 %v787
    %v842 = vpop.f32.mrf.mxu0
    %v843 = vadd.f32 0.0, %v842
    %844 = vmatmul.f32.gmra.mxu0 %v790
    %v845 = vpop.f32.mrf.mxu0
    %v846 = vadd.f32 0.0, %v845
    %847 = vmatmul.f32.gmra.mxu0 %v793
    %v848 = vpop.f32.mrf.mxu0
    %v849 = vadd.f32 0.0, %v848
    %850 = vmatmul.f32.gmra.mxu0 %v796
    %v851 = vpop.f32.mrf.mxu0
    %v852 = vadd.f32 0.0, %v851
    %853 = vmatmul.f32.gmra.mxu0 %v799
    %v854 = vpop.f32.mrf.mxu0
    %v855 = vadd.f32 0.0, %v854
    %856 = vmatmul.f32.gmra.mxu0 %v802
    %v857 = vpop.f32.mrf.mxu0
    %v858 = vadd.f32 0.0, %v857
    %859 = vmatmul.f32.gmra.mxu0 %v805
    %v860 = vpop.f32.mrf.mxu0
    %v861 = vadd.f32 0.0, %v860
    %862 = vmatmul.f32.gmra.mxu0 %v808
    %v863 = vpop.f32.mrf.mxu0
    %v864 = vadd.f32 0.0, %v863
    %865 = vdwg.mxu0
    %866 = vst [vmem:[#allocation9] sm:$0xff] %v828
    %867 = vst [vmem:[#allocation9 + $0x8] sm:$0xff] %v831
    %868 = vst [vmem:[#allocation9 + $0x10] sm:$0xff] %v834
    %869 = vst [vmem:[#allocation9 + $0x18] sm:$0xff] %v837
    %870 = vst [vmem:[#allocation9 + $0x20] sm:$0xff] %v840
    %871 = vst [vmem:[#allocation9 + $0x28] sm:$0xff] %v843
    %872 = vst [vmem:[#allocation9 + $0x30] sm:$0xff] %v846
    %873 = vst [vmem:[#allocation9 + $0x38] sm:$0xff] %v849
    %874 = vst [vmem:[#allocation9 + $0x40] sm:$0xff] %v852
    %875 = vst [vmem:[#allocation9 + $0x48] sm:$0xff] %v855
    %876 = vst [vmem:[#allocation9 + $0x50] sm:$0xff] %v858
    %877 = vst [vmem:[#allocation9 + $0x58] sm:$0xff] %v861
    %878 = vst [vmem:[#allocation9 + $0x60] sm:$0xf] %v864
    %s879 = sadd.s32 0, 104
    %s880 = scalar_lea.vmem [#allocation9], %s879
    %881 = vst [vmem:[%s880] sm:$0xff] %v828
    %882 = vst [vmem:[%s880 + $0x8] sm:$0xff] %v831
    %883 = vst [vmem:[%s880 + $0x10] sm:$0xff] %v834
    %884 = vst [vmem:[%s880 + $0x18] sm:$0xff] %v837
    %885 = vst [vmem:[%s880 + $0x20] sm:$0xff] %v840
    %886 = vst [vmem:[%s880 + $0x28] sm:$0xff] %v843
    %887 = vst [vmem:[%s880 + $0x30] sm:$0xff] %v846
    %888 = vst [vmem:[%s880 + $0x38] sm:$0xff] %v849
    %889 = vst [vmem:[%s880 + $0x40] sm:$0xff] %v852
    %890 = vst [vmem:[%s880 + $0x48] sm:$0xff] %v855
    %891 = vst [vmem:[%s880 + $0x50] sm:$0xff] %v858
    %892 = vst [vmem:[%s880 + $0x58] sm:$0xff] %v861
    %893 = vst [vmem:[%s880 + $0x60] sm:$0xf] %v864
    %v894 = vld [vmem:[%s105] sm:$0xff]
    %v895 = vld [vmem:[%s105 + $0x8] sm:$0xff]
    %v896 = vld [vmem:[%s105 + $0x10] sm:$0xff]
    %v897 = vld [vmem:[%s105 + $0x18] sm:$0xff]
    %v898 = vld [vmem:[%s105 + $0x20] sm:$0xff]
    %v899 = vld [vmem:[%s105 + $0x28] sm:$0xff]
    %v900 = vld [vmem:[%s105 + $0x30] sm:$0xff]
    %v901 = vld [vmem:[%s105 + $0x38] sm:$0xff]
    %v902 = vsub.f32 %v894, %v614
    %v903 = vsub.f32 %v895, %v615
    %v904 = vsub.f32 %v896, %v616
    %v905 = vsub.f32 %v897, %v617
    %v906 = vsub.f32 %v898, %v618
    %v907 = vsub.f32 %v899, %v619
    %v908 = vsub.f32 %v900, %v620
    %v909 = vsub.f32 %v901, %v621
    %v910 = vmul.f32 %v902, %v663
    %v911 = vmul.f32 %v903, %v673
    %v912 = vmul.f32 %v904, %v683
    %v913 = vmul.f32 %v905, %v693
    %v914 = vmul.f32 %v906, %v703
    %v915 = vmul.f32 %v907, %v713
    %v916 = vmul.f32 %v908, %v723
    %v917 = vmul.f32 %v909, %v733
    %s918 = sld [smem:[#allocation2 + $0x1]]
    %v919 = vstv %s918
    %v920 = vmul.f32 %v910, %v919
    %v921 = vmul.f32 %v911, %v919
    %v922 = vmul.f32 %v912, %v919
    %v923 = vmul.f32 %v913, %v919
    %v924 = vmul.f32 %v914, %v919
    %v925 = vmul.f32 %v915, %v919
    %v926 = vmul.f32 %v916, %v919
    %v927 = vmul.f32 %v917, %v919
    %s928 = sld [smem:[#allocation6 + $0x1]]
    %v929 = vstv %s928
    %v930 = vadd.f32 %v920, %v929
    %v931 = vadd.f32 %v921, %v929
    %v932 = vadd.f32 %v922, %v929
    %v933 = vadd.f32 %v923, %v929
    %v934 = vadd.f32 %v924, %v929
    %v935 = vadd.f32 %v925, %v929
    %v936 = vadd.f32 %v926, %v929
    %v937 = vadd.f32 %v927, %v929
    %938 = vmatpush.msra.mxu0 0.0
    %939 = vmatpush.msra.mxu0 0.0
    %940 = vmatpush.msra.mxu0 0.0
    %941 = vmatpush.msra.mxu0 0.0
    %942 = vmatpush.msra.mxu0 0.0
    %943 = vmatpush.msra.mxu0 0.0
    %944 = vmatpush.msra.mxu0 0.0
    %945 = vmatpush.msra.mxu0 0.0
    %946 = vmatpush.msra.mxu0 %v937
    %947 = vmatpush.msra.mxu0 %v936
    %948 = vmatpush.msra.mxu0 %v935
    %949 = vmatpush.msra.mxu0 %v934
    %950 = vmatpush.msra.mxu0 %v933
    %951 = vmatpush.msra.mxu0 %v932
    %952 = vmatpush.msra.mxu0 %v931
    %953 = vmatpush.msra.mxu0 %v930
    %954 = vmatmul.f32.gmra.mxu0 %v772
    %v955 = vpop.f32.mrf.mxu0
    %v956 = vadd.f32 0.0, %v955
    %957 = vmatmul.f32.gmra.mxu0 %v775
    %v958 = vpop.f32.mrf.mxu0
    %v959 = vadd.f32 0.0, %v958
    %960 = vmatmul.f32.gmra.mxu0 %v778
    %v961 = vpop.f32.mrf.mxu0
    %v962 = vadd.f32 0.0, %v961
    %963 = vmatmul.f32.gmra.mxu0 %v781
    %v964 = vpop.f32.mrf.mxu0
    %v965 = vadd.f32 0.0, %v964
    %966 = vmatmul.f32.gmra.mxu0 %v784
    %v967 = vpop.f32.mrf.mxu0
    %v968 = vadd.f32 0.0, %v967
    %969 = vmatmul.f32.gmra.mxu0 %v787
    %v970 = vpop.f32.mrf.mxu0
    %v971 = vadd.f32 0.0, %v970
    %972 = vmatmul.f32.gmra.mxu0 %v790
    %v973 = vpop.f32.mrf.mxu0
    %v974 = vadd.f32 0.0, %v973
    %975 = vmatmul.f32.gmra.mxu0 %v793
    %v976 = vpop.f32.mrf.mxu0
    %v977 = vadd.f32 0.0, %v976
    %978 = vmatmul.f32.gmra.mxu0 %v796
    %v979 = vpop.f32.mrf.mxu0
    %v980 = vadd.f32 0.0, %v979
    %981 = vmatmul.f32.gmra.mxu0 %v799
    %v982 = vpop.f32.mrf.mxu0
    %v983 = vadd.f32 0.0, %v982
    %984 = vmatmul.f32.gmra.mxu0 %v802
    %v985 = vpop.f32.mrf.mxu0
    %v986 = vadd.f32 0.0, %v985
    %987 = vmatmul.f32.gmra.mxu0 %v805
    %v988 = vpop.f32.mrf.mxu0
    %v989 = vadd.f32 0.0, %v988
    %990 = vmatmul.f32.gmra.mxu0 %v808
    %v991 = vpop.f32.mrf.mxu0
    %v992 = vadd.f32 0.0, %v991
    %993 = vdwg.mxu0
    %s994 = sadd.s32 0, 208
    %s995 = scalar_lea.vmem [#allocation9], %s994
    %996 = vst [vmem:[%s995] sm:$0xff] %v956
    %997 = vst [vmem:[%s995 + $0x8] sm:$0xff] %v959
    %998 = vst [vmem:[%s995 + $0x10] sm:$0xff] %v962
    %999 = vst [vmem:[%s995 + $0x18] sm:$0xff] %v965
    %1000 = vst [vmem:[%s995 + $0x20] sm:$0xff] %v968
    %1001 = vst [vmem:[%s995 + $0x28] sm:$0xff] %v971
    %1002 = vst [vmem:[%s995 + $0x30] sm:$0xff] %v974
    %1003 = vst [vmem:[%s995 + $0x38] sm:$0xff] %v977
    %1004 = vst [vmem:[%s995 + $0x40] sm:$0xff] %v980
    %1005 = vst [vmem:[%s995 + $0x48] sm:$0xff] %v983
    %1006 = vst [vmem:[%s995 + $0x50] sm:$0xff] %v986
    %1007 = vst [vmem:[%s995 + $0x58] sm:$0xff] %v989
    %1008 = vst [vmem:[%s995 + $0x60] sm:$0xf] %v992
    %v1009 = vld [vmem:[%s139] sm:$0xff]
    %v1010 = vld [vmem:[%s139 + $0x8] sm:$0xff]
    %v1011 = vld [vmem:[%s139 + $0x10] sm:$0xff]
    %v1012 = vld [vmem:[%s139 + $0x18] sm:$0xff]
    %v1013 = vld [vmem:[%s139 + $0x20] sm:$0xff]
    %v1014 = vld [vmem:[%s139 + $0x28] sm:$0xff]
    %v1015 = vld [vmem:[%s139 + $0x30] sm:$0xff]
    %v1016 = vld [vmem:[%s139 + $0x38] sm:$0xff]
    %v1017 = vsub.f32 %v1009, %v614
    %v1018 = vsub.f32 %v1010, %v615
    %v1019 = vsub.f32 %v1011, %v616
    %v1020 = vsub.f32 %v1012, %v617
    %v1021 = vsub.f32 %v1013, %v618
    %v1022 = vsub.f32 %v1014, %v619
    %v1023 = vsub.f32 %v1015, %v620
    %v1024 = vsub.f32 %v1016, %v621
    %v1025 = vmul.f32 %v1017, %v663
    %v1026 = vmul.f32 %v1018, %v673
    %v1027 = vmul.f32 %v1019, %v683
    %v1028 = vmul.f32 %v1020, %v693
    %v1029 = vmul.f32 %v1021, %v703
    %v1030 = vmul.f32 %v1022, %v713
    %v1031 = vmul.f32 %v1023, %v723
    %v1032 = vmul.f32 %v1024, %v733
    %s1033 = sld [smem:[#allocation2 + $0x2]]
    %v1034 = vstv %s1033
    %v1035 = vmul.f32 %v1025, %v1034
    %v1036 = vmul.f32 %v1026, %v1034
    %v1037 = vmul.f32 %v1027, %v1034
    %v1038 = vmul.f32 %v1028, %v1034
    %v1039 = vmul.f32 %v1029, %v1034
    %v1040 = vmul.f32 %v1030, %v1034
    %v1041 = vmul.f32 %v1031, %v1034
    %v1042 = vmul.f32 %v1032, %v1034
    %s1043 = sld [smem:[#allocation6 + $0x2]]
    %v1044 = vstv %s1043
    %v1045 = vadd.f32 %v1035, %v1044
    %v1046 = vadd.f32 %v1036, %v1044
    %v1047 = vadd.f32 %v1037, %v1044
    %v1048 = vadd.f32 %v1038, %v1044
    %v1049 = vadd.f32 %v1039, %v1044
    %v1050 = vadd.f32 %v1040, %v1044
    %v1051 = vadd.f32 %v1041, %v1044
    %v1052 = vadd.f32 %v1042, %v1044
    %1053 = vmatpush.msra.mxu0 0.0
    %1054 = vmatpush.msra.mxu0 0.0
    %1055 = vmatpush.msra.mxu0 0.0
    %1056 = vmatpush.msra.mxu0 0.0
    %1057 = vmatpush.msra.mxu0 0.0
    %1058 = vmatpush.msra.mxu0 0.0
    %1059 = vmatpush.msra.mxu0 0.0
    %1060 = vmatpush.msra.mxu0 0.0
    %1061 = vmatpush.msra.mxu0 %v1052
    %1062 = vmatpush.msra.mxu0 %v1051
    %1063 = vmatpush.msra.mxu0 %v1050
    %1064 = vmatpush.msra.mxu0 %v1049
    %1065 = vmatpush.msra.mxu0 %v1048
    %1066 = vmatpush.msra.mxu0 %v1047
    %1067 = vmatpush.msra.mxu0 %v1046
    %1068 = vmatpush.msra.mxu0 %v1045
    %1069 = vmatmul.f32.gmra.mxu0 %v772
    %v1070 = vpop.f32.mrf.mxu0
    %v1071 = vadd.f32 0.0, %v1070
    %1072 = vmatmul.f32.gmra.mxu0 %v775
    %v1073 = vpop.f32.mrf.mxu0
    %v1074 = vadd.f32 0.0, %v1073
    %1075 = vmatmul.f32.gmra.mxu0 %v778
    %v1076 = vpop.f32.mrf.mxu0
    %v1077 = vadd.f32 0.0, %v1076
    %1078 = vmatmul.f32.gmra.mxu0 %v781
    %v1079 = vpop.f32.mrf.mxu0
    %v1080 = vadd.f32 0.0, %v1079
    %1081 = vmatmul.f32.gmra.mxu0 %v784
    %v1082 = vpop.f32.mrf.mxu0
    %v1083 = vadd.f32 0.0, %v1082
    %1084 = vmatmul.f32.gmra.mxu0 %v787
    %v1085 = vpop.f32.mrf.mxu0
    %v1086 = vadd.f32 0.0, %v1085
    %1087 = vmatmul.f32.gmra.mxu0 %v790
    %v1088 = vpop.f32.mrf.mxu0
    %v1089 = vadd.f32 0.0, %v1088
    %1090 = vmatmul.f32.gmra.mxu0 %v793
    %v1091 = vpop.f32.mrf.mxu0
    %v1092 = vadd.f32 0.0, %v1091
    %1093 = vmatmul.f32.gmra.mxu0 %v796
    %v1094 = vpop.f32.mrf.mxu0
    %v1095 = vadd.f32 0.0, %v1094
    %1096 = vmatmul.f32.gmra.mxu0 %v799
    %v1097 = vpop.f32.mrf.mxu0
    %v1098 = vadd.f32 0.0, %v1097
    %1099 = vmatmul.f32.gmra.mxu0 %v802
    %v1100 = vpop.f32.mrf.mxu0
    %v1101 = vadd.f32 0.0, %v1100
    %1102 = vmatmul.f32.gmra.mxu0 %v805
    %v1103 = vpop.f32.mrf.mxu0
    %v1104 = vadd.f32 0.0, %v1103
    %1105 = vmatmul.f32.gmra.mxu0 %v808
    %v1106 = vpop.f32.mrf.mxu0
    %v1107 = vadd.f32 0.0, %v1106
    %1108 = vdwg.mxu0
    %s1109 = sadd.s32 0, 312
    %s1110 = scalar_lea.vmem [#allocation9], %s1109
    %1111 = vst [vmem:[%s1110] sm:$0xff] %v1071
    %1112 = vst [vmem:[%s1110 + $0x8] sm:$0xff] %v1074
    %1113 = vst [vmem:[%s1110 + $0x10] sm:$0xff] %v1077
    %1114 = vst [vmem:[%s1110 + $0x18] sm:$0xff] %v1080
    %1115 = vst [vmem:[%s1110 + $0x20] sm:$0xff] %v1083
    %1116 = vst [vmem:[%s1110 + $0x28] sm:$0xff] %v1086
    %1117 = vst [vmem:[%s1110 + $0x30] sm:$0xff] %v1089
    %1118 = vst [vmem:[%s1110 + $0x38] sm:$0xff] %v1092
    %1119 = vst [vmem:[%s1110 + $0x40] sm:$0xff] %v1095
    %1120 = vst [vmem:[%s1110 + $0x48] sm:$0xff] %v1098
    %1121 = vst [vmem:[%s1110 + $0x50] sm:$0xff] %v1101
    %1122 = vst [vmem:[%s1110 + $0x58] sm:$0xff] %v1104
    %1123 = vst [vmem:[%s1110 + $0x60] sm:$0xf] %v1107
    %v1124 = vld [vmem:[%s173] sm:$0xff]
    %v1125 = vld [vmem:[%s173 + $0x8] sm:$0xff]
    %v1126 = vld [vmem:[%s173 + $0x10] sm:$0xff]
    %v1127 = vld [vmem:[%s173 + $0x18] sm:$0xff]
    %v1128 = vld [vmem:[%s173 + $0x20] sm:$0xff]
    %v1129 = vld [vmem:[%s173 + $0x28] sm:$0xff]
    %v1130 = vld [vmem:[%s173 + $0x30] sm:$0xff]
    %v1131 = vld [vmem:[%s173 + $0x38] sm:$0xff]
    %v1132 = vsub.f32 %v1124, %v614
    %v1133 = vsub.f32 %v1125, %v615
    %v1134 = vsub.f32 %v1126, %v616
    %v1135 = vsub.f32 %v1127, %v617
    %v1136 = vsub.f32 %v1128, %v618
    %v1137 = vsub.f32 %v1129, %v619
    %v1138 = vsub.f32 %v1130, %v620
    %v1139 = vsub.f32 %v1131, %v621
    %v1140 = vmul.f32 %v1132, %v663
    %v1141 = vmul.f32 %v1133, %v673
    %v1142 = vmul.f32 %v1134, %v683
    %v1143 = vmul.f32 %v1135, %v693
    %v1144 = vmul.f32 %v1136, %v703
    %v1145 = vmul.f32 %v1137, %v713
    %v1146 = vmul.f32 %v1138, %v723
    %v1147 = vmul.f32 %v1139, %v733
    %s1148 = sld [smem:[#allocation2 + $0x3]]
    %v1149 = vstv %s1148
    %v1150 = vmul.f32 %v1140, %v1149
    %v1151 = vmul.f32 %v1141, %v1149
    %v1152 = vmul.f32 %v1142, %v1149
    %v1153 = vmul.f32 %v1143, %v1149
    %v1154 = vmul.f32 %v1144, %v1149
    %v1155 = vmul.f32 %v1145, %v1149
    %v1156 = vmul.f32 %v1146, %v1149
    %v1157 = vmul.f32 %v1147, %v1149
    %s1158 = sld [smem:[#allocation6 + $0x3]]
    %v1159 = vstv %s1158
    %v1160 = vadd.f32 %v1150, %v1159
    %v1161 = vadd.f32 %v1151, %v1159
    %v1162 = vadd.f32 %v1152, %v1159
    %v1163 = vadd.f32 %v1153, %v1159
    %v1164 = vadd.f32 %v1154, %v1159
    %v1165 = vadd.f32 %v1155, %v1159
    %v1166 = vadd.f32 %v1156, %v1159
    %v1167 = vadd.f32 %v1157, %v1159
    %1168 = vmatpush.msra.mxu0 0.0
    %1169 = vmatpush.msra.mxu0 0.0
    %1170 = vmatpush.msra.mxu0 0.0
    %1171 = vmatpush.msra.mxu0 0.0
    %1172 = vmatpush.msra.mxu0 0.0
    %1173 = vmatpush.msra.mxu0 0.0
    %1174 = vmatpush.msra.mxu0 0.0
    %1175 = vmatpush.msra.mxu0 0.0
    %1176 = vmatpush.msra.mxu0 %v1167
    %1177 = vmatpush.msra.mxu0 %v1166
    %1178 = vmatpush.msra.mxu0 %v1165
    %1179 = vmatpush.msra.mxu0 %v1164
    %1180 = vmatpush.msra.mxu0 %v1163
    %1181 = vmatpush.msra.mxu0 %v1162
    %1182 = vmatpush.msra.mxu0 %v1161
    %1183 = vmatpush.msra.mxu0 %v1160
    %1184 = vmatmul.f32.gmra.mxu0 %v772
    %v1185 = vpop.f32.mrf.mxu0
    %v1186 = vadd.f32 0.0, %v1185
    %1187 = vmatmul.f32.gmra.mxu0 %v775
    %v1188 = vpop.f32.mrf.mxu0
    %v1189 = vadd.f32 0.0, %v1188
    %1190 = vmatmul.f32.gmra.mxu0 %v778
    %v1191 = vpop.f32.mrf.mxu0
    %v1192 = vadd.f32 0.0, %v1191
    %1193 = vmatmul.f32.gmra.mxu0 %v781
    %v1194 = vpop.f32.mrf.mxu0
    %v1195 = vadd.f32 0.0, %v1194
    %1196 = vmatmul.f32.gmra.mxu0 %v784
    %v1197 = vpop.f32.mrf.mxu0
    %v1198 = vadd.f32 0.0, %v1197
    %1199 = vmatmul.f32.gmra.mxu0 %v787
    %v1200 = vpop.f32.mrf.mxu0
    %v1201 = vadd.f32 0.0, %v1200
    %1202 = vmatmul.f32.gmra.mxu0 %v790
    %v1203 = vpop.f32.mrf.mxu0
    %v1204 = vadd.f32 0.0, %v1203
    %1205 = vmatmul.f32.gmra.mxu0 %v793
    %v1206 = vpop.f32.mrf.mxu0
    %v1207 = vadd.f32 0.0, %v1206
    %1208 = vmatmul.f32.gmra.mxu0 %v796
    %v1209 = vpop.f32.mrf.mxu0
    %v1210 = vadd.f32 0.0, %v1209
    %1211 = vmatmul.f32.gmra.mxu0 %v799
    %v1212 = vpop.f32.mrf.mxu0
    %v1213 = vadd.f32 0.0, %v1212
    %1214 = vmatmul.f32.gmra.mxu0 %v802
    %v1215 = vpop.f32.mrf.mxu0
    %v1216 = vadd.f32 0.0, %v1215
    %1217 = vmatmul.f32.gmra.mxu0 %v805
    %v1218 = vpop.f32.mrf.mxu0
    %v1219 = vadd.f32 0.0, %v1218
    %1220 = vmatmul.f32.gmra.mxu0 %v808
    %v1221 = vpop.f32.mrf.mxu0
    %v1222 = vadd.f32 0.0, %v1221
    %1223 = vdwg.mxu0
    %s1224 = sadd.s32 0, 416
    %s1225 = scalar_lea.vmem [#allocation9], %s1224
    %1226 = vst [vmem:[%s1225] sm:$0xff] %v1186
    %1227 = vst [vmem:[%s1225 + $0x8] sm:$0xff] %v1189
    %1228 = vst [vmem:[%s1225 + $0x10] sm:$0xff] %v1192
    %1229 = vst [vmem:[%s1225 + $0x18] sm:$0xff] %v1195
    %1230 = vst [vmem:[%s1225 + $0x20] sm:$0xff] %v1198
    %1231 = vst [vmem:[%s1225 + $0x28] sm:$0xff] %v1201
    %1232 = vst [vmem:[%s1225 + $0x30] sm:$0xff] %v1204
    %1233 = vst [vmem:[%s1225 + $0x38] sm:$0xff] %v1207
    %1234 = vst [vmem:[%s1225 + $0x40] sm:$0xff] %v1210
    %1235 = vst [vmem:[%s1225 + $0x48] sm:$0xff] %v1213
    %1236 = vst [vmem:[%s1225 + $0x50] sm:$0xff] %v1216
    %1237 = vst [vmem:[%s1225 + $0x58] sm:$0xff] %v1219
    %1238 = vst [vmem:[%s1225 + $0x60] sm:$0xf] %v1222
    %v1239 = vld [vmem:[%s207] sm:$0xff]
    %v1240 = vld [vmem:[%s207 + $0x8] sm:$0xff]
    %v1241 = vld [vmem:[%s207 + $0x10] sm:$0xff]
    %v1242 = vld [vmem:[%s207 + $0x18] sm:$0xff]
    %v1243 = vld [vmem:[%s207 + $0x20] sm:$0xff]
    %v1244 = vld [vmem:[%s207 + $0x28] sm:$0xff]
    %v1245 = vld [vmem:[%s207 + $0x30] sm:$0xff]
    %v1246 = vld [vmem:[%s207 + $0x38] sm:$0xff]
    %v1247 = vsub.f32 %v1239, %v614
    %v1248 = vsub.f32 %v1240, %v615
    %v1249 = vsub.f32 %v1241, %v616
    %v1250 = vsub.f32 %v1242, %v617
    %v1251 = vsub.f32 %v1243, %v618
    %v1252 = vsub.f32 %v1244, %v619
    %v1253 = vsub.f32 %v1245, %v620
    %v1254 = vsub.f32 %v1246, %v621
    %v1255 = vmul.f32 %v1247, %v663
    %v1256 = vmul.f32 %v1248, %v673
    %v1257 = vmul.f32 %v1249, %v683
    %v1258 = vmul.f32 %v1250, %v693
    %v1259 = vmul.f32 %v1251, %v703
    %v1260 = vmul.f32 %v1252, %v713
    %v1261 = vmul.f32 %v1253, %v723
    %v1262 = vmul.f32 %v1254, %v733
    %s1263 = sld [smem:[#allocation2 + $0x4]]
    %v1264 = vstv %s1263
    %v1265 = vmul.f32 %v1255, %v1264
    %v1266 = vmul.f32 %v1256, %v1264
    %v1267 = vmul.f32 %v1257, %v1264
    %v1268 = vmul.f32 %v1258, %v1264
    %v1269 = vmul.f32 %v1259, %v1264
    %v1270 = vmul.f32 %v1260, %v1264
    %v1271 = vmul.f32 %v1261, %v1264
    %v1272 = vmul.f32 %v1262, %v1264
    %s1273 = sld [smem:[#allocation6 + $0x4]]
    %v1274 = vstv %s1273
    %v1275 = vadd.f32 %v1265, %v1274
    %v1276 = vadd.f32 %v1266, %v1274
    %v1277 = vadd.f32 %v1267, %v1274
    %v1278 = vadd.f32 %v1268, %v1274
    %v1279 = vadd.f32 %v1269, %v1274
    %v1280 = vadd.f32 %v1270, %v1274
    %v1281 = vadd.f32 %v1271, %v1274
    %v1282 = vadd.f32 %v1272, %v1274
    %1283 = vmatpush.msra.mxu0 0.0
    %1284 = vmatpush.msra.mxu0 0.0
    %1285 = vmatpush.msra.mxu0 0.0
    %1286 = vmatpush.msra.mxu0 0.0
    %1287 = vmatpush.msra.mxu0 0.0
    %1288 = vmatpush.msra.mxu0 0.0
    %1289 = vmatpush.msra.mxu0 0.0
    %1290 = vmatpush.msra.mxu0 0.0
    %1291 = vmatpush.msra.mxu0 %v1282
    %1292 = vmatpush.msra.mxu0 %v1281
    %1293 = vmatpush.msra.mxu0 %v1280
    %1294 = vmatpush.msra.mxu0 %v1279
    %1295 = vmatpush.msra.mxu0 %v1278
    %1296 = vmatpush.msra.mxu0 %v1277
    %1297 = vmatpush.msra.mxu0 %v1276
    %1298 = vmatpush.msra.mxu0 %v1275
    %1299 = vmatmul.f32.gmra.mxu0 %v772
    %v1300 = vpop.f32.mrf.mxu0
    %v1301 = vadd.f32 0.0, %v1300
    %1302 = vmatmul.f32.gmra.mxu0 %v775
    %v1303 = vpop.f32.mrf.mxu0
    %v1304 = vadd.f32 0.0, %v1303
    %1305 = vmatmul.f32.gmra.mxu0 %v778
    %v1306 = vpop.f32.mrf.mxu0
    %v1307 = vadd.f32 0.0, %v1306
    %1308 = vmatmul.f32.gmra.mxu0 %v781
    %v1309 = vpop.f32.mrf.mxu0
    %v1310 = vadd.f32 0.0, %v1309
    %1311 = vmatmul.f32.gmra.mxu0 %v784
    %v1312 = vpop.f32.mrf.mxu0
    %v1313 = vadd.f32 0.0, %v1312
    %1314 = vmatmul.f32.gmra.mxu0 %v787
    %v1315 = vpop.f32.mrf.mxu0
    %v1316 = vadd.f32 0.0, %v1315
    %1317 = vmatmul.f32.gmra.mxu0 %v790
    %v1318 = vpop.f32.mrf.mxu0
    %v1319 = vadd.f32 0.0, %v1318
    %1320 = vmatmul.f32.gmra.mxu0 %v793
    %v1321 = vpop.f32.mrf.mxu0
    %v1322 = vadd.f32 0.0, %v1321
    %1323 = vmatmul.f32.gmra.mxu0 %v796
    %v1324 = vpop.f32.mrf.mxu0
    %v1325 = vadd.f32 0.0, %v1324
    %1326 = vmatmul.f32.gmra.mxu0 %v799
    %v1327 = vpop.f32.mrf.mxu0
    %v1328 = vadd.f32 0.0, %v1327
    %1329 = vmatmul.f32.gmra.mxu0 %v802
    %v1330 = vpop.f32.mrf.mxu0
    %v1331 = vadd.f32 0.0, %v1330
    %1332 = vmatmul.f32.gmra.mxu0 %v805
    %v1333 = vpop.f32.mrf.mxu0
    %v1334 = vadd.f32 0.0, %v1333
    %1335 = vmatmul.f32.gmra.mxu0 %v808
    %v1336 = vpop.f32.mrf.mxu0
    %v1337 = vadd.f32 0.0, %v1336
    %1338 = vdwg.mxu0
    %s1339 = sadd.s32 0, 520
    %s1340 = scalar_lea.vmem [#allocation9], %s1339
    %1341 = vst [vmem:[%s1340] sm:$0xff] %v1301
    %1342 = vst [vmem:[%s1340 + $0x8] sm:$0xff] %v1304
    %1343 = vst [vmem:[%s1340 + $0x10] sm:$0xff] %v1307
    %1344 = vst [vmem:[%s1340 + $0x18] sm:$0xff] %v1310
    %1345 = vst [vmem:[%s1340 + $0x20] sm:$0xff] %v1313
    %1346 = vst [vmem:[%s1340 + $0x28] sm:$0xff] %v1316
    %1347 = vst [vmem:[%s1340 + $0x30] sm:$0xff] %v1319
    %1348 = vst [vmem:[%s1340 + $0x38] sm:$0xff] %v1322
    %1349 = vst [vmem:[%s1340 + $0x40] sm:$0xff] %v1325
    %1350 = vst [vmem:[%s1340 + $0x48] sm:$0xff] %v1328
    %1351 = vst [vmem:[%s1340 + $0x50] sm:$0xff] %v1331
    %1352 = vst [vmem:[%s1340 + $0x58] sm:$0xff] %v1334
    %1353 = vst [vmem:[%s1340 + $0x60] sm:$0xf] %v1337
    %v1354 = vld [vmem:[%s241] sm:$0xff]
    %v1355 = vld [vmem:[%s241 + $0x8] sm:$0xff]
    %v1356 = vld [vmem:[%s241 + $0x10] sm:$0xff]
    %v1357 = vld [vmem:[%s241 + $0x18] sm:$0xff]
    %v1358 = vld [vmem:[%s241 + $0x20] sm:$0xff]
    %v1359 = vld [vmem:[%s241 + $0x28] sm:$0xff]
    %v1360 = vld [vmem:[%s241 + $0x30] sm:$0xff]
    %v1361 = vld [vmem:[%s241 + $0x38] sm:$0xff]
    %v1362 = vsub.f32 %v1354, %v614
    %v1363 = vsub.f32 %v1355, %v615
    %v1364 = vsub.f32 %v1356, %v616
    %v1365 = vsub.f32 %v1357, %v617
    %v1366 = vsub.f32 %v1358, %v618
    %v1367 = vsub.f32 %v1359, %v619
    %v1368 = vsub.f32 %v1360, %v620
    %v1369 = vsub.f32 %v1361, %v621
    %v1370 = vmul.f32 %v1362, %v663
    %v1371 = vmul.f32 %v1363, %v673
    %v1372 = vmul.f32 %v1364, %v683
    %v1373 = vmul.f32 %v1365, %v693
    %v1374 = vmul.f32 %v1366, %v703
    %v1375 = vmul.f32 %v1367, %v713
    %v1376 = vmul.f32 %v1368, %v723
    %v1377 = vmul.f32 %v1369, %v733
    %s1378 = sld [smem:[#allocation2 + $0x5]]
    %v1379 = vstv %s1378
    %v1380 = vmul.f32 %v1370, %v1379
    %v1381 = vmul.f32 %v1371, %v1379
    %v1382 = vmul.f32 %v1372, %v1379
    %v1383 = vmul.f32 %v1373, %v1379
    %v1384 = vmul.f32 %v1374, %v1379
    %v1385 = vmul.f32 %v1375, %v1379
    %v1386 = vmul.f32 %v1376, %v1379
    %v1387 = vmul.f32 %v1377, %v1379
    %s1388 = sld [smem:[#allocation6 + $0x5]]
    %v1389 = vstv %s1388
    %v1390 = vadd.f32 %v1380, %v1389
    %v1391 = vadd.f32 %v1381, %v1389
    %v1392 = vadd.f32 %v1382, %v1389
    %v1393 = vadd.f32 %v1383, %v1389
    %v1394 = vadd.f32 %v1384, %v1389
    %v1395 = vadd.f32 %v1385, %v1389
    %v1396 = vadd.f32 %v1386, %v1389
    %v1397 = vadd.f32 %v1387, %v1389
    %1398 = vmatpush.msra.mxu0 0.0
    %1399 = vmatpush.msra.mxu0 0.0
    %1400 = vmatpush.msra.mxu0 0.0
    %1401 = vmatpush.msra.mxu0 0.0
    %1402 = vmatpush.msra.mxu0 0.0
    %1403 = vmatpush.msra.mxu0 0.0
    %1404 = vmatpush.msra.mxu0 0.0
    %1405 = vmatpush.msra.mxu0 0.0
    %1406 = vmatpush.msra.mxu0 %v1397
    %1407 = vmatpush.msra.mxu0 %v1396
    %1408 = vmatpush.msra.mxu0 %v1395
    %1409 = vmatpush.msra.mxu0 %v1394
    %1410 = vmatpush.msra.mxu0 %v1393
    %1411 = vmatpush.msra.mxu0 %v1392
    %1412 = vmatpush.msra.mxu0 %v1391
    %1413 = vmatpush.msra.mxu0 %v1390
    %1414 = vmatmul.f32.gmra.mxu0 %v772
    %v1415 = vpop.f32.mrf.mxu0
    %v1416 = vadd.f32 0.0, %v1415
    %1417 = vmatmul.f32.gmra.mxu0 %v775
    %v1418 = vpop.f32.mrf.mxu0
    %v1419 = vadd.f32 0.0, %v1418
    %1420 = vmatmul.f32.gmra.mxu0 %v778
    %v1421 = vpop.f32.mrf.mxu0
    %v1422 = vadd.f32 0.0, %v1421
    %1423 = vmatmul.f32.gmra.mxu0 %v781
    %v1424 = vpop.f32.mrf.mxu0
    %v1425 = vadd.f32 0.0, %v1424
    %1426 = vmatmul.f32.gmra.mxu0 %v784
    %v1427 = vpop.f32.mrf.mxu0
    %v1428 = vadd.f32 0.0, %v1427
    %1429 = vmatmul.f32.gmra.mxu0 %v787
    %v1430 = vpop.f32.mrf.mxu0
    %v1431 = vadd.f32 0.0, %v1430
    %1432 = vmatmul.f32.gmra.mxu0 %v790
    %v1433 = vpop.f32.mrf.mxu0
    %v1434 = vadd.f32 0.0, %v1433
    %1435 = vmatmul.f32.gmra.mxu0 %v793
    %v1436 = vpop.f32.mrf.mxu0
    %v1437 = vadd.f32 0.0, %v1436
    %1438 = vmatmul.f32.gmra.mxu0 %v796
    %v1439 = vpop.f32.mrf.mxu0
    %v1440 = vadd.f32 0.0, %v1439
    %1441 = vmatmul.f32.gmra.mxu0 %v799
    %v1442 = vpop.f32.mrf.mxu0
    %v1443 = vadd.f32 0.0, %v1442
    %1444 = vmatmul.f32.gmra.mxu0 %v802
    %v1445 = vpop.f32.mrf.mxu0
    %v1446 = vadd.f32 0.0, %v1445
    %1447 = vmatmul.f32.gmra.mxu0 %v805
    %v1448 = vpop.f32.mrf.mxu0
    %v1449 = vadd.f32 0.0, %v1448
    %1450 = vmatmul.f32.gmra.mxu0 %v808
    %v1451 = vpop.f32.mrf.mxu0
    %v1452 = vadd.f32 0.0, %v1451
    %1453 = vdwg.mxu0
    %s1454 = sadd.s32 0, 624
    %s1455 = scalar_lea.vmem [#allocation9], %s1454
    %1456 = vst [vmem:[%s1455] sm:$0xff] %v1416
    %1457 = vst [vmem:[%s1455 + $0x8] sm:$0xff] %v1419
    %1458 = vst [vmem:[%s1455 + $0x10] sm:$0xff] %v1422
    %1459 = vst [vmem:[%s1455 + $0x18] sm:$0xff] %v1425
    %1460 = vst [vmem:[%s1455 + $0x20] sm:$0xff] %v1428
    %1461 = vst [vmem:[%s1455 + $0x28] sm:$0xff] %v1431
    %1462 = vst [vmem:[%s1455 + $0x30] sm:$0xff] %v1434
    %1463 = vst [vmem:[%s1455 + $0x38] sm:$0xff] %v1437
    %1464 = vst [vmem:[%s1455 + $0x40] sm:$0xff] %v1440
    %1465 = vst [vmem:[%s1455 + $0x48] sm:$0xff] %v1443
    %1466 = vst [vmem:[%s1455 + $0x50] sm:$0xff] %v1446
    %1467 = vst [vmem:[%s1455 + $0x58] sm:$0xff] %v1449
    %1468 = vst [vmem:[%s1455 + $0x60] sm:$0xf] %v1452
    %v1469 = vld [vmem:[%s275] sm:$0xff]
    %v1470 = vld [vmem:[%s275 + $0x8] sm:$0xff]
    %v1471 = vld [vmem:[%s275 + $0x10] sm:$0xff]
    %v1472 = vld [vmem:[%s275 + $0x18] sm:$0xff]
    %v1473 = vld [vmem:[%s275 + $0x20] sm:$0xff]
    %v1474 = vld [vmem:[%s275 + $0x28] sm:$0xff]
    %v1475 = vld [vmem:[%s275 + $0x30] sm:$0xff]
    %v1476 = vld [vmem:[%s275 + $0x38] sm:$0xff]
    %v1477 = vsub.f32 %v1469, %v614
    %v1478 = vsub.f32 %v1470, %v615
    %v1479 = vsub.f32 %v1471, %v616
    %v1480 = vsub.f32 %v1472, %v617
    %v1481 = vsub.f32 %v1473, %v618
    %v1482 = vsub.f32 %v1474, %v619
    %v1483 = vsub.f32 %v1475, %v620
    %v1484 = vsub.f32 %v1476, %v621
    %v1485 = vmul.f32 %v1477, %v663
    %v1486 = vmul.f32 %v1478, %v673
    %v1487 = vmul.f32 %v1479, %v683
    %v1488 = vmul.f32 %v1480, %v693
    %v1489 = vmul.f32 %v1481, %v703
    %v1490 = vmul.f32 %v1482, %v713
    %v1491 = vmul.f32 %v1483, %v723
    %v1492 = vmul.f32 %v1484, %v733
    %s1493 = sld [smem:[#allocation2 + $0x6]]
    %v1494 = vstv %s1493
    %v1495 = vmul.f32 %v1485, %v1494
    %v1496 = vmul.f32 %v1486, %v1494
    %v1497 = vmul.f32 %v1487, %v1494
    %v1498 = vmul.f32 %v1488, %v1494
    %v1499 = vmul.f32 %v1489, %v1494
    %v1500 = vmul.f32 %v1490, %v1494
    %v1501 = vmul.f32 %v1491, %v1494
    %v1502 = vmul.f32 %v1492, %v1494
    %s1503 = sld [smem:[#allocation6 + $0x6]]
    %v1504 = vstv %s1503
    %v1505 = vadd.f32 %v1495, %v1504
    %v1506 = vadd.f32 %v1496, %v1504
    %v1507 = vadd.f32 %v1497, %v1504
    %v1508 = vadd.f32 %v1498, %v1504
    %v1509 = vadd.f32 %v1499, %v1504
    %v1510 = vadd.f32 %v1500, %v1504
    %v1511 = vadd.f32 %v1501, %v1504
    %v1512 = vadd.f32 %v1502, %v1504
    %1513 = vmatpush.msra.mxu0 0.0
    %1514 = vmatpush.msra.mxu0 0.0
    %1515 = vmatpush.msra.mxu0 0.0
    %1516 = vmatpush.msra.mxu0 0.0
    %1517 = vmatpush.msra.mxu0 0.0
    %1518 = vmatpush.msra.mxu0 0.0
    %1519 = vmatpush.msra.mxu0 0.0
    %1520 = vmatpush.msra.mxu0 0.0
    %1521 = vmatpush.msra.mxu0 %v1512
    %1522 = vmatpush.msra.mxu0 %v1511
    %1523 = vmatpush.msra.mxu0 %v1510
    %1524 = vmatpush.msra.mxu0 %v1509
    %1525 = vmatpush.msra.mxu0 %v1508
    %1526 = vmatpush.msra.mxu0 %v1507
    %1527 = vmatpush.msra.mxu0 %v1506
    %1528 = vmatpush.msra.mxu0 %v1505
    %1529 = vmatmul.f32.gmra.mxu0 %v772
    %v1530 = vpop.f32.mrf.mxu0
    %v1531 = vadd.f32 0.0, %v1530
    %1532 = vmatmul.f32.gmra.mxu0 %v775
    %v1533 = vpop.f32.mrf.mxu0
    %v1534 = vadd.f32 0.0, %v1533
    %1535 = vmatmul.f32.gmra.mxu0 %v778
    %v1536 = vpop.f32.mrf.mxu0
    %v1537 = vadd.f32 0.0, %v1536
    %1538 = vmatmul.f32.gmra.mxu0 %v781
    %v1539 = vpop.f32.mrf.mxu0
    %v1540 = vadd.f32 0.0, %v1539
    %1541 = vmatmul.f32.gmra.mxu0 %v784
    %v1542 = vpop.f32.mrf.mxu0
    %v1543 = vadd.f32 0.0, %v1542
    %1544 = vmatmul.f32.gmra.mxu0 %v787
    %v1545 = vpop.f32.mrf.mxu0
    %v1546 = vadd.f32 0.0, %v1545
    %1547 = vmatmul.f32.gmra.mxu0 %v790
    %v1548 = vpop.f32.mrf.mxu0
    %v1549 = vadd.f32 0.0, %v1548
    %1550 = vmatmul.f32.gmra.mxu0 %v793
    %v1551 = vpop.f32.mrf.mxu0
    %v1552 = vadd.f32 0.0, %v1551
    %1553 = vmatmul.f32.gmra.mxu0 %v796
    %v1554 = vpop.f32.mrf.mxu0
    %v1555 = vadd.f32 0.0, %v1554
    %1556 = vmatmul.f32.gmra.mxu0 %v799
    %v1557 = vpop.f32.mrf.mxu0
    %v1558 = vadd.f32 0.0, %v1557
    %1559 = vmatmul.f32.gmra.mxu0 %v802
    %v1560 = vpop.f32.mrf.mxu0
    %v1561 = vadd.f32 0.0, %v1560
    %1562 = vmatmul.f32.gmra.mxu0 %v805
    %v1563 = vpop.f32.mrf.mxu0
    %v1564 = vadd.f32 0.0, %v1563
    %1565 = vmatmul.f32.gmra.mxu0 %v808
    %v1566 = vpop.f32.mrf.mxu0
    %v1567 = vadd.f32 0.0, %v1566
    %1568 = vdwg.mxu0
    %s1569 = sadd.s32 0, 728
    %s1570 = scalar_lea.vmem [#allocation9], %s1569
    %1571 = vst [vmem:[%s1570] sm:$0xff] %v1531
    %1572 = vst [vmem:[%s1570 + $0x8] sm:$0xff] %v1534
    %1573 = vst [vmem:[%s1570 + $0x10] sm:$0xff] %v1537
    %1574 = vst [vmem:[%s1570 + $0x18] sm:$0xff] %v1540
    %1575 = vst [vmem:[%s1570 + $0x20] sm:$0xff] %v1543
    %1576 = vst [vmem:[%s1570 + $0x28] sm:$0xff] %v1546
    %1577 = vst [vmem:[%s1570 + $0x30] sm:$0xff] %v1549
    %1578 = vst [vmem:[%s1570 + $0x38] sm:$0xff] %v1552
    %1579 = vst [vmem:[%s1570 + $0x40] sm:$0xff] %v1555
    %1580 = vst [vmem:[%s1570 + $0x48] sm:$0xff] %v1558
    %1581 = vst [vmem:[%s1570 + $0x50] sm:$0xff] %v1561
    %1582 = vst [vmem:[%s1570 + $0x58] sm:$0xff] %v1564
    %1583 = vst [vmem:[%s1570 + $0x60] sm:$0xf] %v1567
    %v1584 = vld [vmem:[%s309] sm:$0xff]
    %v1585 = vld [vmem:[%s309 + $0x8] sm:$0xff]
    %v1586 = vld [vmem:[%s309 + $0x10] sm:$0xff]
    %v1587 = vld [vmem:[%s309 + $0x18] sm:$0xff]
    %v1588 = vld [vmem:[%s309 + $0x20] sm:$0xff]
    %v1589 = vld [vmem:[%s309 + $0x28] sm:$0xff]
    %v1590 = vld [vmem:[%s309 + $0x30] sm:$0xff]
    %v1591 = vld [vmem:[%s309 + $0x38] sm:$0xff]
    %v1592 = vsub.f32 %v1584, %v614
    %v1593 = vsub.f32 %v1585, %v615
    %v1594 = vsub.f32 %v1586, %v616
    %v1595 = vsub.f32 %v1587, %v617
    %v1596 = vsub.f32 %v1588, %v618
    %v1597 = vsub.f32 %v1589, %v619
    %v1598 = vsub.f32 %v1590, %v620
    %v1599 = vsub.f32 %v1591, %v621
    %v1600 = vmul.f32 %v1592, %v663
    %v1601 = vmul.f32 %v1593, %v673
    %v1602 = vmul.f32 %v1594, %v683
    %v1603 = vmul.f32 %v1595, %v693
    %v1604 = vmul.f32 %v1596, %v703
    %v1605 = vmul.f32 %v1597, %v713
    %v1606 = vmul.f32 %v1598, %v723
    %v1607 = vmul.f32 %v1599, %v733
    %s1608 = sld [smem:[#allocation2 + $0x7]]
    %v1609 = vstv %s1608
    %v1610 = vmul.f32 %v1600, %v1609
    %v1611 = vmul.f32 %v1601, %v1609
    %v1612 = vmul.f32 %v1602, %v1609
    %v1613 = vmul.f32 %v1603, %v1609
    %v1614 = vmul.f32 %v1604, %v1609
    %v1615 = vmul.f32 %v1605, %v1609
    %v1616 = vmul.f32 %v1606, %v1609
    %v1617 = vmul.f32 %v1607, %v1609
    %s1618 = sld [smem:[#allocation6 + $0x7]]
    %v1619 = vstv %s1618
    %v1620 = vadd.f32 %v1610, %v1619
    %v1621 = vadd.f32 %v1611, %v1619
    %v1622 = vadd.f32 %v1612, %v1619
    %v1623 = vadd.f32 %v1613, %v1619
    %v1624 = vadd.f32 %v1614, %v1619
    %v1625 = vadd.f32 %v1615, %v1619
    %v1626 = vadd.f32 %v1616, %v1619
    %v1627 = vadd.f32 %v1617, %v1619
    %1628 = vmatpush.msra.mxu0 0.0
    %1629 = vmatpush.msra.mxu0 0.0
    %1630 = vmatpush.msra.mxu0 0.0
    %1631 = vmatpush.msra.mxu0 0.0
    %1632 = vmatpush.msra.mxu0 0.0
    %1633 = vmatpush.msra.mxu0 0.0
    %1634 = vmatpush.msra.mxu0 0.0
    %1635 = vmatpush.msra.mxu0 0.0
    %1636 = vmatpush.msra.mxu0 %v1627
    %1637 = vmatpush.msra.mxu0 %v1626
    %1638 = vmatpush.msra.mxu0 %v1625
    %1639 = vmatpush.msra.mxu0 %v1624
    %1640 = vmatpush.msra.mxu0 %v1623
    %1641 = vmatpush.msra.mxu0 %v1622
    %1642 = vmatpush.msra.mxu0 %v1621
    %1643 = vmatpush.msra.mxu0 %v1620
    %1644 = vmatmul.f32.gmra.mxu0 %v772
    %v1645 = vpop.f32.mrf.mxu0
    %v1646 = vadd.f32 0.0, %v1645
    %1647 = vmatmul.f32.gmra.mxu0 %v775
    %v1648 = vpop.f32.mrf.mxu0
    %v1649 = vadd.f32 0.0, %v1648
    %1650 = vmatmul.f32.gmra.mxu0 %v778
    %v1651 = vpop.f32.mrf.mxu0
    %v1652 = vadd.f32 0.0, %v1651
    %1653 = vmatmul.f32.gmra.mxu0 %v781
    %v1654 = vpop.f32.mrf.mxu0
    %v1655 = vadd.f32 0.0, %v1654
    %1656 = vmatmul.f32.gmra.mxu0 %v784
    %v1657 = vpop.f32.mrf.mxu0
    %v1658 = vadd.f32 0.0, %v1657
    %1659 = vmatmul.f32.gmra.mxu0 %v787
    %v1660 = vpop.f32.mrf.mxu0
    %v1661 = vadd.f32 0.0, %v1660
    %1662 = vmatmul.f32.gmra.mxu0 %v790
    %v1663 = vpop.f32.mrf.mxu0
    %v1664 = vadd.f32 0.0, %v1663
    %1665 = vmatmul.f32.gmra.mxu0 %v793
    %v1666 = vpop.f32.mrf.mxu0
    %v1667 = vadd.f32 0.0, %v1666
    %1668 = vmatmul.f32.gmra.mxu0 %v796
    %v1669 = vpop.f32.mrf.mxu0
    %v1670 = vadd.f32 0.0, %v1669
    %1671 = vmatmul.f32.gmra.mxu0 %v799
    %v1672 = vpop.f32.mrf.mxu0
    %v1673 = vadd.f32 0.0, %v1672
    %1674 = vmatmul.f32.gmra.mxu0 %v802
    %v1675 = vpop.f32.mrf.mxu0
    %v1676 = vadd.f32 0.0, %v1675
    %1677 = vmatmul.f32.gmra.mxu0 %v805
    %v1678 = vpop.f32.mrf.mxu0
    %v1679 = vadd.f32 0.0, %v1678
    %1680 = vmatmul.f32.gmra.mxu0 %v808
    %v1681 = vpop.f32.mrf.mxu0
    %v1682 = vadd.f32 0.0, %v1681
    %1683 = vdwg.mxu0
    %s1684 = scalar_lea.vmem [#allocation9], %s512
    %1685 = vst [vmem:[%s1684] sm:$0xff] %v1646
    %1686 = vst [vmem:[%s1684 + $0x8] sm:$0xff] %v1649
    %1687 = vst [vmem:[%s1684 + $0x10] sm:$0xff] %v1652
    %1688 = vst [vmem:[%s1684 + $0x18] sm:$0xff] %v1655
    %1689 = vst [vmem:[%s1684 + $0x20] sm:$0xff] %v1658
    %1690 = vst [vmem:[%s1684 + $0x28] sm:$0xff] %v1661
    %1691 = vst [vmem:[%s1684 + $0x30] sm:$0xff] %v1664
    %1692 = vst [vmem:[%s1684 + $0x38] sm:$0xff] %v1667
    %1693 = vst [vmem:[%s1684 + $0x40] sm:$0xff] %v1670
    %1694 = vst [vmem:[%s1684 + $0x48] sm:$0xff] %v1673
    %1695 = vst [vmem:[%s1684 + $0x50] sm:$0xff] %v1676
    %1696 = vst [vmem:[%s1684 + $0x58] sm:$0xff] %v1679
    %1697 = vst [vmem:[%s1684 + $0x60] sm:$0xf] %v1682
    %v1698 = vld [vmem:[%s343] sm:$0xff]
    %v1699 = vld [vmem:[%s343 + $0x8] sm:$0xff]
    %v1700 = vld [vmem:[%s343 + $0x10] sm:$0xff]
    %v1701 = vld [vmem:[%s343 + $0x18] sm:$0xff]
    %v1702 = vld [vmem:[%s343 + $0x20] sm:$0xff]
    %v1703 = vld [vmem:[%s343 + $0x28] sm:$0xff]
    %v1704 = vld [vmem:[%s343 + $0x30] sm:$0xff]
    %v1705 = vld [vmem:[%s343 + $0x38] sm:$0xff]
    %v1706 = vsub.f32 %v1698, %v614
    %v1707 = vsub.f32 %v1699, %v615
    %v1708 = vsub.f32 %v1700, %v616
    %v1709 = vsub.f32 %v1701, %v617
    %v1710 = vsub.f32 %v1702, %v618
    %v1711 = vsub.f32 %v1703, %v619
    %v1712 = vsub.f32 %v1704, %v620
    %v1713 = vsub.f32 %v1705, %v621
    %v1714 = vmul.f32 %v1706, %v663
    %v1715 = vmul.f32 %v1707, %v673
    %v1716 = vmul.f32 %v1708, %v683
    %v1717 = vmul.f32 %v1709, %v693
    %v1718 = vmul.f32 %v1710, %v703
    %v1719 = vmul.f32 %v1711, %v713
    %v1720 = vmul.f32 %v1712, %v723
    %v1721 = vmul.f32 %v1713, %v733
    %s1722 = sld [smem:[#allocation2 + $0x8]]
    %v1723 = vstv %s1722
    %v1724 = vmul.f32 %v1714, %v1723
    %v1725 = vmul.f32 %v1715, %v1723
    %v1726 = vmul.f32 %v1716, %v1723
    %v1727 = vmul.f32 %v1717, %v1723
    %v1728 = vmul.f32 %v1718, %v1723
    %v1729 = vmul.f32 %v1719, %v1723
    %v1730 = vmul.f32 %v1720, %v1723
    %v1731 = vmul.f32 %v1721, %v1723
    %s1732 = sld [smem:[#allocation6 + $0x8]]
    %v1733 = vstv %s1732
    %v1734 = vadd.f32 %v1724, %v1733
    %v1735 = vadd.f32 %v1725, %v1733
    %v1736 = vadd.f32 %v1726, %v1733
    %v1737 = vadd.f32 %v1727, %v1733
    %v1738 = vadd.f32 %v1728, %v1733
    %v1739 = vadd.f32 %v1729, %v1733
    %v1740 = vadd.f32 %v1730, %v1733
    %v1741 = vadd.f32 %v1731, %v1733
    %1742 = vmatpush.msra.mxu0 0.0
    %1743 = vmatpush.msra.mxu0 0.0
    %1744 = vmatpush.msra.mxu0 0.0
    %1745 = vmatpush.msra.mxu0 0.0
    %1746 = vmatpush.msra.mxu0 0.0
    %1747 = vmatpush.msra.mxu0 0.0
    %1748 = vmatpush.msra.mxu0 0.0
    %1749 = vmatpush.msra.mxu0 0.0
    %1750 = vmatpush.msra.mxu0 %v1741
    %1751 = vmatpush.msra.mxu0 %v1740
    %1752 = vmatpush.msra.mxu0 %v1739
    %1753 = vmatpush.msra.mxu0 %v1738
    %1754 = vmatpush.msra.mxu0 %v1737
    %1755 = vmatpush.msra.mxu0 %v1736
    %1756 = vmatpush.msra.mxu0 %v1735
    %1757 = vmatpush.msra.mxu0 %v1734
    %1758 = vmatmul.f32.gmra.mxu0 %v772
    %v1759 = vpop.f32.mrf.mxu0
    %v1760 = vadd.f32 0.0, %v1759
    %1761 = vmatmul.f32.gmra.mxu0 %v775
    %v1762 = vpop.f32.mrf.mxu0
    %v1763 = vadd.f32 0.0, %v1762
    %1764 = vmatmul.f32.gmra.mxu0 %v778
    %v1765 = vpop.f32.mrf.mxu0
    %v1766 = vadd.f32 0.0, %v1765
    %1767 = vmatmul.f32.gmra.mxu0 %v781
    %v1768 = vpop.f32.mrf.mxu0
    %v1769 = vadd.f32 0.0, %v1768
    %1770 = vmatmul.f32.gmra.mxu0 %v784
    %v1771 = vpop.f32.mrf.mxu0
    %v1772 = vadd.f32 0.0, %v1771
    %1773 = vmatmul.f32.gmra.mxu0 %v787
    %v1774 = vpop.f32.mrf.mxu0
    %v1775 = vadd.f32 0.0, %v1774
    %1776 = vmatmul.f32.gmra.mxu0 %v790
    %v1777 = vpop.f32.mrf.mxu0
    %v1778 = vadd.f32 0.0, %v1777
    %1779 = vmatmul.f32.gmra.mxu0 %v793
    %v1780 = vpop.f32.mrf.mxu0
    %v1781 = vadd.f32 0.0, %v1780
    %1782 = vmatmul.f32.gmra.mxu0 %v796
    %v1783 = vpop.f32.mrf.mxu0
    %v1784 = vadd.f32 0.0, %v1783
    %1785 = vmatmul.f32.gmra.mxu0 %v799
    %v1786 = vpop.f32.mrf.mxu0
    %v1787 = vadd.f32 0.0, %v1786
    %1788 = vmatmul.f32.gmra.mxu0 %v802
    %v1789 = vpop.f32.mrf.mxu0
    %v1790 = vadd.f32 0.0, %v1789
    %1791 = vmatmul.f32.gmra.mxu0 %v805
    %v1792 = vpop.f32.mrf.mxu0
    %v1793 = vadd.f32 0.0, %v1792
    %1794 = vmatmul.f32.gmra.mxu0 %v808
    %v1795 = vpop.f32.mrf.mxu0
    %v1796 = vadd.f32 0.0, %v1795
    %1797 = vdwg.mxu0
    %s1798 = sadd.s32 0, 936
    %s1799 = scalar_lea.vmem [#allocation9], %s1798
    %1800 = vst [vmem:[%s1799] sm:$0xff] %v1760
    %1801 = vst [vmem:[%s1799 + $0x8] sm:$0xff] %v1763
    %1802 = vst [vmem:[%s1799 + $0x10] sm:$0xff] %v1766
    %1803 = vst [vmem:[%s1799 + $0x18] sm:$0xff] %v1769
    %1804 = vst [vmem:[%s1799 + $0x20] sm:$0xff] %v1772
    %1805 = vst [vmem:[%s1799 + $0x28] sm:$0xff] %v1775
    %1806 = vst [vmem:[%s1799 + $0x30] sm:$0xff] %v1778
    %1807 = vst [vmem:[%s1799 + $0x38] sm:$0xff] %v1781
    %1808 = vst [vmem:[%s1799 + $0x40] sm:$0xff] %v1784
    %1809 = vst [vmem:[%s1799 + $0x48] sm:$0xff] %v1787
    %1810 = vst [vmem:[%s1799 + $0x50] sm:$0xff] %v1790
    %1811 = vst [vmem:[%s1799 + $0x58] sm:$0xff] %v1793
    %1812 = vst [vmem:[%s1799 + $0x60] sm:$0xf] %v1796
    %s1813 = sadd.s32 0, 1040
    %s1814 = scalar_lea.vmem [#allocation9], %s1813
    %1815 = vst [vmem:[%s1814] sm:$0xff] %v1760
    %1816 = vst [vmem:[%s1814 + $0x8] sm:$0xff] %v1763
    %1817 = vst [vmem:[%s1814 + $0x10] sm:$0xff] %v1766
    %1818 = vst [vmem:[%s1814 + $0x18] sm:$0xff] %v1769
    %1819 = vst [vmem:[%s1814 + $0x20] sm:$0xff] %v1772
    %1820 = vst [vmem:[%s1814 + $0x28] sm:$0xff] %v1775
    %1821 = vst [vmem:[%s1814 + $0x30] sm:$0xff] %v1778
    %1822 = vst [vmem:[%s1814 + $0x38] sm:$0xff] %v1781
    %1823 = vst [vmem:[%s1814 + $0x40] sm:$0xff] %v1784
    %1824 = vst [vmem:[%s1814 + $0x48] sm:$0xff] %v1787
    %1825 = vst [vmem:[%s1814 + $0x50] sm:$0xff] %v1790
    %1826 = vst [vmem:[%s1814 + $0x58] sm:$0xff] %v1793
    %1827 = vst [vmem:[%s1814 + $0x60] sm:$0xf] %v1796
    %v1828 = vld [vmem:[%s377] sm:$0xff]
    %v1829 = vld [vmem:[%s377 + $0x8] sm:$0xff]
    %v1830 = vld [vmem:[%s377 + $0x10] sm:$0xff]
    %v1831 = vld [vmem:[%s377 + $0x18] sm:$0xff]
    %v1832 = vld [vmem:[%s377 + $0x20] sm:$0xff]
    %v1833 = vld [vmem:[%s377 + $0x28] sm:$0xff]
    %v1834 = vld [vmem:[%s377 + $0x30] sm:$0xff]
    %v1835 = vld [vmem:[%s377 + $0x38] sm:$0xff]
    %v1836 = vsub.f32 %v1828, %v614
    %v1837 = vsub.f32 %v1829, %v615
    %v1838 = vsub.f32 %v1830, %v616
    %v1839 = vsub.f32 %v1831, %v617
    %v1840 = vsub.f32 %v1832, %v618
    %v1841 = vsub.f32 %v1833, %v619
    %v1842 = vsub.f32 %v1834, %v620
    %v1843 = vsub.f32 %v1835, %v621
    %v1844 = vmul.f32 %v1836, %v663
    %v1845 = vmul.f32 %v1837, %v673
    %v1846 = vmul.f32 %v1838, %v683
    %v1847 = vmul.f32 %v1839, %v693
    %v1848 = vmul.f32 %v1840, %v703
    %v1849 = vmul.f32 %v1841, %v713
    %v1850 = vmul.f32 %v1842, %v723
    %v1851 = vmul.f32 %v1843, %v733
    %s1852 = sld [smem:[#allocation2 + $0x9]]
    %v1853 = vstv %s1852
    %v1854 = vmul.f32 %v1844, %v1853
    %v1855 = vmul.f32 %v1845, %v1853
    %v1856 = vmul.f32 %v1846, %v1853
    %v1857 = vmul.f32 %v1847, %v1853
    %v1858 = vmul.f32 %v1848, %v1853
    %v1859 = vmul.f32 %v1849, %v1853
    %v1860 = vmul.f32 %v1850, %v1853
    %v1861 = vmul.f32 %v1851, %v1853
    %s1862 = sld [smem:[#allocation6 + $0x9]]
    %v1863 = vstv %s1862
    %v1864 = vadd.f32 %v1854, %v1863
    %v1865 = vadd.f32 %v1855, %v1863
    %v1866 = vadd.f32 %v1856, %v1863
    %v1867 = vadd.f32 %v1857, %v1863
    %v1868 = vadd.f32 %v1858, %v1863
    %v1869 = vadd.f32 %v1859, %v1863
    %v1870 = vadd.f32 %v1860, %v1863
    %v1871 = vadd.f32 %v1861, %v1863
    %1872 = vmatpush.msra.mxu0 0.0
    %1873 = vmatpush.msra.mxu0 0.0
    %1874 = vmatpush.msra.mxu0 0.0
    %1875 = vmatpush.msra.mxu0 0.0
    %1876 = vmatpush.msra.mxu0 0.0
    %1877 = vmatpush.msra.mxu0 0.0
    %1878 = vmatpush.msra.mxu0 0.0
    %1879 = vmatpush.msra.mxu0 0.0
    %1880 = vmatpush.msra.mxu0 %v1871
    %1881 = vmatpush.msra.mxu0 %v1870
    %1882 = vmatpush.msra.mxu0 %v1869
    %1883 = vmatpush.msra.mxu0 %v1868
    %1884 = vmatpush.msra.mxu0 %v1867
    %1885 = vmatpush.msra.mxu0 %v1866
    %1886 = vmatpush.msra.mxu0 %v1865
    %1887 = vmatpush.msra.mxu0 %v1864
    %1888 = vmatmul.f32.gmra.mxu0 %v772
    %v1889 = vpop.f32.mrf.mxu0
    %v1890 = vadd.f32 0.0, %v1889
    %1891 = vmatmul.f32.gmra.mxu0 %v775
    %v1892 = vpop.f32.mrf.mxu0
    %v1893 = vadd.f32 0.0, %v1892
    %1894 = vmatmul.f32.gmra.mxu0 %v778
    %v1895 = vpop.f32.mrf.mxu0
    %v1896 = vadd.f32 0.0, %v1895
    %1897 = vmatmul.f32.gmra.mxu0 %v781
    %v1898 = vpop.f32.mrf.mxu0
    %v1899 = vadd.f32 0.0, %v1898
    %1900 = vmatmul.f32.gmra.mxu0 %v784
    %v1901 = vpop.f32.mrf.mxu0
    %v1902 = vadd.f32 0.0, %v1901
    %1903 = vmatmul.f32.gmra.mxu0 %v787
    %v1904 = vpop.f32.mrf.mxu0
    %v1905 = vadd.f32 0.0, %v1904
    %1906 = vmatmul.f32.gmra.mxu0 %v790
    %v1907 = vpop.f32.mrf.mxu0
    %v1908 = vadd.f32 0.0, %v1907
    %1909 = vmatmul.f32.gmra.mxu0 %v793
    %v1910 = vpop.f32.mrf.mxu0
    %v1911 = vadd.f32 0.0, %v1910
    %1912 = vmatmul.f32.gmra.mxu0 %v796
    %v1913 = vpop.f32.mrf.mxu0
    %v1914 = vadd.f32 0.0, %v1913
    %1915 = vmatmul.f32.gmra.mxu0 %v799
    %v1916 = vpop.f32.mrf.mxu0
    %v1917 = vadd.f32 0.0, %v1916
    %1918 = vmatmul.f32.gmra.mxu0 %v802
    %v1919 = vpop.f32.mrf.mxu0
    %v1920 = vadd.f32 0.0, %v1919
    %1921 = vmatmul.f32.gmra.mxu0 %v805
    %v1922 = vpop.f32.mrf.mxu0
    %v1923 = vadd.f32 0.0, %v1922
    %1924 = vmatmul.f32.gmra.mxu0 %v808
    %v1925 = vpop.f32.mrf.mxu0
    %v1926 = vadd.f32 0.0, %v1925
    %1927 = vdwg.mxu0
    %s1928 = sadd.s32 0, 1144
    %s1929 = scalar_lea.vmem [#allocation9], %s1928
    %1930 = vst [vmem:[%s1929] sm:$0xff] %v1890
    %1931 = vst [vmem:[%s1929 + $0x8] sm:$0xff] %v1893
    %1932 = vst [vmem:[%s1929 + $0x10] sm:$0xff] %v1896
    %1933 = vst [vmem:[%s1929 + $0x18] sm:$0xff] %v1899
    %1934 = vst [vmem:[%s1929 + $0x20] sm:$0xff] %v1902
    %1935 = vst [vmem:[%s1929 + $0x28] sm:$0xff] %v1905
    %1936 = vst [vmem:[%s1929 + $0x30] sm:$0xff] %v1908
    %1937 = vst [vmem:[%s1929 + $0x38] sm:$0xff] %v1911
    %1938 = vst [vmem:[%s1929 + $0x40] sm:$0xff] %v1914
    %1939 = vst [vmem:[%s1929 + $0x48] sm:$0xff] %v1917
    %1940 = vst [vmem:[%s1929 + $0x50] sm:$0xff] %v1920
    %1941 = vst [vmem:[%s1929 + $0x58] sm:$0xff] %v1923
    %1942 = vst [vmem:[%s1929 + $0x60] sm:$0xf] %v1926
    %v1943 = vld [vmem:[%s411] sm:$0xff]
    %v1944 = vld [vmem:[%s411 + $0x8] sm:$0xff]
    %v1945 = vld [vmem:[%s411 + $0x10] sm:$0xff]
    %v1946 = vld [vmem:[%s411 + $0x18] sm:$0xff]
    %v1947 = vld [vmem:[%s411 + $0x20] sm:$0xff]
    %v1948 = vld [vmem:[%s411 + $0x28] sm:$0xff]
    %v1949 = vld [vmem:[%s411 + $0x30] sm:$0xff]
    %v1950 = vld [vmem:[%s411 + $0x38] sm:$0xff]
    %v1951 = vsub.f32 %v1943, %v614
    %v1952 = vsub.f32 %v1944, %v615
    %v1953 = vsub.f32 %v1945, %v616
    %v1954 = vsub.f32 %v1946, %v617
    %v1955 = vsub.f32 %v1947, %v618
    %v1956 = vsub.f32 %v1948, %v619
    %v1957 = vsub.f32 %v1949, %v620
    %v1958 = vsub.f32 %v1950, %v621
    %v1959 = vmul.f32 %v1951, %v663
    %v1960 = vmul.f32 %v1952, %v673
    %v1961 = vmul.f32 %v1953, %v683
    %v1962 = vmul.f32 %v1954, %v693
    %v1963 = vmul.f32 %v1955, %v703
    %v1964 = vmul.f32 %v1956, %v713
    %v1965 = vmul.f32 %v1957, %v723
    %v1966 = vmul.f32 %v1958, %v733
    %s1967 = sld [smem:[#allocation2 + $0xa]]
    %v1968 = vstv %s1967
    %v1969 = vmul.f32 %v1959, %v1968
    %v1970 = vmul.f32 %v1960, %v1968
    %v1971 = vmul.f32 %v1961, %v1968
    %v1972 = vmul.f32 %v1962, %v1968
    %v1973 = vmul.f32 %v1963, %v1968
    %v1974 = vmul.f32 %v1964, %v1968
    %v1975 = vmul.f32 %v1965, %v1968
    %v1976 = vmul.f32 %v1966, %v1968
    %s1977 = sld [smem:[#allocation6 + $0xa]]
    %v1978 = vstv %s1977
    %v1979 = vadd.f32 %v1969, %v1978
    %v1980 = vadd.f32 %v1970, %v1978
    %v1981 = vadd.f32 %v1971, %v1978
    %v1982 = vadd.f32 %v1972, %v1978
    %v1983 = vadd.f32 %v1973, %v1978
    %v1984 = vadd.f32 %v1974, %v1978
    %v1985 = vadd.f32 %v1975, %v1978
    %v1986 = vadd.f32 %v1976, %v1978
    %1987 = vmatpush.msra.mxu0 0.0
    %1988 = vmatpush.msra.mxu0 0.0
    %1989 = vmatpush.msra.mxu0 0.0
    %1990 = vmatpush.msra.mxu0 0.0
    %1991 = vmatpush.msra.mxu0 0.0
    %1992 = vmatpush.msra.mxu0 0.0
    %1993 = vmatpush.msra.mxu0 0.0
    %1994 = vmatpush.msra.mxu0 0.0
    %1995 = vmatpush.msra.mxu0 %v1986
    %1996 = vmatpush.msra.mxu0 %v1985
    %1997 = vmatpush.msra.mxu0 %v1984
    %1998 = vmatpush.msra.mxu0 %v1983
    %1999 = vmatpush.msra.mxu0 %v1982
    %2000 = vmatpush.msra.mxu0 %v1981
    %2001 = vmatpush.msra.mxu0 %v1980
    %2002 = vmatpush.msra.mxu0 %v1979
    %2003 = vmatmul.f32.gmra.mxu0 %v772
    %v2004 = vpop.f32.mrf.mxu0
    %v2005 = vadd.f32 0.0, %v2004
    %2006 = vmatmul.f32.gmra.mxu0 %v775
    %v2007 = vpop.f32.mrf.mxu0
    %v2008 = vadd.f32 0.0, %v2007
    %2009 = vmatmul.f32.gmra.mxu0 %v778
    %v2010 = vpop.f32.mrf.mxu0
    %v2011 = vadd.f32 0.0, %v2010
    %2012 = vmatmul.f32.gmra.mxu0 %v781
    %v2013 = vpop.f32.mrf.mxu0
    %v2014 = vadd.f32 0.0, %v2013
    %2015 = vmatmul.f32.gmra.mxu0 %v784
    %v2016 = vpop.f32.mrf.mxu0
    %v2017 = vadd.f32 0.0, %v2016
    %2018 = vmatmul.f32.gmra.mxu0 %v787
    %v2019 = vpop.f32.mrf.mxu0
    %v2020 = vadd.f32 0.0, %v2019
    %2021 = vmatmul.f32.gmra.mxu0 %v790
    %v2022 = vpop.f32.mrf.mxu0
    %v2023 = vadd.f32 0.0, %v2022
    %2024 = vmatmul.f32.gmra.mxu0 %v793
    %v2025 = vpop.f32.mrf.mxu0
    %v2026 = vadd.f32 0.0, %v2025
    %2027 = vmatmul.f32.gmra.mxu0 %v796
    %v2028 = vpop.f32.mrf.mxu0
    %v2029 = vadd.f32 0.0, %v2028
    %2030 = vmatmul.f32.gmra.mxu0 %v799
    %v2031 = vpop.f32.mrf.mxu0
    %v2032 = vadd.f32 0.0, %v2031
    %2033 = vmatmul.f32.gmra.mxu0 %v802
    %v2034 = vpop.f32.mrf.mxu0
    %v2035 = vadd.f32 0.0, %v2034
    %2036 = vmatmul.f32.gmra.mxu0 %v805
    %v2037 = vpop.f32.mrf.mxu0
    %v2038 = vadd.f32 0.0, %v2037
    %2039 = vmatmul.f32.gmra.mxu0 %v808
    %v2040 = vpop.f32.mrf.mxu0
    %v2041 = vadd.f32 0.0, %v2040
    %2042 = vdwg.mxu0
    %s2043 = sadd.s32 0, 1248
    %s2044 = scalar_lea.vmem [#allocation9], %s2043
    %2045 = vst [vmem:[%s2044] sm:$0xff] %v2005
    %2046 = vst [vmem:[%s2044 + $0x8] sm:$0xff] %v2008
    %2047 = vst [vmem:[%s2044 + $0x10] sm:$0xff] %v2011
    %2048 = vst [vmem:[%s2044 + $0x18] sm:$0xff] %v2014
    %2049 = vst [vmem:[%s2044 + $0x20] sm:$0xff] %v2017
    %2050 = vst [vmem:[%s2044 + $0x28] sm:$0xff] %v2020
    %2051 = vst [vmem:[%s2044 + $0x30] sm:$0xff] %v2023
    %2052 = vst [vmem:[%s2044 + $0x38] sm:$0xff] %v2026
    %2053 = vst [vmem:[%s2044 + $0x40] sm:$0xff] %v2029
    %2054 = vst [vmem:[%s2044 + $0x48] sm:$0xff] %v2032
    %2055 = vst [vmem:[%s2044 + $0x50] sm:$0xff] %v2035
    %2056 = vst [vmem:[%s2044 + $0x58] sm:$0xff] %v2038
    %2057 = vst [vmem:[%s2044 + $0x60] sm:$0xf] %v2041
    %v2058 = vld [vmem:[%s445] sm:$0xff]
    %v2059 = vld [vmem:[%s445 + $0x8] sm:$0xff]
    %v2060 = vld [vmem:[%s445 + $0x10] sm:$0xff]
    %v2061 = vld [vmem:[%s445 + $0x18] sm:$0xff]
    %v2062 = vld [vmem:[%s445 + $0x20] sm:$0xff]
    %v2063 = vld [vmem:[%s445 + $0x28] sm:$0xff]
    %v2064 = vld [vmem:[%s445 + $0x30] sm:$0xff]
    %v2065 = vld [vmem:[%s445 + $0x38] sm:$0xff]
    %v2066 = vsub.f32 %v2058, %v614
    %v2067 = vsub.f32 %v2059, %v615
    %v2068 = vsub.f32 %v2060, %v616
    %v2069 = vsub.f32 %v2061, %v617
    %v2070 = vsub.f32 %v2062, %v618
    %v2071 = vsub.f32 %v2063, %v619
    %v2072 = vsub.f32 %v2064, %v620
    %v2073 = vsub.f32 %v2065, %v621
    %v2074 = vmul.f32 %v2066, %v663
    %v2075 = vmul.f32 %v2067, %v673
    %v2076 = vmul.f32 %v2068, %v683
    %v2077 = vmul.f32 %v2069, %v693
    %v2078 = vmul.f32 %v2070, %v703
    %v2079 = vmul.f32 %v2071, %v713
    %v2080 = vmul.f32 %v2072, %v723
    %v2081 = vmul.f32 %v2073, %v733
    %s2082 = sld [smem:[#allocation2 + $0xb]]
    %v2083 = vstv %s2082
    %v2084 = vmul.f32 %v2074, %v2083
    %v2085 = vmul.f32 %v2075, %v2083
    %v2086 = vmul.f32 %v2076, %v2083
    %v2087 = vmul.f32 %v2077, %v2083
    %v2088 = vmul.f32 %v2078, %v2083
    %v2089 = vmul.f32 %v2079, %v2083
    %v2090 = vmul.f32 %v2080, %v2083
    %v2091 = vmul.f32 %v2081, %v2083
    %s2092 = sld [smem:[#allocation6 + $0xb]]
    %v2093 = vstv %s2092
    %v2094 = vadd.f32 %v2084, %v2093
    %v2095 = vadd.f32 %v2085, %v2093
    %v2096 = vadd.f32 %v2086, %v2093
    %v2097 = vadd.f32 %v2087, %v2093
    %v2098 = vadd.f32 %v2088, %v2093
    %v2099 = vadd.f32 %v2089, %v2093
    %v2100 = vadd.f32 %v2090, %v2093
    %v2101 = vadd.f32 %v2091, %v2093
    %2102 = vmatpush.msra.mxu0 0.0
    %2103 = vmatpush.msra.mxu0 0.0
    %2104 = vmatpush.msra.mxu0 0.0
    %2105 = vmatpush.msra.mxu0 0.0
    %2106 = vmatpush.msra.mxu0 0.0
    %2107 = vmatpush.msra.mxu0 0.0
    %2108 = vmatpush.msra.mxu0 0.0
    %2109 = vmatpush.msra.mxu0 0.0
    %2110 = vmatpush.msra.mxu0 %v2101
    %2111 = vmatpush.msra.mxu0 %v2100
    %2112 = vmatpush.msra.mxu0 %v2099
    %2113 = vmatpush.msra.mxu0 %v2098
    %2114 = vmatpush.msra.mxu0 %v2097
    %2115 = vmatpush.msra.mxu0 %v2096
    %2116 = vmatpush.msra.mxu0 %v2095
    %2117 = vmatpush.msra.mxu0 %v2094
    %2118 = vmatmul.f32.gmra.mxu0 %v772
    %v2119 = vpop.f32.mrf.mxu0
    %v2120 = vadd.f32 0.0, %v2119
    %2121 = vmatmul.f32.gmra.mxu0 %v775
    %v2122 = vpop.f32.mrf.mxu0
    %v2123 = vadd.f32 0.0, %v2122
    %2124 = vmatmul.f32.gmra.mxu0 %v778
    %v2125 = vpop.f32.mrf.mxu0
    %v2126 = vadd.f32 0.0, %v2125
    %2127 = vmatmul.f32.gmra.mxu0 %v781
    %v2128 = vpop.f32.mrf.mxu0
    %v2129 = vadd.f32 0.0, %v2128
    %2130 = vmatmul.f32.gmra.mxu0 %v784
    %v2131 = vpop.f32.mrf.mxu0
    %v2132 = vadd.f32 0.0, %v2131
    %2133 = vmatmul.f32.gmra.mxu0 %v787
    %v2134 = vpop.f32.mrf.mxu0
    %v2135 = vadd.f32 0.0, %v2134
    %2136 = vmatmul.f32.gmra.mxu0 %v790
    %v2137 = vpop.f32.mrf.mxu0
    %v2138 = vadd.f32 0.0, %v2137
    %2139 = vmatmul.f32.gmra.mxu0 %v793
    %v2140 = vpop.f32.mrf.mxu0
    %v2141 = vadd.f32 0.0, %v2140
    %2142 = vmatmul.f32.gmra.mxu0 %v796
    %v2143 = vpop.f32.mrf.mxu0
    %v2144 = vadd.f32 0.0, %v2143
    %2145 = vmatmul.f32.gmra.mxu0 %v799
    %v2146 = vpop.f32.mrf.mxu0
    %v2147 = vadd.f32 0.0, %v2146
    %2148 = vmatmul.f32.gmra.mxu0 %v802
    %v2149 = vpop.f32.mrf.mxu0
    %v2150 = vadd.f32 0.0, %v2149
    %2151 = vmatmul.f32.gmra.mxu0 %v805
    %v2152 = vpop.f32.mrf.mxu0
    %v2153 = vadd.f32 0.0, %v2152
    %2154 = vmatmul.f32.gmra.mxu0 %v808
    %v2155 = vpop.f32.mrf.mxu0
    %v2156 = vadd.f32 0.0, %v2155
    %2157 = vdwg.mxu0
    %s2158 = sadd.s32 0, 1352
    %s2159 = scalar_lea.vmem [#allocation9], %s2158
    %2160 = vst [vmem:[%s2159] sm:$0xff] %v2120
    %2161 = vst [vmem:[%s2159 + $0x8] sm:$0xff] %v2123
    %2162 = vst [vmem:[%s2159 + $0x10] sm:$0xff] %v2126
    %2163 = vst [vmem:[%s2159 + $0x18] sm:$0xff] %v2129
    %2164 = vst [vmem:[%s2159 + $0x20] sm:$0xff] %v2132
    %2165 = vst [vmem:[%s2159 + $0x28] sm:$0xff] %v2135
    %2166 = vst [vmem:[%s2159 + $0x30] sm:$0xff] %v2138
    %2167 = vst [vmem:[%s2159 + $0x38] sm:$0xff] %v2141
    %2168 = vst [vmem:[%s2159 + $0x40] sm:$0xff] %v2144
    %2169 = vst [vmem:[%s2159 + $0x48] sm:$0xff] %v2147
    %2170 = vst [vmem:[%s2159 + $0x50] sm:$0xff] %v2150
    %2171 = vst [vmem:[%s2159 + $0x58] sm:$0xff] %v2153
    %2172 = vst [vmem:[%s2159 + $0x60] sm:$0xf] %v2156
    %v2173 = vld [vmem:[%s479] sm:$0xff]
    %v2174 = vld [vmem:[%s479 + $0x8] sm:$0xff]
    %v2175 = vld [vmem:[%s479 + $0x10] sm:$0xff]
    %v2176 = vld [vmem:[%s479 + $0x18] sm:$0xff]
    %v2177 = vld [vmem:[%s479 + $0x20] sm:$0xff]
    %v2178 = vld [vmem:[%s479 + $0x28] sm:$0xff]
    %v2179 = vld [vmem:[%s479 + $0x30] sm:$0xff]
    %v2180 = vld [vmem:[%s479 + $0x38] sm:$0xff]
    %v2181 = vsub.f32 %v2173, %v614
    %v2182 = vsub.f32 %v2174, %v615
    %v2183 = vsub.f32 %v2175, %v616
    %v2184 = vsub.f32 %v2176, %v617
    %v2185 = vsub.f32 %v2177, %v618
    %v2186 = vsub.f32 %v2178, %v619
    %v2187 = vsub.f32 %v2179, %v620
    %v2188 = vsub.f32 %v2180, %v621
    %v2189 = vmul.f32 %v2181, %v663
    %v2190 = vmul.f32 %v2182, %v673
    %v2191 = vmul.f32 %v2183, %v683
    %v2192 = vmul.f32 %v2184, %v693
    %v2193 = vmul.f32 %v2185, %v703
    %v2194 = vmul.f32 %v2186, %v713
    %v2195 = vmul.f32 %v2187, %v723
    %v2196 = vmul.f32 %v2188, %v733
    %s2197 = sld [smem:[#allocation2 + $0xc]]
    %v2198 = vstv %s2197
    %v2199 = vmul.f32 %v2189, %v2198
    %v2200 = vmul.f32 %v2190, %v2198
    %v2201 = vmul.f32 %v2191, %v2198
    %v2202 = vmul.f32 %v2192, %v2198
    %v2203 = vmul.f32 %v2193, %v2198
    %v2204 = vmul.f32 %v2194, %v2198
    %v2205 = vmul.f32 %v2195, %v2198
    %v2206 = vmul.f32 %v2196, %v2198
    %s2207 = sld [smem:[#allocation6 + $0xc]]
    %v2208 = vstv %s2207
    %v2209 = vadd.f32 %v2199, %v2208
    %v2210 = vadd.f32 %v2200, %v2208
    %v2211 = vadd.f32 %v2201, %v2208
    %v2212 = vadd.f32 %v2202, %v2208
    %v2213 = vadd.f32 %v2203, %v2208
    %v2214 = vadd.f32 %v2204, %v2208
    %v2215 = vadd.f32 %v2205, %v2208
    %v2216 = vadd.f32 %v2206, %v2208
    %2217 = vmatpush.msra.mxu0 0.0
    %2218 = vmatpush.msra.mxu0 0.0
    %2219 = vmatpush.msra.mxu0 0.0
    %2220 = vmatpush.msra.mxu0 0.0
    %2221 = vmatpush.msra.mxu0 0.0
    %2222 = vmatpush.msra.mxu0 0.0
    %2223 = vmatpush.msra.mxu0 0.0
    %2224 = vmatpush.msra.mxu0 0.0
    %2225 = vmatpush.msra.mxu0 %v2216
    %2226 = vmatpush.msra.mxu0 %v2215
    %2227 = vmatpush.msra.mxu0 %v2214
    %2228 = vmatpush.msra.mxu0 %v2213
    %2229 = vmatpush.msra.mxu0 %v2212
    %2230 = vmatpush.msra.mxu0 %v2211
    %2231 = vmatpush.msra.mxu0 %v2210
    %2232 = vmatpush.msra.mxu0 %v2209
    %2233 = vmatmul.f32.gmra.mxu0 %v772
    %v2234 = vpop.f32.mrf.mxu0
    %v2235 = vadd.f32 0.0, %v2234
    %2236 = vmatmul.f32.gmra.mxu0 %v775
    %v2237 = vpop.f32.mrf.mxu0
    %v2238 = vadd.f32 0.0, %v2237
    %2239 = vmatmul.f32.gmra.mxu0 %v778
    %v2240 = vpop.f32.mrf.mxu0
    %v2241 = vadd.f32 0.0, %v2240
    %2242 = vmatmul.f32.gmra.mxu0 %v781
    %v2243 = vpop.f32.mrf.mxu0
    %v2244 = vadd.f32 0.0, %v2243
    %2245 = vmatmul.f32.gmra.mxu0 %v784
    %v2246 = vpop.f32.mrf.mxu0
    %v2247 = vadd.f32 0.0, %v2246
    %2248 = vmatmul.f32.gmra.mxu0 %v787
    %v2249 = vpop.f32.mrf.mxu0
    %v2250 = vadd.f32 0.0, %v2249
    %2251 = vmatmul.f32.gmra.mxu0 %v790
    %v2252 = vpop.f32.mrf.mxu0
    %v2253 = vadd.f32 0.0, %v2252
    %2254 = vmatmul.f32.gmra.mxu0 %v793
    %v2255 = vpop.f32.mrf.mxu0
    %v2256 = vadd.f32 0.0, %v2255
    %2257 = vmatmul.f32.gmra.mxu0 %v796
    %v2258 = vpop.f32.mrf.mxu0
    %v2259 = vadd.f32 0.0, %v2258
    %2260 = vmatmul.f32.gmra.mxu0 %v799
    %v2261 = vpop.f32.mrf.mxu0
    %v2262 = vadd.f32 0.0, %v2261
    %2263 = vmatmul.f32.gmra.mxu0 %v802
    %v2264 = vpop.f32.mrf.mxu0
    %v2265 = vadd.f32 0.0, %v2264
    %2266 = vmatmul.f32.gmra.mxu0 %v805
    %v2267 = vpop.f32.mrf.mxu0
    %v2268 = vadd.f32 0.0, %v2267
    %2269 = vmatmul.f32.gmra.mxu0 %v808
    %v2270 = vpop.f32.mrf.mxu0
    %v2271 = vadd.f32 0.0, %v2270
    %2272 = vdwg.mxu0
    %s2273 = sadd.s32 0, 1456
    %s2274 = scalar_lea.vmem [#allocation9], %s2273
    %2275 = vst [vmem:[%s2274] sm:$0xff] %v2235
    %2276 = vst [vmem:[%s2274 + $0x8] sm:$0xff] %v2238
    %2277 = vst [vmem:[%s2274 + $0x10] sm:$0xff] %v2241
    %2278 = vst [vmem:[%s2274 + $0x18] sm:$0xff] %v2244
    %2279 = vst [vmem:[%s2274 + $0x20] sm:$0xff] %v2247
    %2280 = vst [vmem:[%s2274 + $0x28] sm:$0xff] %v2250
    %2281 = vst [vmem:[%s2274 + $0x30] sm:$0xff] %v2253
    %2282 = vst [vmem:[%s2274 + $0x38] sm:$0xff] %v2256
    %2283 = vst [vmem:[%s2274 + $0x40] sm:$0xff] %v2259
    %2284 = vst [vmem:[%s2274 + $0x48] sm:$0xff] %v2262
    %2285 = vst [vmem:[%s2274 + $0x50] sm:$0xff] %v2265
    %2286 = vst [vmem:[%s2274 + $0x58] sm:$0xff] %v2268
    %2287 = vst [vmem:[%s2274 + $0x60] sm:$0xf] %v2271
    %v2288 = vld [vmem:[%s513] sm:$0xff]
    %v2289 = vld [vmem:[%s513 + $0x8] sm:$0xff]
    %v2290 = vld [vmem:[%s513 + $0x10] sm:$0xff]
    %v2291 = vld [vmem:[%s513 + $0x18] sm:$0xff]
    %v2292 = vld [vmem:[%s513 + $0x20] sm:$0xff]
    %v2293 = vld [vmem:[%s513 + $0x28] sm:$0xff]
    %v2294 = vld [vmem:[%s513 + $0x30] sm:$0xff]
    %v2295 = vld [vmem:[%s513 + $0x38] sm:$0xff]
    %v2296 = vsub.f32 %v2288, %v614
    %v2297 = vsub.f32 %v2289, %v615
    %v2298 = vsub.f32 %v2290, %v616
    %v2299 = vsub.f32 %v2291, %v617
    %v2300 = vsub.f32 %v2292, %v618
    %v2301 = vsub.f32 %v2293, %v619
    %v2302 = vsub.f32 %v2294, %v620
    %v2303 = vsub.f32 %v2295, %v621
    %v2304 = vmul.f32 %v2296, %v663
    %v2305 = vmul.f32 %v2297, %v673
    %v2306 = vmul.f32 %v2298, %v683
    %v2307 = vmul.f32 %v2299, %v693
    %v2308 = vmul.f32 %v2300, %v703
    %v2309 = vmul.f32 %v2301, %v713
    %v2310 = vmul.f32 %v2302, %v723
    %v2311 = vmul.f32 %v2303, %v733
    %s2312 = sld [smem:[#allocation2 + $0xd]]
    %v2313 = vstv %s2312
    %v2314 = vmul.f32 %v2304, %v2313
    %v2315 = vmul.f32 %v2305, %v2313
    %v2316 = vmul.f32 %v2306, %v2313
    %v2317 = vmul.f32 %v2307, %v2313
    %v2318 = vmul.f32 %v2308, %v2313
    %v2319 = vmul.f32 %v2309, %v2313
    %v2320 = vmul.f32 %v2310, %v2313
    %v2321 = vmul.f32 %v2311, %v2313
    %s2322 = sld [smem:[#allocation6 + $0xd]]
    %v2323 = vstv %s2322
    %v2324 = vadd.f32 %v2314, %v2323
    %v2325 = vadd.f32 %v2315, %v2323
    %v2326 = vadd.f32 %v2316, %v2323
    %v2327 = vadd.f32 %v2317, %v2323
    %v2328 = vadd.f32 %v2318, %v2323
    %v2329 = vadd.f32 %v2319, %v2323
    %v2330 = vadd.f32 %v2320, %v2323
    %v2331 = vadd.f32 %v2321, %v2323
    %2332 = vmatpush.msra.mxu0 0.0
    %2333 = vmatpush.msra.mxu0 0.0
    %2334 = vmatpush.msra.mxu0 0.0
    %2335 = vmatpush.msra.mxu0 0.0
    %2336 = vmatpush.msra.mxu0 0.0
    %2337 = vmatpush.msra.mxu0 0.0
    %2338 = vmatpush.msra.mxu0 0.0
    %2339 = vmatpush.msra.mxu0 0.0
    %2340 = vmatpush.msra.mxu0 %v2331
    %2341 = vmatpush.msra.mxu0 %v2330
    %2342 = vmatpush.msra.mxu0 %v2329
    %2343 = vmatpush.msra.mxu0 %v2328
    %2344 = vmatpush.msra.mxu0 %v2327
    %2345 = vmatpush.msra.mxu0 %v2326
    %2346 = vmatpush.msra.mxu0 %v2325
    %2347 = vmatpush.msra.mxu0 %v2324
    %2348 = vmatmul.f32.gmra.mxu0 %v772
    %v2349 = vpop.f32.mrf.mxu0
    %v2350 = vadd.f32 0.0, %v2349
    %2351 = vmatmul.f32.gmra.mxu0 %v775
    %v2352 = vpop.f32.mrf.mxu0
    %v2353 = vadd.f32 0.0, %v2352
    %2354 = vmatmul.f32.gmra.mxu0 %v778
    %v2355 = vpop.f32.mrf.mxu0
    %v2356 = vadd.f32 0.0, %v2355
    %2357 = vmatmul.f32.gmra.mxu0 %v781
    %v2358 = vpop.f32.mrf.mxu0
    %v2359 = vadd.f32 0.0, %v2358
    %2360 = vmatmul.f32.gmra.mxu0 %v784
    %v2361 = vpop.f32.mrf.mxu0
    %v2362 = vadd.f32 0.0, %v2361
    %2363 = vmatmul.f32.gmra.mxu0 %v787
    %v2364 = vpop.f32.mrf.mxu0
    %v2365 = vadd.f32 0.0, %v2364
    %2366 = vmatmul.f32.gmra.mxu0 %v790
    %v2367 = vpop.f32.mrf.mxu0
    %v2368 = vadd.f32 0.0, %v2367
    %2369 = vmatmul.f32.gmra.mxu0 %v793
    %v2370 = vpop.f32.mrf.mxu0
    %v2371 = vadd.f32 0.0, %v2370
    %2372 = vmatmul.f32.gmra.mxu0 %v796
    %v2373 = vpop.f32.mrf.mxu0
    %v2374 = vadd.f32 0.0, %v2373
    %2375 = vmatmul.f32.gmra.mxu0 %v799
    %v2376 = vpop.f32.mrf.mxu0
    %v2377 = vadd.f32 0.0, %v2376
    %2378 = vmatmul.f32.gmra.mxu0 %v802
    %v2379 = vpop.f32.mrf.mxu0
    %v2380 = vadd.f32 0.0, %v2379
    %2381 = vmatmul.f32.gmra.mxu0 %v805
    %v2382 = vpop.f32.mrf.mxu0
    %v2383 = vadd.f32 0.0, %v2382
    %2384 = vmatmul.f32.gmra.mxu0 %v808
    %v2385 = vpop.f32.mrf.mxu0
    %v2386 = vadd.f32 0.0, %v2385
    %2387 = vdwg.mxu0
    %s2388 = sadd.s32 0, 1560
    %s2389 = scalar_lea.vmem [#allocation9], %s2388
    %2390 = vst [vmem:[%s2389] sm:$0xff] %v2350
    %2391 = vst [vmem:[%s2389 + $0x8] sm:$0xff] %v2353
    %2392 = vst [vmem:[%s2389 + $0x10] sm:$0xff] %v2356
    %2393 = vst [vmem:[%s2389 + $0x18] sm:$0xff] %v2359
    %2394 = vst [vmem:[%s2389 + $0x20] sm:$0xff] %v2362
    %2395 = vst [vmem:[%s2389 + $0x28] sm:$0xff] %v2365
    %2396 = vst [vmem:[%s2389 + $0x30] sm:$0xff] %v2368
    %2397 = vst [vmem:[%s2389 + $0x38] sm:$0xff] %v2371
    %2398 = vst [vmem:[%s2389 + $0x40] sm:$0xff] %v2374
    %2399 = vst [vmem:[%s2389 + $0x48] sm:$0xff] %v2377
    %2400 = vst [vmem:[%s2389 + $0x50] sm:$0xff] %v2380
    %2401 = vst [vmem:[%s2389 + $0x58] sm:$0xff] %v2383
    %2402 = vst [vmem:[%s2389 + $0x60] sm:$0xf] %v2386
    %v2403 = vld [vmem:[%s547] sm:$0xff]
    %v2404 = vld [vmem:[%s547 + $0x8] sm:$0xff]
    %v2405 = vld [vmem:[%s547 + $0x10] sm:$0xff]
    %v2406 = vld [vmem:[%s547 + $0x18] sm:$0xff]
    %v2407 = vld [vmem:[%s547 + $0x20] sm:$0xff]
    %v2408 = vld [vmem:[%s547 + $0x28] sm:$0xff]
    %v2409 = vld [vmem:[%s547 + $0x30] sm:$0xff]
    %v2410 = vld [vmem:[%s547 + $0x38] sm:$0xff]
    %v2411 = vsub.f32 %v2403, %v614
    %v2412 = vsub.f32 %v2404, %v615
    %v2413 = vsub.f32 %v2405, %v616
    %v2414 = vsub.f32 %v2406, %v617
    %v2415 = vsub.f32 %v2407, %v618
    %v2416 = vsub.f32 %v2408, %v619
    %v2417 = vsub.f32 %v2409, %v620
    %v2418 = vsub.f32 %v2410, %v621
    %v2419 = vmul.f32 %v2411, %v663
    %v2420 = vmul.f32 %v2412, %v673
    %v2421 = vmul.f32 %v2413, %v683
    %v2422 = vmul.f32 %v2414, %v693
    %v2423 = vmul.f32 %v2415, %v703
    %v2424 = vmul.f32 %v2416, %v713
    %v2425 = vmul.f32 %v2417, %v723
    %v2426 = vmul.f32 %v2418, %v733
    %s2427 = sld [smem:[#allocation2 + $0xe]]
    %v2428 = vstv %s2427
    %v2429 = vmul.f32 %v2419, %v2428
    %v2430 = vmul.f32 %v2420, %v2428
    %v2431 = vmul.f32 %v2421, %v2428
    %v2432 = vmul.f32 %v2422, %v2428
    %v2433 = vmul.f32 %v2423, %v2428
    %v2434 = vmul.f32 %v2424, %v2428
    %v2435 = vmul.f32 %v2425, %v2428
    %v2436 = vmul.f32 %v2426, %v2428
    %s2437 = sld [smem:[#allocation6 + $0xe]]
    %v2438 = vstv %s2437
    %v2439 = vadd.f32 %v2429, %v2438
    %v2440 = vadd.f32 %v2430, %v2438
    %v2441 = vadd.f32 %v2431, %v2438
    %v2442 = vadd.f32 %v2432, %v2438
    %v2443 = vadd.f32 %v2433, %v2438
    %v2444 = vadd.f32 %v2434, %v2438
    %v2445 = vadd.f32 %v2435, %v2438
    %v2446 = vadd.f32 %v2436, %v2438
    %2447 = vmatpush.msra.mxu0 0.0
    %2448 = vmatpush.msra.mxu0 0.0
    %2449 = vmatpush.msra.mxu0 0.0
    %2450 = vmatpush.msra.mxu0 0.0
    %2451 = vmatpush.msra.mxu0 0.0
    %2452 = vmatpush.msra.mxu0 0.0
    %2453 = vmatpush.msra.mxu0 0.0
    %2454 = vmatpush.msra.mxu0 0.0
    %2455 = vmatpush.msra.mxu0 %v2446
    %2456 = vmatpush.msra.mxu0 %v2445
    %2457 = vmatpush.msra.mxu0 %v2444
    %2458 = vmatpush.msra.mxu0 %v2443
    %2459 = vmatpush.msra.mxu0 %v2442
    %2460 = vmatpush.msra.mxu0 %v2441
    %2461 = vmatpush.msra.mxu0 %v2440
    %2462 = vmatpush.msra.mxu0 %v2439
    %2463 = vmatmul.f32.gmra.mxu0 %v772
    %v2464 = vpop.f32.mrf.mxu0
    %v2465 = vadd.f32 0.0, %v2464
    %2466 = vmatmul.f32.gmra.mxu0 %v775
    %v2467 = vpop.f32.mrf.mxu0
    %v2468 = vadd.f32 0.0, %v2467
    %2469 = vmatmul.f32.gmra.mxu0 %v778
    %v2470 = vpop.f32.mrf.mxu0
    %v2471 = vadd.f32 0.0, %v2470
    %2472 = vmatmul.f32.gmra.mxu0 %v781
    %v2473 = vpop.f32.mrf.mxu0
    %v2474 = vadd.f32 0.0, %v2473
    %2475 = vmatmul.f32.gmra.mxu0 %v784
    %v2476 = vpop.f32.mrf.mxu0
    %v2477 = vadd.f32 0.0, %v2476
    %2478 = vmatmul.f32.gmra.mxu0 %v787
    %v2479 = vpop.f32.mrf.mxu0
    %v2480 = vadd.f32 0.0, %v2479
    %2481 = vmatmul.f32.gmra.mxu0 %v790
    %v2482 = vpop.f32.mrf.mxu0
    %v2483 = vadd.f32 0.0, %v2482
    %2484 = vmatmul.f32.gmra.mxu0 %v793
    %v2485 = vpop.f32.mrf.mxu0
    %v2486 = vadd.f32 0.0, %v2485
    %2487 = vmatmul.f32.gmra.mxu0 %v796
    %v2488 = vpop.f32.mrf.mxu0
    %v2489 = vadd.f32 0.0, %v2488
    %2490 = vmatmul.f32.gmra.mxu0 %v799
    %v2491 = vpop.f32.mrf.mxu0
    %v2492 = vadd.f32 0.0, %v2491
    %2493 = vmatmul.f32.gmra.mxu0 %v802
    %v2494 = vpop.f32.mrf.mxu0
    %v2495 = vadd.f32 0.0, %v2494
    %2496 = vmatmul.f32.gmra.mxu0 %v805
    %v2497 = vpop.f32.mrf.mxu0
    %v2498 = vadd.f32 0.0, %v2497
    %2499 = vmatmul.f32.gmra.mxu0 %v808
    %v2500 = vpop.f32.mrf.mxu0
    %v2501 = vadd.f32 0.0, %v2500
    %2502 = vdwg.mxu0
    %s2503 = sadd.s32 0, 1664
    %s2504 = scalar_lea.vmem [#allocation9], %s2503
    %2505 = vst [vmem:[%s2504] sm:$0xff] %v2465
    %2506 = vst [vmem:[%s2504 + $0x8] sm:$0xff] %v2468
    %2507 = vst [vmem:[%s2504 + $0x10] sm:$0xff] %v2471
    %2508 = vst [vmem:[%s2504 + $0x18] sm:$0xff] %v2474
    %2509 = vst [vmem:[%s2504 + $0x20] sm:$0xff] %v2477
    %2510 = vst [vmem:[%s2504 + $0x28] sm:$0xff] %v2480
    %2511 = vst [vmem:[%s2504 + $0x30] sm:$0xff] %v2483
    %2512 = vst [vmem:[%s2504 + $0x38] sm:$0xff] %v2486
    %2513 = vst [vmem:[%s2504 + $0x40] sm:$0xff] %v2489
    %2514 = vst [vmem:[%s2504 + $0x48] sm:$0xff] %v2492
    %2515 = vst [vmem:[%s2504 + $0x50] sm:$0xff] %v2495
    %2516 = vst [vmem:[%s2504 + $0x58] sm:$0xff] %v2498
    %2517 = vst [vmem:[%s2504 + $0x60] sm:$0xf] %v2501
    %v2518 = vld [vmem:[%s581] sm:$0xff]
    %v2519 = vld [vmem:[%s581 + $0x8] sm:$0xff]
    %v2520 = vld [vmem:[%s581 + $0x10] sm:$0xff]
    %v2521 = vld [vmem:[%s581 + $0x18] sm:$0xff]
    %v2522 = vld [vmem:[%s581 + $0x20] sm:$0xff]
    %v2523 = vld [vmem:[%s581 + $0x28] sm:$0xff]
    %v2524 = vld [vmem:[%s581 + $0x30] sm:$0xff]
    %v2525 = vld [vmem:[%s581 + $0x38] sm:$0xff]
    %v2526 = vsub.f32 %v2518, %v614
    %v2527 = vsub.f32 %v2519, %v615
    %v2528 = vsub.f32 %v2520, %v616
    %v2529 = vsub.f32 %v2521, %v617
    %v2530 = vsub.f32 %v2522, %v618
    %v2531 = vsub.f32 %v2523, %v619
    %v2532 = vsub.f32 %v2524, %v620
    %v2533 = vsub.f32 %v2525, %v621
    %v2534 = vmul.f32 %v2526, %v663
    %v2535 = vmul.f32 %v2527, %v673
    %v2536 = vmul.f32 %v2528, %v683
    %v2537 = vmul.f32 %v2529, %v693
    %v2538 = vmul.f32 %v2530, %v703
    %v2539 = vmul.f32 %v2531, %v713
    %v2540 = vmul.f32 %v2532, %v723
    %v2541 = vmul.f32 %v2533, %v733
    %s2542 = sld [smem:[#allocation2 + $0xf]]
    %v2543 = vstv %s2542
    %v2544 = vmul.f32 %v2534, %v2543
    %v2545 = vmul.f32 %v2535, %v2543
    %v2546 = vmul.f32 %v2536, %v2543
    %v2547 = vmul.f32 %v2537, %v2543
    %v2548 = vmul.f32 %v2538, %v2543
    %v2549 = vmul.f32 %v2539, %v2543
    %v2550 = vmul.f32 %v2540, %v2543
    %v2551 = vmul.f32 %v2541, %v2543
    %s2552 = sld [smem:[#allocation6 + $0xf]]
    %v2553 = vstv %s2552
    %v2554 = vadd.f32 %v2544, %v2553
    %v2555 = vadd.f32 %v2545, %v2553
    %v2556 = vadd.f32 %v2546, %v2553
    %v2557 = vadd.f32 %v2547, %v2553
    %v2558 = vadd.f32 %v2548, %v2553
    %v2559 = vadd.f32 %v2549, %v2553
    %v2560 = vadd.f32 %v2550, %v2553
    %v2561 = vadd.f32 %v2551, %v2553
    %2562 = vmatpush.msra.mxu0 0.0
    %2563 = vmatpush.msra.mxu0 0.0
    %2564 = vmatpush.msra.mxu0 0.0
    %2565 = vmatpush.msra.mxu0 0.0
    %2566 = vmatpush.msra.mxu0 0.0
    %2567 = vmatpush.msra.mxu0 0.0
    %2568 = vmatpush.msra.mxu0 0.0
    %2569 = vmatpush.msra.mxu0 0.0
    %2570 = vmatpush.msra.mxu0 %v2561
    %2571 = vmatpush.msra.mxu0 %v2560
    %2572 = vmatpush.msra.mxu0 %v2559
    %2573 = vmatpush.msra.mxu0 %v2558
    %2574 = vmatpush.msra.mxu0 %v2557
    %2575 = vmatpush.msra.mxu0 %v2556
    %2576 = vmatpush.msra.mxu0 %v2555
    %2577 = vmatpush.msra.mxu0 %v2554
    %2578 = vmatmul.f32.gmra.mxu0 %v772
    %v2579 = vpop.f32.mrf.mxu0
    %v2580 = vadd.f32 0.0, %v2579
    %2581 = vmatmul.f32.gmra.mxu0 %v775
    %v2582 = vpop.f32.mrf.mxu0
    %v2583 = vadd.f32 0.0, %v2582
    %2584 = vmatmul.f32.gmra.mxu0 %v778
    %v2585 = vpop.f32.mrf.mxu0
    %v2586 = vadd.f32 0.0, %v2585
    %2587 = vmatmul.f32.gmra.mxu0 %v781
    %v2588 = vpop.f32.mrf.mxu0
    %v2589 = vadd.f32 0.0, %v2588
    %2590 = vmatmul.f32.gmra.mxu0 %v784
    %v2591 = vpop.f32.mrf.mxu0
    %v2592 = vadd.f32 0.0, %v2591
    %2593 = vmatmul.f32.gmra.mxu0 %v787
    %v2594 = vpop.f32.mrf.mxu0
    %v2595 = vadd.f32 0.0, %v2594
    %2596 = vmatmul.f32.gmra.mxu0 %v790
    %v2597 = vpop.f32.mrf.mxu0
    %v2598 = vadd.f32 0.0, %v2597
    %2599 = vmatmul.f32.gmra.mxu0 %v793
    %v2600 = vpop.f32.mrf.mxu0
    %v2601 = vadd.f32 0.0, %v2600
    %2602 = vmatmul.f32.gmra.mxu0 %v796
    %v2603 = vpop.f32.mrf.mxu0
    %v2604 = vadd.f32 0.0, %v2603
    %2605 = vmatmul.f32.gmra.mxu0 %v799
    %v2606 = vpop.f32.mrf.mxu0
    %v2607 = vadd.f32 0.0, %v2606
    %2608 = vmatmul.f32.gmra.mxu0 %v802
    %v2609 = vpop.f32.mrf.mxu0
    %v2610 = vadd.f32 0.0, %v2609
    %2611 = vmatmul.f32.gmra.mxu0 %v805
    %v2612 = vpop.f32.mrf.mxu0
    %v2613 = vadd.f32 0.0, %v2612
    %2614 = vmatmul.f32.gmra.mxu0 %v808
    %v2615 = vpop.f32.mrf.mxu0
    %v2616 = vadd.f32 0.0, %v2615
    %2617 = vdwg.mxu0
    %s2618 = sadd.s32 0, 1768
    %s2619 = scalar_lea.vmem [#allocation9], %s2618
    %2620 = vst [vmem:[%s2619] sm:$0xff] %v2580
    %2621 = vst [vmem:[%s2619 + $0x8] sm:$0xff] %v2583
    %2622 = vst [vmem:[%s2619 + $0x10] sm:$0xff] %v2586
    %2623 = vst [vmem:[%s2619 + $0x18] sm:$0xff] %v2589
    %2624 = vst [vmem:[%s2619 + $0x20] sm:$0xff] %v2592
    %2625 = vst [vmem:[%s2619 + $0x28] sm:$0xff] %v2595
    %2626 = vst [vmem:[%s2619 + $0x30] sm:$0xff] %v2598
    %2627 = vst [vmem:[%s2619 + $0x38] sm:$0xff] %v2601
    %2628 = vst [vmem:[%s2619 + $0x40] sm:$0xff] %v2604
    %2629 = vst [vmem:[%s2619 + $0x48] sm:$0xff] %v2607
    %2630 = vst [vmem:[%s2619 + $0x50] sm:$0xff] %v2610
    %2631 = vst [vmem:[%s2619 + $0x58] sm:$0xff] %v2613
    %2632 = vst [vmem:[%s2619 + $0x60] sm:$0xf] %v2616
    // Predicated region
    $region30: #{tpu_custom_call.1} parent=1 // pred_check
      _
    $region31: #{tpu_custom_call.1} parent=1 // pred_check_branch
      %2634 = sbr.rel (0) target = $region33
    $region32: #{tpu_custom_call.1} parent=1 // pred_region
      %2636 = vsyncadd [#allocation4], 0
      %s2637 = sshll.u32 [#allocation9], 4
      %s2638 = int_to_ptr.vmem [resolvable:$true] %s2637
      %s2639 = sshll.u32 %s4, 4
      %s2640 = int_to_ptr.hbm [resolvable:$true] %s2639
      %2645 = dma.vmem_to_hbm [thread:$0]  %s2638, 29952, %s2640, [#allocation4], 128, 128, 8
    $region33: #{tpu_custom_call.1} parent=1 // pred_fallthru
      _
    // Predicated region
    $region34: #{tpu_custom_call.1} parent=1 // pred_check
      _
    $region35: #{tpu_custom_call.1} parent=1 // pred_check_branch
      %2647 = sbr.rel (0) target = $region37
    $region36: #{tpu_custom_call.1} parent=1 // pred_region
      %2649 = dma.done [#allocation4], 29952
    $region37: #{tpu_custom_call.1} parent=1 // pred_fallthru
      _
    %2650 = vsyncpa [#allocation3], 1
    %2651 = vsyncpa [#allocation4], 1
    %2652 = vsyncpa [#allocation5], 1
    %2653 = vsyncpa [#allocation7], 1

</llo_original>
